<compile_context>
chip_gen: v5e
topology: v5e:2x2
jax: 0.10.0
libtpu: 0.0.40
codegen_flags: <defaults>
</compile_context>

<pallas_src>
import functools

import jax
import jax.numpy as jnp
from jax import lax
from jax.experimental import pallas as pl
from jax.experimental.pallas import tpu as pltpu

LN_EPS = 1e-5  # torch.nn.LayerNorm default


def _padded_freq(T, F):
    """Smallest Fp >= F+2 such that T*Fp is a multiple of 128 (lane-dense)."""
    Fp = F + 2
    while (T * Fp) % 128 != 0:
        Fp += 1
    return Fp


# ---------------------------------------------------------------------------
# Fused Pallas kernel: whole DenseBlock for one batch element.
# ---------------------------------------------------------------------------
def _dense_block_kernel(x_ref, w_ref, g_ref, be_ref, a_ref, s_ref, st_ref,
                        o_ref, skip_ref, stage_ref, *, depth, C, T, F, Fp, G):
    # x_ref    : (1, C, TF)             input, pad-flat (freq padded to Fp, flattened)
    # w_ref    : (depth, C, 6*C*depth)  per-layer tap-stacked weights (zero-padded)
    # g_ref    : (depth, 1, TF)         LayerNorm gamma (0 in the Fp-F pad columns)
    # be_ref   : (depth, 1, TF)         LayerNorm beta  (0 in the Fp-F pad columns)
    # a_ref    : (depth, C, 1)          PReLU per-channel alpha
    # s_ref    : (TF, T)                segment indicator (valid freq cols of row t)
    # st_ref   : (T, TF)                its transpose (broadcast per-t scalars back)
    # o_ref    : (1, C, TF)             last layer output, pad-flat layout
    # skip_ref : VMEM (C*depth, W)      resident skip tensor, pad-flat
    # stage_ref: VMEM (6*C*depth, TF)   staging buffer for the 6 conv-tap views
    TF = T * Fp
    PT = 2 ** (depth - 1)
    base = G + PT * Fp                      # 128-aligned start of real data
    CD = C * depth
    W = base + TF + 128

    # Zero only the halo the tap slices actually read (guard prefix, top time
    # pad, tail guard).  The real region [base, base+TF) is fully rewritten
    # each step by the x copy and the per-layer write-backs; all values the
    # conv reads must be finite-zero (NaN garbage would poison the LN sums).
    skip_ref[:, 0:base] = jnp.zeros((CD, base), jnp.float32)
    skip_ref[:, base + TF:W] = jnp.zeros((CD, 128), jnp.float32)

    # Drop this batch element's activations into the resident skip scratch
    # (base and TF are multiples of 128 -> unmasked, lane-aligned store).
    skip_ref[0:C, base:base + TF] = x_ref[0]

    S = s_ref[...]                          # (TF, T)
    ST = st_ref[...]                        # (T, TF)
    inv_f = 1.0 / F

    y = None
    for i in range(depth):                  # static unroll over layers
        dil = 2 ** i
        K = C * (i + 1)                     # real input channels of this layer
        K6 = 6 * K

        # --- Gather the 6 dilated-conv tap views into one stacked block. ---
        # Tap (kt, kf) of output column q = t*Fp + f reads flat position
        # base + (t + (kt-1)*dil)*Fp + (f + kf - 1); top-pad / freq-pad
        # positions are zero by construction.
        for kt in range(2):
            for kf in range(3):
                tap = kt * 3 + kf
                off = base + (kt - 1) * dil * Fp + (kf - 1)      # static offset
                stage_ref[tap * K:(tap + 1) * K, :] = \
                    skip_ref[0:K, off:off + TF]

        # --- Dilated 2x3 conv: ONE MXU push with contraction K = 6*K_i. ---
        w_i = w_ref[i][:, :K6]                                   # (C, 6K)
        conv = jnp.dot(w_i, stage_ref[0:K6, :],
                       preferred_element_type=jnp.float32)       # (C, TF)
        # (Conv bias intentionally omitted: LayerNorm's mean removes it.)

        # --- LayerNorm over the F valid freq columns, fused statistics. ---
        stats_in = jnp.concatenate([conv, conv * conv], axis=0)  # (2C, TF)
        sums = jnp.dot(stats_in, S,
                       preferred_element_type=jnp.float32) * inv_f   # (2C, T)
        mean = sums[0:C]                                          # (C, T)
        var = jnp.maximum(sums[C:2 * C] - mean * mean, 0.0)
        inv_std = lax.rsqrt(var + LN_EPS)                         # (C, T)
        bcast = jnp.dot(jnp.concatenate([mean, inv_std], axis=0), ST,
                        preferred_element_type=jnp.float32)       # (2C, TF)
        # gamma/beta are 0 in the pad columns -> pad columns of yv are exactly 0.
        yv = (conv - bcast[0:C]) * bcast[C:2 * C] * g_ref[i] + be_ref[i]

        # --- PReLU (per output channel). ---
        alpha = a_ref[i]                                          # (C, 1)
        yv = jnp.where(yv >= 0.0, yv, alpha * yv)

        # --- Dense connection: append as the next layer's input channels. ---
        if i < depth - 1:
            lo = C * (i + 1)
            skip_ref[lo:lo + C, base:base + TF] = yv              # aligned store
        y = yv

    o_ref[0] = y.astype(o_ref.dtype)


# ---------------------------------------------------------------------------
# Wrapper: layout plumbing + single pallas_call.
# ---------------------------------------------------------------------------
def dense_block_forward(x, kernel_params, depth):
    """x: (B, C, T, F) NCHW.  Returns the last layer's output, same shape."""
    B, C, T, F = x.shape
    Fp = _padded_freq(T, F)
    TF = T * Fp
    PT = 2 ** (depth - 1)
    G = (-(PT * Fp)) % 128 or 128           # guard prefix so base % 128 == 0
    base = G + PT * Fp
    Wflat = base + TF + 128                 # + aligned tail guard
    w_all, g_all, be_all, a_all = kernel_params

    # Input -> pad-flat layout (freq zero-padded on the right to Fp, flattened).
    x_flat = jnp.pad(x, ((0, 0), (0, 0), (0, 0), (0, Fp - F))).reshape(B, C, TF)

    # Segment-indicator matrices for the in-kernel LayerNorm over F.
    q = jnp.arange(TF)
    valid = (q % Fp) < F
    seg = ((q[:, None] // Fp) == jnp.arange(T)[None, :]) & valid[:, None]
    S = seg.astype(jnp.float32)             # (TF, T)
    ST = S.T                                # (T, TF)

    kernel = functools.partial(_dense_block_kernel, depth=depth,
                               C=C, T=T, F=F, Fp=Fp, G=G)
    out_flat = pl.pallas_call(
        kernel,
        out_shape=jax.ShapeDtypeStruct((B, C, TF), x.dtype),
        grid_spec=pltpu.PrefetchScalarGridSpec(
            num_scalar_prefetch=0,
            grid=(B,),
            in_specs=[
                pl.BlockSpec((1, C, TF), lambda b: (b, 0, 0)),
                pl.BlockSpec(w_all.shape, lambda b: (0, 0, 0)),
                pl.BlockSpec(g_all.shape, lambda b: (0, 0, 0)),
                pl.BlockSpec(be_all.shape, lambda b: (0, 0, 0)),
                pl.BlockSpec(a_all.shape, lambda b: (0, 0, 0)),
                pl.BlockSpec(S.shape, lambda b: (0, 0)),
                pl.BlockSpec(ST.shape, lambda b: (0, 0)),
            ],
            out_specs=pl.BlockSpec((1, C, TF), lambda b: (b, 0, 0)),
            scratch_shapes=[
                pltpu.VMEM((C * depth, Wflat), jnp.float32),      # resident skip
                pltpu.VMEM((6 * C * depth, TF), jnp.float32),     # conv-tap stage
            ],
        ),
        compiler_params=pltpu.CompilerParams(
            dimension_semantics=("parallel",)),
    )(x_flat, w_all, g_all, be_all, a_all, S, ST)

    # Un-flatten and drop the pad columns -> NCHW (B, C, T, F).
    return out_flat.reshape(B, C, T, Fp)[..., :F]


# ---------------------------------------------------------------------------
# Parameter construction (PyTorch layout) and repacking for the fused kernel.
# ---------------------------------------------------------------------------
def init_params(key, depth, in_channels, input_size):
    """Raw PyTorch-layout parameters for each layer of the DenseBlock."""
    params = []
    for i in range(depth):
        cin = in_channels * (i + 1)
        key, kw, kb, kg, kbe = jax.random.split(key, 5)
        fan_in = cin * 2 * 3
        bound = 1.0 / (fan_in ** 0.5)
        w = jax.random.uniform(kw, (in_channels, cin, 2, 3), jnp.float32,
                               -bound, bound)
        b = jax.random.uniform(kb, (in_channels,), jnp.float32, -bound, bound)
        gamma = 1.0 + 0.1 * jax.random.normal(kg, (input_size,), jnp.float32)
        beta = 0.1 * jax.random.normal(kbe, (input_size,), jnp.float32)
        alpha = jnp.full((in_channels,), 0.25, jnp.float32)   # PReLU default
        params.append((w, b, gamma, beta, alpha))
    return params


def prepare_kernel_params(raw_params, depth, in_channels, input_size, T):
    """Repack PyTorch params into the fused kernel's layouts.

    - Weights: per layer, one (C, 6*C*depth) matrix whose first 6*K_i columns
      hold the 6 taps stacked [tap0 | tap1 | ... | tap5], each tap block using
      the kernel's scratch channel order [x, out_0, out_1, ...] (PyTorch
      concatenates newest-first, so scratch block s <- torch block i-s).
    - gamma/beta: zero-padded to Fp columns and tiled T times (pad-flat).
    - Conv bias is dropped: LayerNorm's mean subtraction cancels it exactly.
    """
    C, F = in_channels, input_size
    Fp = _padded_freq(T, F)
    TF = T * Fp
    K6max = 6 * C * depth
    w_list, g_list, be_list, a_list = [], [], [], []
    for i in range(depth):
        w, _b, gamma, beta, alpha = raw_params[i]     # w: (C, C*(i+1), 2, 3)
        Ki = C * (i + 1)
        w_stack = jnp.zeros((C, K6max), jnp.float32)
        for kt in range(2):
            for kf in range(3):
                tap = kt * 3 + kf
                blk = jnp.concatenate(
                    [w[:, (i - s) * C:(i - s + 1) * C, kt, kf]
                     for s in range(i + 1)], axis=1)  # (C, Ki), scratch order
                w_stack = w_stack.at[:, tap * Ki:(tap + 1) * Ki].set(blk)
        w_list.append(w_stack)
        gz = jnp.concatenate([gamma, jnp.zeros((Fp - F,), jnp.float32)])
        bz = jnp.concatenate([beta, jnp.zeros((Fp - F,), jnp.float32)])
        g_list.append(jnp.tile(gz, T).reshape(1, TF))
        be_list.append(jnp.tile(bz, T).reshape(1, TF))
        a_list.append(alpha.reshape(C, 1))
    w_all = jnp.stack(w_list)       # (depth, C, 6*C*depth)
    g_all = jnp.stack(g_list)       # (depth, 1, TF)
    be_all = jnp.stack(be_list)     # (depth, 1, TF)
    a_all = jnp.stack(a_list)       # (depth, C, 1)
    return w_all, g_all, be_all, a_all


# ---------------------------------------------------------------------------
# Pure-JAX reference (keeps the conv bias) for the correctness check.
# ---------------------------------------------------------------------------
def ref_forward(x, raw_params, depth):
    skip = x
    y = None
    for i in range(depth):
        dil = 2 ** i
        w, b, g, be, a = raw_params[i]
        xp = jnp.pad(skip, ((0, 0), (0, 0), (dil, 0), (1, 1)))
        conv = jax.lax.conv_general_dilated(
            xp, w, window_strides=(1, 1), padding="VALID",
            rhs_dilation=(dil, 1),
            dimension_numbers=("NCHW", "OIHW", "NCHW"),
        ) + b[None, :, None, None]
        mean = jnp.mean(conv, axis=-1, keepdims=True)
        var = jnp.mean((conv - mean) ** 2, axis=-1, keepdims=True)
        y = (conv - mean) * jax.lax.rsqrt(var + LN_EPS) * g + be
        y = jnp.where(y >= 0.0, y, a[None, :, None, None] * y)
        skip = jnp.concatenate([y, skip], axis=1)
    return y


if __name__ == "__main__":
    # Small shapes consistent with the module: F (=input_size) is the LayerNorm
    # dim; depth=5 gives dilations 1, 2, 4, 8, 16.
    B, C, T, F = 2, 8, 16, 16
    DEPTH = 5

    key = jax.random.PRNGKey(0)
    kx, kp = jax.random.split(key)
    x = jax.random.normal(kx, (B, C, T, F), dtype=jnp.float32)

    raw_params = init_params(kp, DEPTH, C, F)
    kparams = prepare_kernel_params(raw_params, DEPTH, C, F, T)

    fwd = jax.jit(functools.partial(dense_block_forward, depth=DEPTH))
    out = jax.block_until_ready(fwd(x, kparams))

    ref = jax.block_until_ready(ref_forward(x, raw_params, DEPTH))

    assert out.shape == (B, C, T, F), out.shape
    if not jnp.allclose(out, ref, atol=1e-3, rtol=1e-3):
        err = float(jnp.max(jnp.abs(out - ref)))
        raise AssertionError(f"Pallas DenseBlock mismatch vs reference: {err}")
    print("KERNEL_OK")
</pallas_src>

<mosaic_0001>
module attributes {stable_mosaic.version = 11 : i64} {
  func.func @_dense_block_kernel(%arg0: i32, %arg1: memref<1x8x384xf32, #tpu.memory_space<vmem>>, %arg2: memref<5x8x240xf32, #tpu.memory_space<vmem>>, %arg3: memref<5x1x384xf32, #tpu.memory_space<vmem>>, %arg4: memref<5x1x384xf32, #tpu.memory_space<vmem>>, %arg5: memref<5x8x1xf32, #tpu.memory_space<vmem>>, %arg6: memref<384x16xf32, #tpu.memory_space<vmem>>, %arg7: memref<16x384xf32, #tpu.memory_space<vmem>>, %arg8: memref<1x8x384xf32, #tpu.memory_space<vmem>>, %arg9: memref<40x1024xf32, #tpu.memory_space<vmem>>, %arg10: memref<240x384xf32, #tpu.memory_space<vmem>>) attributes {dimension_semantics = [#tpu.dimension_semantics<parallel>], iteration_bounds = array<i64: 2>, scalar_prefetch = 0 : i64, scratch_operands = 2 : i64, tpu.core_type = #tpu.core_type<tc>, window_params = [{transform_indices = @transform_0, window_bounds = array<i64: 1, 8, 384>}, {pipeline_mode = #tpu.pipeline_mode<synchronous>, transform_indices = @transform_1, window_bounds = array<i64: 5, 8, 240>}, {pipeline_mode = #tpu.pipeline_mode<synchronous>, transform_indices = @transform_2, window_bounds = array<i64: 5, 1, 384>}, {pipeline_mode = #tpu.pipeline_mode<synchronous>, transform_indices = @transform_3, window_bounds = array<i64: 5, 1, 384>}, {pipeline_mode = #tpu.pipeline_mode<synchronous>, transform_indices = @transform_4, window_bounds = array<i64: 5, 8, 1>}, {pipeline_mode = #tpu.pipeline_mode<synchronous>, transform_indices = @transform_5, window_bounds = array<i64: 384, 16>}, {pipeline_mode = #tpu.pipeline_mode<synchronous>, transform_indices = @transform_6, window_bounds = array<i64: 16, 384>}, {transform_indices = @transform_7, window_bounds = array<i64: 1, 8, 384>}]} {
    %cst = arith.constant 0.000000e+00 : f32
    %0 = vector.broadcast %cst : f32 to vector<40x512xf32>
    %c0 = arith.constant 0 : index
    %c0_0 = arith.constant 0 : index
    %1 = vector.load %arg9[%c0, %c0_0] : memref<40x1024xf32, #tpu.memory_space<vmem>>, vector<40x512xf32>
    tpu.vector_store %arg9[%c0, %c0_0], %0 {strides = array<i32>} : memref<40x1024xf32, #tpu.memory_space<vmem>>, vector<40x512xf32>,
    %cst_1 = arith.constant 0.000000e+00 : f32
    %2 = vector.broadcast %cst_1 : f32 to vector<40x128xf32>
    %c0_2 = arith.constant 0 : index
    %c896 = arith.constant 896 : index
    %3 = vector.load %arg9[%c0_2, %c896] : memref<40x1024xf32, #tpu.memory_space<vmem>>, vector<40x128xf32>
    tpu.vector_store %arg9[%c0_2, %c896], %2 {strides = array<i32>} : memref<40x1024xf32, #tpu.memory_space<vmem>>, vector<40x128xf32>,
    %c0_3 = arith.constant 0 : index
    %c0_4 = arith.constant 0 : index
    %c0_5 = arith.constant 0 : index
    %4 = vector.load %arg1[%c0_3, %c0_4, %c0_5] : memref<1x8x384xf32, #tpu.memory_space<vmem>>, vector<1x8x384xf32>
    %5 = vector.shape_cast %4 : vector<1x8x384xf32> to vector<8x384xf32>
    %c0_6 = arith.constant 0 : index
    %c512 = arith.constant 512 : index
    %6 = vector.load %arg9[%c0_6, %c512] : memref<40x1024xf32, #tpu.memory_space<vmem>>, vector<8x384xf32>
    tpu.vector_store %arg9[%c0_6, %c512], %5 {strides = array<i32>} : memref<40x1024xf32, #tpu.memory_space<vmem>>, vector<8x384xf32>,
    %c0_7 = arith.constant 0 : index
    %c0_8 = arith.constant 0 : index
    %7 = vector.load %arg6[%c0_7, %c0_8] : memref<384x16xf32, #tpu.memory_space<vmem>>, vector<384x16xf32>
    %c0_9 = arith.constant 0 : index
    %c0_10 = arith.constant 0 : index
    %8 = vector.load %arg7[%c0_9, %c0_10] : memref<16x384xf32, #tpu.memory_space<vmem>>, vector<16x384xf32>
    %c0_11 = arith.constant 0 : index
    %c487 = arith.constant 487 : index
    %9 = vector.load %arg9[%c0_11, %c487] : memref<40x1024xf32, #tpu.memory_space<vmem>>, vector<8x384xf32>
    %c0_12 = arith.constant 0 : index
    %c0_13 = arith.constant 0 : index
    %10 = vector.load %arg10[%c0_12, %c0_13] : memref<240x384xf32, #tpu.memory_space<vmem>>, vector<8x384xf32>
    tpu.vector_store %arg10[%c0_12, %c0_13], %9 {strides = array<i32>} : memref<240x384xf32, #tpu.memory_space<vmem>>, vector<8x384xf32>,
    %c0_14 = arith.constant 0 : index
    %c488 = arith.constant 488 : index
    %11 = vector.load %arg9[%c0_14, %c488] : memref<40x1024xf32, #tpu.memory_space<vmem>>, vector<8x384xf32>
    %c8 = arith.constant 8 : index
    %c0_15 = arith.constant 0 : index
    %12 = vector.load %arg10[%c8, %c0_15] : memref<240x384xf32, #tpu.memory_space<vmem>>, vector<8x384xf32>
    tpu.vector_store %arg10[%c8, %c0_15], %11 {strides = array<i32>} : memref<240x384xf32, #tpu.memory_space<vmem>>, vector<8x384xf32>,
    %c0_16 = arith.constant 0 : index
    %c489 = arith.constant 489 : index
    %13 = vector.load %arg9[%c0_16, %c489] : memref<40x1024xf32, #tpu.memory_space<vmem>>, vector<8x384xf32>
    %c16 = arith.constant 16 : index
    %c0_17 = arith.constant 0 : index
    %14 = vector.load %arg10[%c16, %c0_17] : memref<240x384xf32, #tpu.memory_space<vmem>>, vector<8x384xf32>
    tpu.vector_store %arg10[%c16, %c0_17], %13 {strides = array<i32>} : memref<240x384xf32, #tpu.memory_space<vmem>>, vector<8x384xf32>,
    %c0_18 = arith.constant 0 : index
    %c511 = arith.constant 511 : index
    %15 = vector.load %arg9[%c0_18, %c511] : memref<40x1024xf32, #tpu.memory_space<vmem>>, vector<8x384xf32>
    %c24 = arith.constant 24 : index
    %c0_19 = arith.constant 0 : index
    %16 = vector.load %arg10[%c24, %c0_19] : memref<240x384xf32, #tpu.memory_space<vmem>>, vector<8x384xf32>
    tpu.vector_store %arg10[%c24, %c0_19], %15 {strides = array<i32>} : memref<240x384xf32, #tpu.memory_space<vmem>>, vector<8x384xf32>,
    %c0_20 = arith.constant 0 : index
    %c512_21 = arith.constant 512 : index
    %17 = vector.load %arg9[%c0_20, %c512_21] : memref<40x1024xf32, #tpu.memory_space<vmem>>, vector<8x384xf32>
    %c32 = arith.constant 32 : index
    %c0_22 = arith.constant 0 : index
    %18 = vector.load %arg10[%c32, %c0_22] : memref<240x384xf32, #tpu.memory_space<vmem>>, vector<8x384xf32>
    tpu.vector_store %arg10[%c32, %c0_22], %17 {strides = array<i32>} : memref<240x384xf32, #tpu.memory_space<vmem>>, vector<8x384xf32>,
    %c0_23 = arith.constant 0 : index
    %c513 = arith.constant 513 : index
    %19 = vector.load %arg9[%c0_23, %c513] : memref<40x1024xf32, #tpu.memory_space<vmem>>, vector<8x384xf32>
    %c40 = arith.constant 40 : index
    %c0_24 = arith.constant 0 : index
    %20 = vector.load %arg10[%c40, %c0_24] : memref<240x384xf32, #tpu.memory_space<vmem>>, vector<8x384xf32>
    tpu.vector_store %arg10[%c40, %c0_24], %19 {strides = array<i32>} : memref<240x384xf32, #tpu.memory_space<vmem>>, vector<8x384xf32>,
    %c0_25 = arith.constant 0 : index
    %c0_26 = arith.constant 0 : index
    %c0_27 = arith.constant 0 : index
    %21 = vector.load %arg2[%c0_25, %c0_26, %c0_27] : memref<5x8x240xf32, #tpu.memory_space<vmem>>, vector<1x8x240xf32>
    %22 = vector.shape_cast %21 : vector<1x8x240xf32> to vector<8x240xf32>
    %23 = vector.extract_strided_slice %22 {offsets = [0, 0], sizes = [8, 48], strides = [1, 1]} : vector<8x240xf32> to vector<8x48xf32>
    %c0_28 = arith.constant 0 : index
    %c0_29 = arith.constant 0 : index
    %24 = vector.load %arg10[%c0_28, %c0_29] : memref<240x384xf32, #tpu.memory_space<vmem>>, vector<48x384xf32>
    %cst_30 = arith.constant dense<0.000000e+00> : vector<8x384xf32>
    %25 = tpu.matmul %23, %24, %cst_30 {dimension_numbers = #tpu.dot_dimension_numbers<[1], [0], [0], [1], [0, 0, 1, 1], [], []>} : vector<8x48xf32>, vector<48x384xf32>, vector<8x384xf32> -> vector<8x384xf32>
    %26 = arith.mulf %25, %25 : vector<8x384xf32>
    %27 = tpu.concatenate %25, %26 in 0 : vector<8x384xf32>, vector<8x384xf32> -> vector<16x384xf32>
    %cst_31 = arith.constant dense<0.000000e+00> : vector<16x16xf32>
    %28 = tpu.matmul %27, %7, %cst_31 {dimension_numbers = #tpu.dot_dimension_numbers<[1], [0], [0], [1], [0, 0, 1, 1], [], []>} : vector<16x384xf32>, vector<384x16xf32>, vector<16x16xf32> -> vector<16x16xf32>
    %cst_32 = arith.constant 6.250000e-02 : f32
    %29 = vector.broadcast %cst_32 : f32 to vector<16x16xf32>
    %30 = arith.mulf %28, %29 : vector<16x16xf32>
    %31 = vector.extract_strided_slice %30 {offsets = [0, 0], sizes = [8, 16], strides = [1, 1]} : vector<16x16xf32> to vector<8x16xf32>
    %32 = vector.extract_strided_slice %30 {offsets = [8, 0], sizes = [8, 16], strides = [1, 1]} : vector<16x16xf32> to vector<8x16xf32>
    %33 = arith.mulf %31, %31 : vector<8x16xf32>
    %34 = arith.subf %32, %33 : vector<8x16xf32>
    %cst_33 = arith.constant 0.000000e+00 : f32
    %35 = vector.broadcast %cst_33 : f32 to vector<8x16xf32>
    %36 = arith.maximumf %34, %35 : vector<8x16xf32>
    %cst_34 = arith.constant 9.99999974E-6 : f32
    %37 = vector.broadcast %cst_34 : f32 to vector<8x16xf32>
    %38 = arith.addf %36, %37 : vector<8x16xf32>
    %39 = math.rsqrt %38 : vector<8x16xf32>
    %40 = tpu.concatenate %31, %39 in 0 : vector<8x16xf32>, vector<8x16xf32> -> vector<16x16xf32>
    %cst_35 = arith.constant dense<0.000000e+00> : vector<16x384xf32>
    %41 = tpu.matmul %40, %8, %cst_35 {dimension_numbers = #tpu.dot_dimension_numbers<[1], [0], [0], [1], [0, 0, 1, 1], [], []>} : vector<16x16xf32>, vector<16x384xf32>, vector<16x384xf32> -> vector<16x384xf32>
    %42 = vector.extract_strided_slice %41 {offsets = [0, 0], sizes = [8, 384], strides = [1, 1]} : vector<16x384xf32> to vector<8x384xf32>
    %43 = arith.subf %25, %42 : vector<8x384xf32>
    %44 = vector.extract_strided_slice %41 {offsets = [8, 0], sizes = [8, 384], strides = [1, 1]} : vector<16x384xf32> to vector<8x384xf32>
    %45 = arith.mulf %43, %44 : vector<8x384xf32>
    %c0_36 = arith.constant 0 : index
    %c0_37 = arith.constant 0 : index
    %c0_38 = arith.constant 0 : index
    %46 = vector.load %arg3[%c0_36, %c0_37, %c0_38] : memref<5x1x384xf32, #tpu.memory_space<vmem>>, vector<1x1x384xf32>
    %47 = vector.shape_cast %46 : vector<1x1x384xf32> to vector<1x384xf32>
    %48 = vector.broadcast %47 : vector<1x384xf32> to vector<8x384xf32>
    %49 = arith.mulf %45, %48 : vector<8x384xf32>
    %c0_39 = arith.constant 0 : index
    %c0_40 = arith.constant 0 : index
    %c0_41 = arith.constant 0 : index
    %50 = vector.load %arg4[%c0_39, %c0_40, %c0_41] : memref<5x1x384xf32, #tpu.memory_space<vmem>>, vector<1x1x384xf32>
    %51 = vector.shape_cast %50 : vector<1x1x384xf32> to vector<1x384xf32>
    %52 = vector.broadcast %51 : vector<1x384xf32> to vector<8x384xf32>
    %53 = arith.addf %49, %52 : vector<8x384xf32>
    %c0_42 = arith.constant 0 : index
    %c0_43 = arith.constant 0 : index
    %c0_44 = arith.constant 0 : index
    %54 = vector.load %arg5[%c0_42, %c0_43, %c0_44] : memref<5x8x1xf32, #tpu.memory_space<vmem>>, vector<1x8x1xf32>
    %55 = vector.shape_cast %54 : vector<1x8x1xf32> to vector<8x1xf32>
    %cst_45 = arith.constant 0.000000e+00 : f32
    %56 = vector.broadcast %cst_45 : f32 to vector<8x384xf32>
    %57 = arith.cmpf oge, %53, %56 : vector<8x384xf32>
    %58 = vector.broadcast %55 : vector<8x1xf32> to vector<8x384xf32>
    %59 = arith.mulf %58, %53 : vector<8x384xf32>
    %60 = arith.select %57, %53, %59 : vector<8x384xi1>, vector<8x384xf32>
    %c8_46 = arith.constant 8 : index
    %c512_47 = arith.constant 512 : index
    %61 = vector.load %arg9[%c8_46, %c512_47] : memref<40x1024xf32, #tpu.memory_space<vmem>>, vector<8x384xf32>
    tpu.vector_store %arg9[%c8_46, %c512_47], %60 {strides = array<i32>} : memref<40x1024xf32, #tpu.memory_space<vmem>>, vector<8x384xf32>,
    %c0_48 = arith.constant 0 : index
    %c463 = arith.constant 463 : index
    %62 = vector.load %arg9[%c0_48, %c463] : memref<40x1024xf32, #tpu.memory_space<vmem>>, vector<16x384xf32>
    %c0_49 = arith.constant 0 : index
    %c0_50 = arith.constant 0 : index
    %63 = vector.load %arg10[%c0_49, %c0_50] : memref<240x384xf32, #tpu.memory_space<vmem>>, vector<16x384xf32>
    tpu.vector_store %arg10[%c0_49, %c0_50], %62 {strides = array<i32>} : memref<240x384xf32, #tpu.memory_space<vmem>>, vector<16x384xf32>,
    %c0_51 = arith.constant 0 : index
    %c464 = arith.constant 464 : index
    %64 = vector.load %arg9[%c0_51, %c464] : memref<40x1024xf32, #tpu.memory_space<vmem>>, vector<16x384xf32>
    %c16_52 = arith.constant 16 : index
    %c0_53 = arith.constant 0 : index
    %65 = vector.load %arg10[%c16_52, %c0_53] : memref<240x384xf32, #tpu.memory_space<vmem>>, vector<16x384xf32>
    tpu.vector_store %arg10[%c16_52, %c0_53], %64 {strides = array<i32>} : memref<240x384xf32, #tpu.memory_space<vmem>>, vector<16x384xf32>,
    %c0_54 = arith.constant 0 : index
    %c465 = arith.constant 465 : index
    %66 = vector.load %arg9[%c0_54, %c465] : memref<40x1024xf32, #tpu.memory_space<vmem>>, vector<16x384xf32>
    %c32_55 = arith.constant 32 : index
    %c0_56 = arith.constant 0 : index
    %67 = vector.load %arg10[%c32_55, %c0_56] : memref<240x384xf32, #tpu.memory_space<vmem>>, vector<16x384xf32>
    tpu.vector_store %arg10[%c32_55, %c0_56], %66 {strides = array<i32>} : memref<240x384xf32, #tpu.memory_space<vmem>>, vector<16x384xf32>,
    %c0_57 = arith.constant 0 : index
    %c511_58 = arith.constant 511 : index
    %68 = vector.load %arg9[%c0_57, %c511_58] : memref<40x1024xf32, #tpu.memory_space<vmem>>, vector<16x384xf32>
    %c48 = arith.constant 48 : index
    %c0_59 = arith.constant 0 : index
    %69 = vector.load %arg10[%c48, %c0_59] : memref<240x384xf32, #tpu.memory_space<vmem>>, vector<16x384xf32>
    tpu.vector_store %arg10[%c48, %c0_59], %68 {strides = array<i32>} : memref<240x384xf32, #tpu.memory_space<vmem>>, vector<16x384xf32>,
    %c0_60 = arith.constant 0 : index
    %c512_61 = arith.constant 512 : index
    %70 = vector.load %arg9[%c0_60, %c512_61] : memref<40x1024xf32, #tpu.memory_space<vmem>>, vector<16x384xf32>
    %c64 = arith.constant 64 : index
    %c0_62 = arith.constant 0 : index
    %71 = vector.load %arg10[%c64, %c0_62] : memref<240x384xf32, #tpu.memory_space<vmem>>, vector<16x384xf32>
    tpu.vector_store %arg10[%c64, %c0_62], %70 {strides = array<i32>} : memref<240x384xf32, #tpu.memory_space<vmem>>, vector<16x384xf32>,
    %c0_63 = arith.constant 0 : index
    %c513_64 = arith.constant 513 : index
    %72 = vector.load %arg9[%c0_63, %c513_64] : memref<40x1024xf32, #tpu.memory_space<vmem>>, vector<16x384xf32>
    %c80 = arith.constant 80 : index
    %c0_65 = arith.constant 0 : index
    %73 = vector.load %arg10[%c80, %c0_65] : memref<240x384xf32, #tpu.memory_space<vmem>>, vector<16x384xf32>
    tpu.vector_store %arg10[%c80, %c0_65], %72 {strides = array<i32>} : memref<240x384xf32, #tpu.memory_space<vmem>>, vector<16x384xf32>,
    %c1 = arith.constant 1 : index
    %c0_66 = arith.constant 0 : index
    %c0_67 = arith.constant 0 : index
    %74 = vector.load %arg2[%c1, %c0_66, %c0_67] : memref<5x8x240xf32, #tpu.memory_space<vmem>>, vector<1x8x240xf32>
    %75 = vector.shape_cast %74 : vector<1x8x240xf32> to vector<8x240xf32>
    %76 = vector.extract_strided_slice %75 {offsets = [0, 0], sizes = [8, 96], strides = [1, 1]} : vector<8x240xf32> to vector<8x96xf32>
    %c0_68 = arith.constant 0 : index
    %c0_69 = arith.constant 0 : index
    %77 = vector.load %arg10[%c0_68, %c0_69] : memref<240x384xf32, #tpu.memory_space<vmem>>, vector<96x384xf32>
    %cst_70 = arith.constant dense<0.000000e+00> : vector<8x384xf32>
    %78 = tpu.matmul %76, %77, %cst_70 {dimension_numbers = #tpu.dot_dimension_numbers<[1], [0], [0], [1], [0, 0, 1, 1], [], []>} : vector<8x96xf32>, vector<96x384xf32>, vector<8x384xf32> -> vector<8x384xf32>
    %79 = arith.mulf %78, %78 : vector<8x384xf32>
    %80 = tpu.concatenate %78, %79 in 0 : vector<8x384xf32>, vector<8x384xf32> -> vector<16x384xf32>
    %cst_71 = arith.constant dense<0.000000e+00> : vector<16x16xf32>
    %81 = tpu.matmul %80, %7, %cst_71 {dimension_numbers = #tpu.dot_dimension_numbers<[1], [0], [0], [1], [0, 0, 1, 1], [], []>} : vector<16x384xf32>, vector<384x16xf32>, vector<16x16xf32> -> vector<16x16xf32>
    %cst_72 = arith.constant 6.250000e-02 : f32
    %82 = vector.broadcast %cst_72 : f32 to vector<16x16xf32>
    %83 = arith.mulf %81, %82 : vector<16x16xf32>
    %84 = vector.extract_strided_slice %83 {offsets = [0, 0], sizes = [8, 16], strides = [1, 1]} : vector<16x16xf32> to vector<8x16xf32>
    %85 = vector.extract_strided_slice %83 {offsets = [8, 0], sizes = [8, 16], strides = [1, 1]} : vector<16x16xf32> to vector<8x16xf32>
    %86 = arith.mulf %84, %84 : vector<8x16xf32>
    %87 = arith.subf %85, %86 : vector<8x16xf32>
    %cst_73 = arith.constant 0.000000e+00 : f32
    %88 = vector.broadcast %cst_73 : f32 to vector<8x16xf32>
    %89 = arith.maximumf %87, %88 : vector<8x16xf32>
    %cst_74 = arith.constant 9.99999974E-6 : f32
    %90 = vector.broadcast %cst_74 : f32 to vector<8x16xf32>
    %91 = arith.addf %89, %90 : vector<8x16xf32>
    %92 = math.rsqrt %91 : vector<8x16xf32>
    %93 = tpu.concatenate %84, %92 in 0 : vector<8x16xf32>, vector<8x16xf32> -> vector<16x16xf32>
    %cst_75 = arith.constant dense<0.000000e+00> : vector<16x384xf32>
    %94 = tpu.matmul %93, %8, %cst_75 {dimension_numbers = #tpu.dot_dimension_numbers<[1], [0], [0], [1], [0, 0, 1, 1], [], []>} : vector<16x16xf32>, vector<16x384xf32>, vector<16x384xf32> -> vector<16x384xf32>
    %95 = vector.extract_strided_slice %94 {offsets = [0, 0], sizes = [8, 384], strides = [1, 1]} : vector<16x384xf32> to vector<8x384xf32>
    %96 = arith.subf %78, %95 : vector<8x384xf32>
    %97 = vector.extract_strided_slice %94 {offsets = [8, 0], sizes = [8, 384], strides = [1, 1]} : vector<16x384xf32> to vector<8x384xf32>
    %98 = arith.mulf %96, %97 : vector<8x384xf32>
    %c1_76 = arith.constant 1 : index
    %c0_77 = arith.constant 0 : index
    %c0_78 = arith.constant 0 : index
    %99 = vector.load %arg3[%c1_76, %c0_77, %c0_78] : memref<5x1x384xf32, #tpu.memory_space<vmem>>, vector<1x1x384xf32>
    %100 = vector.shape_cast %99 : vector<1x1x384xf32> to vector<1x384xf32>
    %101 = vector.broadcast %100 : vector<1x384xf32> to vector<8x384xf32>
    %102 = arith.mulf %98, %101 : vector<8x384xf32>
    %c1_79 = arith.constant 1 : index
    %c0_80 = arith.constant 0 : index
    %c0_81 = arith.constant 0 : index
    %103 = vector.load %arg4[%c1_79, %c0_80, %c0_81] : memref<5x1x384xf32, #tpu.memory_space<vmem>>, vector<1x1x384xf32>
    %104 = vector.shape_cast %103 : vector<1x1x384xf32> to vector<1x384xf32>
    %105 = vector.broadcast %104 : vector<1x384xf32> to vector<8x384xf32>
    %106 = arith.addf %102, %105 : vector<8x384xf32>
    %c1_82 = arith.constant 1 : index
    %c0_83 = arith.constant 0 : index
    %c0_84 = arith.constant 0 : index
    %107 = vector.load %arg5[%c1_82, %c0_83, %c0_84] : memref<5x8x1xf32, #tpu.memory_space<vmem>>, vector<1x8x1xf32>
    %108 = vector.shape_cast %107 : vector<1x8x1xf32> to vector<8x1xf32>
    %cst_85 = arith.constant 0.000000e+00 : f32
    %109 = vector.broadcast %cst_85 : f32 to vector<8x384xf32>
    %110 = arith.cmpf oge, %106, %109 : vector<8x384xf32>
    %111 = vector.broadcast %108 : vector<8x1xf32> to vector<8x384xf32>
    %112 = arith.mulf %111, %106 : vector<8x384xf32>
    %113 = arith.select %110, %106, %112 : vector<8x384xi1>, vector<8x384xf32>
    %c16_86 = arith.constant 16 : index
    %c512_87 = arith.constant 512 : index
    %114 = vector.load %arg9[%c16_86, %c512_87] : memref<40x1024xf32, #tpu.memory_space<vmem>>, vector<8x384xf32>
    tpu.vector_store %arg9[%c16_86, %c512_87], %113 {strides = array<i32>} : memref<40x1024xf32, #tpu.memory_space<vmem>>, vector<8x384xf32>,
    %c0_88 = arith.constant 0 : index
    %c415 = arith.constant 415 : index
    %115 = vector.load %arg9[%c0_88, %c415] : memref<40x1024xf32, #tpu.memory_space<vmem>>, vector<24x384xf32>
    %c0_89 = arith.constant 0 : index
    %c0_90 = arith.constant 0 : index
    %116 = vector.load %arg10[%c0_89, %c0_90] : memref<240x384xf32, #tpu.memory_space<vmem>>, vector<24x384xf32>
    tpu.vector_store %arg10[%c0_89, %c0_90], %115 {strides = array<i32>} : memref<240x384xf32, #tpu.memory_space<vmem>>, vector<24x384xf32>,
    %c0_91 = arith.constant 0 : index
    %c416 = arith.constant 416 : index
    %117 = vector.load %arg9[%c0_91, %c416] : memref<40x1024xf32, #tpu.memory_space<vmem>>, vector<24x384xf32>
    %c24_92 = arith.constant 24 : index
    %c0_93 = arith.constant 0 : index
    %118 = vector.load %arg10[%c24_92, %c0_93] : memref<240x384xf32, #tpu.memory_space<vmem>>, vector<24x384xf32>
    tpu.vector_store %arg10[%c24_92, %c0_93], %117 {strides = array<i32>} : memref<240x384xf32, #tpu.memory_space<vmem>>, vector<24x384xf32>,
    %c0_94 = arith.constant 0 : index
    %c417 = arith.constant 417 : index
    %119 = vector.load %arg9[%c0_94, %c417] : memref<40x1024xf32, #tpu.memory_space<vmem>>, vector<24x384xf32>
    %c48_95 = arith.constant 48 : index
    %c0_96 = arith.constant 0 : index
    %120 = vector.load %arg10[%c48_95, %c0_96] : memref<240x384xf32, #tpu.memory_space<vmem>>, vector<24x384xf32>
    tpu.vector_store %arg10[%c48_95, %c0_96], %119 {strides = array<i32>} : memref<240x384xf32, #tpu.memory_space<vmem>>, vector<24x384xf32>,
    %c0_97 = arith.constant 0 : index
    %c511_98 = arith.constant 511 : index
    %121 = vector.load %arg9[%c0_97, %c511_98] : memref<40x1024xf32, #tpu.memory_space<vmem>>, vector<24x384xf32>
    %c72 = arith.constant 72 : index
    %c0_99 = arith.constant 0 : index
    %122 = vector.load %arg10[%c72, %c0_99] : memref<240x384xf32, #tpu.memory_space<vmem>>, vector<24x384xf32>
    tpu.vector_store %arg10[%c72, %c0_99], %121 {strides = array<i32>} : memref<240x384xf32, #tpu.memory_space<vmem>>, vector<24x384xf32>,
    %c0_100 = arith.constant 0 : index
    %c512_101 = arith.constant 512 : index
    %123 = vector.load %arg9[%c0_100, %c512_101] : memref<40x1024xf32, #tpu.memory_space<vmem>>, vector<24x384xf32>
    %c96 = arith.constant 96 : index
    %c0_102 = arith.constant 0 : index
    %124 = vector.load %arg10[%c96, %c0_102] : memref<240x384xf32, #tpu.memory_space<vmem>>, vector<24x384xf32>
    tpu.vector_store %arg10[%c96, %c0_102], %123 {strides = array<i32>} : memref<240x384xf32, #tpu.memory_space<vmem>>, vector<24x384xf32>,
    %c0_103 = arith.constant 0 : index
    %c513_104 = arith.constant 513 : index
    %125 = vector.load %arg9[%c0_103, %c513_104] : memref<40x1024xf32, #tpu.memory_space<vmem>>, vector<24x384xf32>
    %c120 = arith.constant 120 : index
    %c0_105 = arith.constant 0 : index
    %126 = vector.load %arg10[%c120, %c0_105] : memref<240x384xf32, #tpu.memory_space<vmem>>, vector<24x384xf32>
    tpu.vector_store %arg10[%c120, %c0_105], %125 {strides = array<i32>} : memref<240x384xf32, #tpu.memory_space<vmem>>, vector<24x384xf32>,
    %c2 = arith.constant 2 : index
    %c0_106 = arith.constant 0 : index
    %c0_107 = arith.constant 0 : index
    %127 = vector.load %arg2[%c2, %c0_106, %c0_107] : memref<5x8x240xf32, #tpu.memory_space<vmem>>, vector<1x8x240xf32>
    %128 = vector.shape_cast %127 : vector<1x8x240xf32> to vector<8x240xf32>
    %129 = vector.extract_strided_slice %128 {offsets = [0, 0], sizes = [8, 144], strides = [1, 1]} : vector<8x240xf32> to vector<8x144xf32>
    %c0_108 = arith.constant 0 : index
    %c0_109 = arith.constant 0 : index
    %130 = vector.load %arg10[%c0_108, %c0_109] : memref<240x384xf32, #tpu.memory_space<vmem>>, vector<144x384xf32>
    %cst_110 = arith.constant dense<0.000000e+00> : vector<8x384xf32>
    %131 = tpu.matmul %129, %130, %cst_110 {dimension_numbers = #tpu.dot_dimension_numbers<[1], [0], [0], [1], [0, 0, 1, 1], [], []>} : vector<8x144xf32>, vector<144x384xf32>, vector<8x384xf32> -> vector<8x384xf32>
    %132 = arith.mulf %131, %131 : vector<8x384xf32>
    %133 = tpu.concatenate %131, %132 in 0 : vector<8x384xf32>, vector<8x384xf32> -> vector<16x384xf32>
    %cst_111 = arith.constant dense<0.000000e+00> : vector<16x16xf32>
    %134 = tpu.matmul %133, %7, %cst_111 {dimension_numbers = #tpu.dot_dimension_numbers<[1], [0], [0], [1], [0, 0, 1, 1], [], []>} : vector<16x384xf32>, vector<384x16xf32>, vector<16x16xf32> -> vector<16x16xf32>
    %cst_112 = arith.constant 6.250000e-02 : f32
    %135 = vector.broadcast %cst_112 : f32 to vector<16x16xf32>
    %136 = arith.mulf %134, %135 : vector<16x16xf32>
    %137 = vector.extract_strided_slice %136 {offsets = [0, 0], sizes = [8, 16], strides = [1, 1]} : vector<16x16xf32> to vector<8x16xf32>
    %138 = vector.extract_strided_slice %136 {offsets = [8, 0], sizes = [8, 16], strides = [1, 1]} : vector<16x16xf32> to vector<8x16xf32>
    %139 = arith.mulf %137, %137 : vector<8x16xf32>
    %140 = arith.subf %138, %139 : vector<8x16xf32>
    %cst_113 = arith.constant 0.000000e+00 : f32
    %141 = vector.broadcast %cst_113 : f32 to vector<8x16xf32>
    %142 = arith.maximumf %140, %141 : vector<8x16xf32>
    %cst_114 = arith.constant 9.99999974E-6 : f32
    %143 = vector.broadcast %cst_114 : f32 to vector<8x16xf32>
    %144 = arith.addf %142, %143 : vector<8x16xf32>
    %145 = math.rsqrt %144 : vector<8x16xf32>
    %146 = tpu.concatenate %137, %145 in 0 : vector<8x16xf32>, vector<8x16xf32> -> vector<16x16xf32>
    %cst_115 = arith.constant dense<0.000000e+00> : vector<16x384xf32>
    %147 = tpu.matmul %146, %8, %cst_115 {dimension_numbers = #tpu.dot_dimension_numbers<[1], [0], [0], [1], [0, 0, 1, 1], [], []>} : vector<16x16xf32>, vector<16x384xf32>, vector<16x384xf32> -> vector<16x384xf32>
    %148 = vector.extract_strided_slice %147 {offsets = [0, 0], sizes = [8, 384], strides = [1, 1]} : vector<16x384xf32> to vector<8x384xf32>
    %149 = arith.subf %131, %148 : vector<8x384xf32>
    %150 = vector.extract_strided_slice %147 {offsets = [8, 0], sizes = [8, 384], strides = [1, 1]} : vector<16x384xf32> to vector<8x384xf32>
    %151 = arith.mulf %149, %150 : vector<8x384xf32>
    %c2_116 = arith.constant 2 : index
    %c0_117 = arith.constant 0 : index
    %c0_118 = arith.constant 0 : index
    %152 = vector.load %arg3[%c2_116, %c0_117, %c0_118] : memref<5x1x384xf32, #tpu.memory_space<vmem>>, vector<1x1x384xf32>
    %153 = vector.shape_cast %152 : vector<1x1x384xf32> to vector<1x384xf32>
    %154 = vector.broadcast %153 : vector<1x384xf32> to vector<8x384xf32>
    %155 = arith.mulf %151, %154 : vector<8x384xf32>
    %c2_119 = arith.constant 2 : index
    %c0_120 = arith.constant 0 : index
    %c0_121 = arith.constant 0 : index
    %156 = vector.load %arg4[%c2_119, %c0_120, %c0_121] : memref<5x1x384xf32, #tpu.memory_space<vmem>>, vector<1x1x384xf32>
    %157 = vector.shape_cast %156 : vector<1x1x384xf32> to vector<1x384xf32>
    %158 = vector.broadcast %157 : vector<1x384xf32> to vector<8x384xf32>
    %159 = arith.addf %155, %158 : vector<8x384xf32>
    %c2_122 = arith.constant 2 : index
    %c0_123 = arith.constant 0 : index
    %c0_124 = arith.constant 0 : index
    %160 = vector.load %arg5[%c2_122, %c0_123, %c0_124] : memref<5x8x1xf32, #tpu.memory_space<vmem>>, vector<1x8x1xf32>
    %161 = vector.shape_cast %160 : vector<1x8x1xf32> to vector<8x1xf32>
    %cst_125 = arith.constant 0.000000e+00 : f32
    %162 = vector.broadcast %cst_125 : f32 to vector<8x384xf32>
    %163 = arith.cmpf oge, %159, %162 : vector<8x384xf32>
    %164 = vector.broadcast %161 : vector<8x1xf32> to vector<8x384xf32>
    %165 = arith.mulf %164, %159 : vector<8x384xf32>
    %166 = arith.select %163, %159, %165 : vector<8x384xi1>, vector<8x384xf32>
    %c24_126 = arith.constant 24 : index
    %c512_127 = arith.constant 512 : index
    %167 = vector.load %arg9[%c24_126, %c512_127] : memref<40x1024xf32, #tpu.memory_space<vmem>>, vector<8x384xf32>
    tpu.vector_store %arg9[%c24_126, %c512_127], %166 {strides = array<i32>} : memref<40x1024xf32, #tpu.memory_space<vmem>>, vector<8x384xf32>,
    %c0_128 = arith.constant 0 : index
    %c319 = arith.constant 319 : index
    %168 = vector.load %arg9[%c0_128, %c319] : memref<40x1024xf32, #tpu.memory_space<vmem>>, vector<32x384xf32>
    %c0_129 = arith.constant 0 : index
    %c0_130 = arith.constant 0 : index
    %169 = vector.load %arg10[%c0_129, %c0_130] : memref<240x384xf32, #tpu.memory_space<vmem>>, vector<32x384xf32>
    tpu.vector_store %arg10[%c0_129, %c0_130], %168 {strides = array<i32>} : memref<240x384xf32, #tpu.memory_space<vmem>>, vector<32x384xf32>,
    %c0_131 = arith.constant 0 : index
    %c320 = arith.constant 320 : index
    %170 = vector.load %arg9[%c0_131, %c320] : memref<40x1024xf32, #tpu.memory_space<vmem>>, vector<32x384xf32>
    %c32_132 = arith.constant 32 : index
    %c0_133 = arith.constant 0 : index
    %171 = vector.load %arg10[%c32_132, %c0_133] : memref<240x384xf32, #tpu.memory_space<vmem>>, vector<32x384xf32>
    tpu.vector_store %arg10[%c32_132, %c0_133], %170 {strides = array<i32>} : memref<240x384xf32, #tpu.memory_space<vmem>>, vector<32x384xf32>,
    %c0_134 = arith.constant 0 : index
    %c321 = arith.constant 321 : index
    %172 = vector.load %arg9[%c0_134, %c321] : memref<40x1024xf32, #tpu.memory_space<vmem>>, vector<32x384xf32>
    %c64_135 = arith.constant 64 : index
    %c0_136 = arith.constant 0 : index
    %173 = vector.load %arg10[%c64_135, %c0_136] : memref<240x384xf32, #tpu.memory_space<vmem>>, vector<32x384xf32>
    tpu.vector_store %arg10[%c64_135, %c0_136], %172 {strides = array<i32>} : memref<240x384xf32, #tpu.memory_space<vmem>>, vector<32x384xf32>,
    %c0_137 = arith.constant 0 : index
    %c511_138 = arith.constant 511 : index
    %174 = vector.load %arg9[%c0_137, %c511_138] : memref<40x1024xf32, #tpu.memory_space<vmem>>, vector<32x384xf32>
    %c96_139 = arith.constant 96 : index
    %c0_140 = arith.constant 0 : index
    %175 = vector.load %arg10[%c96_139, %c0_140] : memref<240x384xf32, #tpu.memory_space<vmem>>, vector<32x384xf32>
    tpu.vector_store %arg10[%c96_139, %c0_140], %174 {strides = array<i32>} : memref<240x384xf32, #tpu.memory_space<vmem>>, vector<32x384xf32>,
    %c0_141 = arith.constant 0 : index
    %c512_142 = arith.constant 512 : index
    %176 = vector.load %arg9[%c0_141, %c512_142] : memref<40x1024xf32, #tpu.memory_space<vmem>>, vector<32x384xf32>
    %c128 = arith.constant 128 : index
    %c0_143 = arith.constant 0 : index
    %177 = vector.load %arg10[%c128, %c0_143] : memref<240x384xf32, #tpu.memory_space<vmem>>, vector<32x384xf32>
    tpu.vector_store %arg10[%c128, %c0_143], %176 {strides = array<i32>} : memref<240x384xf32, #tpu.memory_space<vmem>>, vector<32x384xf32>,
    %c0_144 = arith.constant 0 : index
    %c513_145 = arith.constant 513 : index
    %178 = vector.load %arg9[%c0_144, %c513_145] : memref<40x1024xf32, #tpu.memory_space<vmem>>, vector<32x384xf32>
    %c160 = arith.constant 160 : index
    %c0_146 = arith.constant 0 : index
    %179 = vector.load %arg10[%c160, %c0_146] : memref<240x384xf32, #tpu.memory_space<vmem>>, vector<32x384xf32>
    tpu.vector_store %arg10[%c160, %c0_146], %178 {strides = array<i32>} : memref<240x384xf32, #tpu.memory_space<vmem>>, vector<32x384xf32>,
    %c3 = arith.constant 3 : index
    %c0_147 = arith.constant 0 : index
    %c0_148 = arith.constant 0 : index
    %180 = vector.load %arg2[%c3, %c0_147, %c0_148] : memref<5x8x240xf32, #tpu.memory_space<vmem>>, vector<1x8x240xf32>
    %181 = vector.shape_cast %180 : vector<1x8x240xf32> to vector<8x240xf32>
    %182 = vector.extract_strided_slice %181 {offsets = [0, 0], sizes = [8, 192], strides = [1, 1]} : vector<8x240xf32> to vector<8x192xf32>
    %c0_149 = arith.constant 0 : index
    %c0_150 = arith.constant 0 : index
    %183 = vector.load %arg10[%c0_149, %c0_150] : memref<240x384xf32, #tpu.memory_space<vmem>>, vector<192x384xf32>
    %cst_151 = arith.constant dense<0.000000e+00> : vector<8x384xf32>
    %184 = tpu.matmul %182, %183, %cst_151 {dimension_numbers = #tpu.dot_dimension_numbers<[1], [0], [0], [1], [0, 0, 1, 1], [], []>} : vector<8x192xf32>, vector<192x384xf32>, vector<8x384xf32> -> vector<8x384xf32>
    %185 = arith.mulf %184, %184 : vector<8x384xf32>
    %186 = tpu.concatenate %184, %185 in 0 : vector<8x384xf32>, vector<8x384xf32> -> vector<16x384xf32>
    %cst_152 = arith.constant dense<0.000000e+00> : vector<16x16xf32>
    %187 = tpu.matmul %186, %7, %cst_152 {dimension_numbers = #tpu.dot_dimension_numbers<[1], [0], [0], [1], [0, 0, 1, 1], [], []>} : vector<16x384xf32>, vector<384x16xf32>, vector<16x16xf32> -> vector<16x16xf32>
    %cst_153 = arith.constant 6.250000e-02 : f32
    %188 = vector.broadcast %cst_153 : f32 to vector<16x16xf32>
    %189 = arith.mulf %187, %188 : vector<16x16xf32>
    %190 = vector.extract_strided_slice %189 {offsets = [0, 0], sizes = [8, 16], strides = [1, 1]} : vector<16x16xf32> to vector<8x16xf32>
    %191 = vector.extract_strided_slice %189 {offsets = [8, 0], sizes = [8, 16], strides = [1, 1]} : vector<16x16xf32> to vector<8x16xf32>
    %192 = arith.mulf %190, %190 : vector<8x16xf32>
    %193 = arith.subf %191, %192 : vector<8x16xf32>
    %cst_154 = arith.constant 0.000000e+00 : f32
    %194 = vector.broadcast %cst_154 : f32 to vector<8x16xf32>
    %195 = arith.maximumf %193, %194 : vector<8x16xf32>
    %cst_155 = arith.constant 9.99999974E-6 : f32
    %196 = vector.broadcast %cst_155 : f32 to vector<8x16xf32>
    %197 = arith.addf %195, %196 : vector<8x16xf32>
    %198 = math.rsqrt %197 : vector<8x16xf32>
    %199 = tpu.concatenate %190, %198 in 0 : vector<8x16xf32>, vector<8x16xf32> -> vector<16x16xf32>
    %cst_156 = arith.constant dense<0.000000e+00> : vector<16x384xf32>
    %200 = tpu.matmul %199, %8, %cst_156 {dimension_numbers = #tpu.dot_dimension_numbers<[1], [0], [0], [1], [0, 0, 1, 1], [], []>} : vector<16x16xf32>, vector<16x384xf32>, vector<16x384xf32> -> vector<16x384xf32>
    %201 = vector.extract_strided_slice %200 {offsets = [0, 0], sizes = [8, 384], strides = [1, 1]} : vector<16x384xf32> to vector<8x384xf32>
    %202 = arith.subf %184, %201 : vector<8x384xf32>
    %203 = vector.extract_strided_slice %200 {offsets = [8, 0], sizes = [8, 384], strides = [1, 1]} : vector<16x384xf32> to vector<8x384xf32>
    %204 = arith.mulf %202, %203 : vector<8x384xf32>
    %c3_157 = arith.constant 3 : index
    %c0_158 = arith.constant 0 : index
    %c0_159 = arith.constant 0 : index
    %205 = vector.load %arg3[%c3_157, %c0_158, %c0_159] : memref<5x1x384xf32, #tpu.memory_space<vmem>>, vector<1x1x384xf32>
    %206 = vector.shape_cast %205 : vector<1x1x384xf32> to vector<1x384xf32>
    %207 = vector.broadcast %206 : vector<1x384xf32> to vector<8x384xf32>
    %208 = arith.mulf %204, %207 : vector<8x384xf32>
    %c3_160 = arith.constant 3 : index
    %c0_161 = arith.constant 0 : index
    %c0_162 = arith.constant 0 : index
    %209 = vector.load %arg4[%c3_160, %c0_161, %c0_162] : memref<5x1x384xf32, #tpu.memory_space<vmem>>, vector<1x1x384xf32>
    %210 = vector.shape_cast %209 : vector<1x1x384xf32> to vector<1x384xf32>
    %211 = vector.broadcast %210 : vector<1x384xf32> to vector<8x384xf32>
    %212 = arith.addf %208, %211 : vector<8x384xf32>
    %c3_163 = arith.constant 3 : index
    %c0_164 = arith.constant 0 : index
    %c0_165 = arith.constant 0 : index
    %213 = vector.load %arg5[%c3_163, %c0_164, %c0_165] : memref<5x8x1xf32, #tpu.memory_space<vmem>>, vector<1x8x1xf32>
    %214 = vector.shape_cast %213 : vector<1x8x1xf32> to vector<8x1xf32>
    %cst_166 = arith.constant 0.000000e+00 : f32
    %215 = vector.broadcast %cst_166 : f32 to vector<8x384xf32>
    %216 = arith.cmpf oge, %212, %215 : vector<8x384xf32>
    %217 = vector.broadcast %214 : vector<8x1xf32> to vector<8x384xf32>
    %218 = arith.mulf %217, %212 : vector<8x384xf32>
    %219 = arith.select %216, %212, %218 : vector<8x384xi1>, vector<8x384xf32>
    %c32_167 = arith.constant 32 : index
    %c512_168 = arith.constant 512 : index
    %220 = vector.load %arg9[%c32_167, %c512_168] : memref<40x1024xf32, #tpu.memory_space<vmem>>, vector<8x384xf32>
    tpu.vector_store %arg9[%c32_167, %c512_168], %219 {strides = array<i32>} : memref<40x1024xf32, #tpu.memory_space<vmem>>, vector<8x384xf32>,
    %c0_169 = arith.constant 0 : index
    %c127 = arith.constant 127 : index
    %221 = vector.load %arg9[%c0_169, %c127] : memref<40x1024xf32, #tpu.memory_space<vmem>>, vector<40x384xf32>
    %c0_170 = arith.constant 0 : index
    %c0_171 = arith.constant 0 : index
    %222 = vector.load %arg10[%c0_170, %c0_171] : memref<240x384xf32, #tpu.memory_space<vmem>>, vector<40x384xf32>
    tpu.vector_store %arg10[%c0_170, %c0_171], %221 {strides = array<i32>} : memref<240x384xf32, #tpu.memory_space<vmem>>, vector<40x384xf32>,
    %c0_172 = arith.constant 0 : index
    %c128_173 = arith.constant 128 : index
    %223 = vector.load %arg9[%c0_172, %c128_173] : memref<40x1024xf32, #tpu.memory_space<vmem>>, vector<40x384xf32>
    %c40_174 = arith.constant 40 : index
    %c0_175 = arith.constant 0 : index
    %224 = vector.load %arg10[%c40_174, %c0_175] : memref<240x384xf32, #tpu.memory_space<vmem>>, vector<40x384xf32>
    tpu.vector_store %arg10[%c40_174, %c0_175], %223 {strides = array<i32>} : memref<240x384xf32, #tpu.memory_space<vmem>>, vector<40x384xf32>,
    %c0_176 = arith.constant 0 : index
    %c129 = arith.constant 129 : index
    %225 = vector.load %arg9[%c0_176, %c129] : memref<40x1024xf32, #tpu.memory_space<vmem>>, vector<40x384xf32>
    %c80_177 = arith.constant 80 : index
    %c0_178 = arith.constant 0 : index
    %226 = vector.load %arg10[%c80_177, %c0_178] : memref<240x384xf32, #tpu.memory_space<vmem>>, vector<40x384xf32>
    tpu.vector_store %arg10[%c80_177, %c0_178], %225 {strides = array<i32>} : memref<240x384xf32, #tpu.memory_space<vmem>>, vector<40x384xf32>,
    %c0_179 = arith.constant 0 : index
    %c511_180 = arith.constant 511 : index
    %227 = vector.load %arg9[%c0_179, %c511_180] : memref<40x1024xf32, #tpu.memory_space<vmem>>, vector<40x384xf32>
    %c120_181 = arith.constant 120 : index
    %c0_182 = arith.constant 0 : index
    %228 = vector.load %arg10[%c120_181, %c0_182] : memref<240x384xf32, #tpu.memory_space<vmem>>, vector<40x384xf32>
    tpu.vector_store %arg10[%c120_181, %c0_182], %227 {strides = array<i32>} : memref<240x384xf32, #tpu.memory_space<vmem>>, vector<40x384xf32>,
    %c0_183 = arith.constant 0 : index
    %c512_184 = arith.constant 512 : index
    %229 = vector.load %arg9[%c0_183, %c512_184] : memref<40x1024xf32, #tpu.memory_space<vmem>>, vector<40x384xf32>
    %c160_185 = arith.constant 160 : index
    %c0_186 = arith.constant 0 : index
    %230 = vector.load %arg10[%c160_185, %c0_186] : memref<240x384xf32, #tpu.memory_space<vmem>>, vector<40x384xf32>
    tpu.vector_store %arg10[%c160_185, %c0_186], %229 {strides = array<i32>} : memref<240x384xf32, #tpu.memory_space<vmem>>, vector<40x384xf32>,
    %c0_187 = arith.constant 0 : index
    %c513_188 = arith.constant 513 : index
    %231 = vector.load %arg9[%c0_187, %c513_188] : memref<40x1024xf32, #tpu.memory_space<vmem>>, vector<40x384xf32>
    %c200 = arith.constant 200 : index
    %c0_189 = arith.constant 0 : index
    %232 = vector.load %arg10[%c200, %c0_189] : memref<240x384xf32, #tpu.memory_space<vmem>>, vector<40x384xf32>
    tpu.vector_store %arg10[%c200, %c0_189], %231 {strides = array<i32>} : memref<240x384xf32, #tpu.memory_space<vmem>>, vector<40x384xf32>,
    %c4 = arith.constant 4 : index
    %c0_190 = arith.constant 0 : index
    %c0_191 = arith.constant 0 : index
    %233 = vector.load %arg2[%c4, %c0_190, %c0_191] : memref<5x8x240xf32, #tpu.memory_space<vmem>>, vector<1x8x240xf32>
    %234 = vector.shape_cast %233 : vector<1x8x240xf32> to vector<8x240xf32>
    %c0_192 = arith.constant 0 : index
    %c0_193 = arith.constant 0 : index
    %235 = vector.load %arg10[%c0_192, %c0_193] : memref<240x384xf32, #tpu.memory_space<vmem>>, vector<240x384xf32>
    %cst_194 = arith.constant dense<0.000000e+00> : vector<8x384xf32>
    %236 = tpu.matmul %234, %235, %cst_194 {dimension_numbers = #tpu.dot_dimension_numbers<[1], [0], [0], [1], [0, 0, 1, 1], [], []>} : vector<8x240xf32>, vector<240x384xf32>, vector<8x384xf32> -> vector<8x384xf32>
    %237 = arith.mulf %236, %236 : vector<8x384xf32>
    %238 = tpu.concatenate %236, %237 in 0 : vector<8x384xf32>, vector<8x384xf32> -> vector<16x384xf32>
    %cst_195 = arith.constant dense<0.000000e+00> : vector<16x16xf32>
    %239 = tpu.matmul %238, %7, %cst_195 {dimension_numbers = #tpu.dot_dimension_numbers<[1], [0], [0], [1], [0, 0, 1, 1], [], []>} : vector<16x384xf32>, vector<384x16xf32>, vector<16x16xf32> -> vector<16x16xf32>
    %cst_196 = arith.constant 6.250000e-02 : f32
    %240 = vector.broadcast %cst_196 : f32 to vector<16x16xf32>
    %241 = arith.mulf %239, %240 : vector<16x16xf32>
    %242 = vector.extract_strided_slice %241 {offsets = [0, 0], sizes = [8, 16], strides = [1, 1]} : vector<16x16xf32> to vector<8x16xf32>
    %243 = vector.extract_strided_slice %241 {offsets = [8, 0], sizes = [8, 16], strides = [1, 1]} : vector<16x16xf32> to vector<8x16xf32>
    %244 = arith.mulf %242, %242 : vector<8x16xf32>
    %245 = arith.subf %243, %244 : vector<8x16xf32>
    %cst_197 = arith.constant 0.000000e+00 : f32
    %246 = vector.broadcast %cst_197 : f32 to vector<8x16xf32>
    %247 = arith.maximumf %245, %246 : vector<8x16xf32>
    %cst_198 = arith.constant 9.99999974E-6 : f32
    %248 = vector.broadcast %cst_198 : f32 to vector<8x16xf32>
    %249 = arith.addf %247, %248 : vector<8x16xf32>
    %250 = math.rsqrt %249 : vector<8x16xf32>
    %251 = tpu.concatenate %242, %250 in 0 : vector<8x16xf32>, vector<8x16xf32> -> vector<16x16xf32>
    %cst_199 = arith.constant dense<0.000000e+00> : vector<16x384xf32>
    %252 = tpu.matmul %251, %8, %cst_199 {dimension_numbers = #tpu.dot_dimension_numbers<[1], [0], [0], [1], [0, 0, 1, 1], [], []>} : vector<16x16xf32>, vector<16x384xf32>, vector<16x384xf32> -> vector<16x384xf32>
    %253 = vector.extract_strided_slice %252 {offsets = [0, 0], sizes = [8, 384], strides = [1, 1]} : vector<16x384xf32> to vector<8x384xf32>
    %254 = arith.subf %236, %253 : vector<8x384xf32>
    %255 = vector.extract_strided_slice %252 {offsets = [8, 0], sizes = [8, 384], strides = [1, 1]} : vector<16x384xf32> to vector<8x384xf32>
    %256 = arith.mulf %254, %255 : vector<8x384xf32>
    %c4_200 = arith.constant 4 : index
    %c0_201 = arith.constant 0 : index
    %c0_202 = arith.constant 0 : index
    %257 = vector.load %arg3[%c4_200, %c0_201, %c0_202] : memref<5x1x384xf32, #tpu.memory_space<vmem>>, vector<1x1x384xf32>
    %258 = vector.shape_cast %257 : vector<1x1x384xf32> to vector<1x384xf32>
    %259 = vector.broadcast %258 : vector<1x384xf32> to vector<8x384xf32>
    %260 = arith.mulf %256, %259 : vector<8x384xf32>
    %c4_203 = arith.constant 4 : index
    %c0_204 = arith.constant 0 : index
    %c0_205 = arith.constant 0 : index
    %261 = vector.load %arg4[%c4_203, %c0_204, %c0_205] : memref<5x1x384xf32, #tpu.memory_space<vmem>>, vector<1x1x384xf32>
    %262 = vector.shape_cast %261 : vector<1x1x384xf32> to vector<1x384xf32>
    %263 = vector.broadcast %262 : vector<1x384xf32> to vector<8x384xf32>
    %264 = arith.addf %260, %263 : vector<8x384xf32>
    %c4_206 = arith.constant 4 : index
    %c0_207 = arith.constant 0 : index
    %c0_208 = arith.constant 0 : index
    %265 = vector.load %arg5[%c4_206, %c0_207, %c0_208] : memref<5x8x1xf32, #tpu.memory_space<vmem>>, vector<1x8x1xf32>
    %266 = vector.shape_cast %265 : vector<1x8x1xf32> to vector<8x1xf32>
    %cst_209 = arith.constant 0.000000e+00 : f32
    %267 = vector.broadcast %cst_209 : f32 to vector<8x384xf32>
    %268 = arith.cmpf oge, %264, %267 : vector<8x384xf32>
    %269 = vector.broadcast %266 : vector<8x1xf32> to vector<8x384xf32>
    %270 = arith.mulf %269, %264 : vector<8x384xf32>
    %271 = arith.select %268, %264, %270 : vector<8x384xi1>, vector<8x384xf32>
    %c0_210 = arith.constant 0 : index
    %c0_211 = arith.constant 0 : index
    %c0_212 = arith.constant 0 : index
    %272 = vector.load %arg8[%c0_210, %c0_211, %c0_212] : memref<1x8x384xf32, #tpu.memory_space<vmem>>, vector<1x8x384xf32>
    %273 = vector.shape_cast %272 : vector<1x8x384xf32> to vector<8x384xf32>
    %274 = vector.shape_cast %271 : vector<8x384xf32> to vector<1x8x384xf32>
    tpu.vector_store %arg8[%c0_210, %c0_211, %c0_212], %274 {strides = array<i32>} : memref<1x8x384xf32, #tpu.memory_space<vmem>>, vector<1x8x384xf32>,
    return
  }
  func.func @transform_0(%arg0: i32) -> (i32, i32, i32) {
    %c0_i32 = arith.constant 0 : i32
    %c0_i32_0 = arith.constant 0 : i32
    %c0_i32_1 = arith.constant 0 : i32
    return %arg0, %c0_i32, %c0_i32_0 : i32, i32, i32
  }
  func.func @transform_1(%arg0: i32) -> (i32, i32, i32) {
    %c0_i32 = arith.constant 0 : i32
    %c0_i32_0 = arith.constant 0 : i32
    %c0_i32_1 = arith.constant 0 : i32
    %c0_i32_2 = arith.constant 0 : i32
    return %c0_i32, %c0_i32_0, %c0_i32_1 : i32, i32, i32
  }
  func.func @transform_2(%arg0: i32) -> (i32, i32, i32) {
    %c0_i32 = arith.constant 0 : i32
    %c0_i32_0 = arith.constant 0 : i32
    %c0_i32_1 = arith.constant 0 : i32
    %c0_i32_2 = arith.constant 0 : i32
    return %c0_i32, %c0_i32_0, %c0_i32_1 : i32, i32, i32
  }
  func.func @transform_3(%arg0: i32) -> (i32, i32, i32) {
    %c0_i32 = arith.constant 0 : i32
    %c0_i32_0 = arith.constant 0 : i32
    %c0_i32_1 = arith.constant 0 : i32
    %c0_i32_2 = arith.constant 0 : i32
    return %c0_i32, %c0_i32_0, %c0_i32_1 : i32, i32, i32
  }
  func.func @transform_4(%arg0: i32) -> (i32, i32, i32) {
    %c0_i32 = arith.constant 0 : i32
    %c0_i32_0 = arith.constant 0 : i32
    %c0_i32_1 = arith.constant 0 : i32
    %c0_i32_2 = arith.constant 0 : i32
    return %c0_i32, %c0_i32_0, %c0_i32_1 : i32, i32, i32
  }
  func.func @transform_5(%arg0: i32) -> (i32, i32) {
    %c0_i32 = arith.constant 0 : i32
    %c0_i32_0 = arith.constant 0 : i32
    %c0_i32_1 = arith.constant 0 : i32
    return %c0_i32, %c0_i32_0 : i32, i32
  }
  func.func @transform_6(%arg0: i32) -> (i32, i32) {
    %c0_i32 = arith.constant 0 : i32
    %c0_i32_0 = arith.constant 0 : i32
    %c0_i32_1 = arith.constant 0 : i32
    return %c0_i32, %c0_i32_0 : i32, i32
  }
  func.func @transform_7(%arg0: i32) -> (i32, i32, i32) {
    %c0_i32 = arith.constant 0 : i32
    %c0_i32_0 = arith.constant 0 : i32
    %c0_i32_1 = arith.constant 0 : i32
    return %arg0, %c0_i32, %c0_i32_0 : i32, i32, i32
  }
}

</mosaic_0001>

<llo_original>
// kernel: dense_block_forward.1
$region0: #{dense_block_forward.1}
  #allocation0 [shape = 'u32[]', space=smem, size = 0x4, offset = 0x4, fixed_abs, tag = 'smem constant byte address 0x4 - core index']
  #allocation1 [shape = 'u32[72,128]{1,0:T(1,128)}', space=vmem, size = 0x9000, scoped, tag = 'internal scratch']
  #allocation2 [shape = 'f32[40,1024]{1,0:T(8,128)}', space=vmem, size = 0x28000, scoped, tag = 'scratch operand']
  #allocation3 [shape = 'f32[240,384]{1,0:T(8,128)}', space=vmem, size = 0x5a000, scoped, tag = 'scratch operand']
  %s0 = inlined_call_operand.vmem [shape: f32[2,8,384], index: 0, kind: input, shape index: {}]
  %s1 = inlined_call_operand.vmem [shape: f32[5,8,240], index: 1, kind: input, shape index: {}]
  %s2 = inlined_call_operand.vmem [shape: f32[5,1,384], index: 2, kind: input, shape index: {}]
  %s3 = inlined_call_operand.vmem [shape: f32[5,1,384], index: 3, kind: input, shape index: {}]
  %s4 = inlined_call_operand.vmem [shape: f32[5,8,1], index: 4, kind: input, shape index: {}]
  %s5 = inlined_call_operand.vmem [shape: f32[384,16], index: 5, kind: input, shape index: {}]
  %s6 = inlined_call_operand.vmem [shape: f32[16,384], index: 6, kind: input, shape index: {}]
  %s7 = inlined_call_operand.vmem [shape: f32[2,8,384], index: 7, kind: output, shape index: {}]
  %s8 = sld [smem:[#allocation0]]
  $region61: #{dense_block_forward.1} parent=0
    _
  %s10 = ssub.s32 1, %s8
  %s11 = scalar_select 0, %s10, %s8
  loop: start=0, step=1, limit=4
  $region2: #{dense_block_forward.1} parent=0 // loop_pre_header
    _
  $region3: #{dense_block_forward.1} parent=0 // loop_header
    %s13 = sphi 0, %s17
    %p14 = scmp.ge.s32.totalorder %s13, 4
    %s23 = sphi 0, %s25
    %s26 = sphi 0, %s23
    %s27 = sphi 0, %s26
    %s43 = sphi 0, %s27
    %s47 = sphi 0, %s47
    %s49 = sphi 0, %s47
    %s50 = sphi 0, %s49
    %s64 = sphi 0, %s50
    %s68 = sphi 0, %s68
    %s70 = sphi 0, %s68
    %s71 = sphi 0, %s70
    %s85 = sphi 0, %s71
    %s89 = sphi 0, %s89
    %s91 = sphi 0, %s89
    %s92 = sphi 0, %s91
    %s106 = sphi 0, %s92
    %s110 = sphi 0, %s110
    %s112 = sphi 0, %s110
    %s113 = sphi 0, %s112
    %s127 = sphi 0, %s113
    %s131 = sphi 0, %s131
    %s133 = sphi 0, %s131
    %s134 = sphi 0, %s133
    %s148 = sphi 0, %s134
    %s152 = sphi 0, %s152
    %s154 = sphi 0, %s152
    %s155 = sphi 0, %s154
    %s169 = sphi 0, %s155
    %s175 = sphi 0, %s177
    %s178 = sphi 0, %s175
    %s179 = sphi 0, %s178
    %s195 = sphi 0, %s179
  $region4: #{dense_block_forward.1} parent=0 // loop_header_branch
    %16 = sbr.rel (%p14) target = $region8
  $region5: #{dense_block_forward.1} parent=0 // loop_body
    %s18 = ssub.s32 %s13, 1
    %s19 = ssub.s32 %s13, 2
    %s20 = sadd.s32 %s13, 1
    %s21 = ssub.s32 %s13, %s20
    %p22 = scmp.eq.s32.totalorder %s21, 0
    %s24 = sadd.s32 %s23, 1
    %s25 = scalar_select %p22, %s23, %s24
    %p28 = pneg %p22
    %p29 = scmp.eq.s32.totalorder %s13, 1
    %p30 = por %p28, %p29
    %p31 = scmp.ne.s32.totalorder %s23, %s26
    %p32 = scmp.eq.s32.totalorder %s13, 0
    %p33 = por %p31, %p32
    %p34 = scmp.ne.s32.totalorder %s23, %s26
    %p35 = scmp.eq.s32.totalorder %s18, 1
    %p36 = por %p34, %p35
    %p37 = scmp.ne.s32.totalorder %s26, %s27
    %p38 = scmp.eq.s32.totalorder %s18, 0
    %p39 = por %p37, %p38
    %p40 = scmp.ne.s32.totalorder %s26, %s27
    %p41 = scmp.eq.s32.totalorder %s19, 1
    %p42 = por %p40, %p41
    %p44 = scmp.ne.s32.totalorder %s27, %s43
    %p45 = scmp.eq.s32.totalorder %s19, 0
    %p46 = por %p44, %p45
    %s48 = sadd.s32 %s47, 1
    %p51 = scmp.eq.s32.totalorder %s13, 1
    %p52 = scmp.ne.s32.totalorder %s47, %s49
    %p53 = scmp.eq.s32.totalorder %s13, 0
    %p54 = por %p52, %p53
    %p55 = scmp.ne.s32.totalorder %s47, %s49
    %p56 = scmp.eq.s32.totalorder %s18, 1
    %p57 = por %p55, %p56
    %p58 = scmp.ne.s32.totalorder %s49, %s50
    %p59 = scmp.eq.s32.totalorder %s18, 0
    %p60 = por %p58, %p59
    %p61 = scmp.ne.s32.totalorder %s49, %s50
    %p62 = scmp.eq.s32.totalorder %s19, 1
    %p63 = por %p61, %p62
    %p65 = scmp.ne.s32.totalorder %s50, %s64
    %p66 = scmp.eq.s32.totalorder %s19, 0
    %p67 = por %p65, %p66
    %s69 = sadd.s32 %s68, 1
    %p72 = scmp.eq.s32.totalorder %s13, 1
    %p73 = scmp.ne.s32.totalorder %s68, %s70
    %p74 = scmp.eq.s32.totalorder %s13, 0
    %p75 = por %p73, %p74
    %p76 = scmp.ne.s32.totalorder %s68, %s70
    %p77 = scmp.eq.s32.totalorder %s18, 1
    %p78 = por %p76, %p77
    %p79 = scmp.ne.s32.totalorder %s70, %s71
    %p80 = scmp.eq.s32.totalorder %s18, 0
    %p81 = por %p79, %p80
    %p82 = scmp.ne.s32.totalorder %s70, %s71
    %p83 = scmp.eq.s32.totalorder %s19, 1
    %p84 = por %p82, %p83
    %p86 = scmp.ne.s32.totalorder %s71, %s85
    %p87 = scmp.eq.s32.totalorder %s19, 0
    %p88 = por %p86, %p87
    %s90 = sadd.s32 %s89, 1
    %p93 = scmp.eq.s32.totalorder %s13, 1
    %p94 = scmp.ne.s32.totalorder %s89, %s91
    %p95 = scmp.eq.s32.totalorder %s13, 0
    %p96 = por %p94, %p95
    %p97 = scmp.ne.s32.totalorder %s89, %s91
    %p98 = scmp.eq.s32.totalorder %s18, 1
    %p99 = por %p97, %p98
    %p100 = scmp.ne.s32.totalorder %s91, %s92
    %p101 = scmp.eq.s32.totalorder %s18, 0
    %p102 = por %p100, %p101
    %p103 = scmp.ne.s32.totalorder %s91, %s92
    %p104 = scmp.eq.s32.totalorder %s19, 1
    %p105 = por %p103, %p104
    %p107 = scmp.ne.s32.totalorder %s92, %s106
    %p108 = scmp.eq.s32.totalorder %s19, 0
    %p109 = por %p107, %p108
    %s111 = sadd.s32 %s110, 1
    %p114 = scmp.eq.s32.totalorder %s13, 1
    %p115 = scmp.ne.s32.totalorder %s110, %s112
    %p116 = scmp.eq.s32.totalorder %s13, 0
    %p117 = por %p115, %p116
    %p118 = scmp.ne.s32.totalorder %s110, %s112
    %p119 = scmp.eq.s32.totalorder %s18, 1
    %p120 = por %p118, %p119
    %p121 = scmp.ne.s32.totalorder %s112, %s113
    %p122 = scmp.eq.s32.totalorder %s18, 0
    %p123 = por %p121, %p122
    %p124 = scmp.ne.s32.totalorder %s112, %s113
    %p125 = scmp.eq.s32.totalorder %s19, 1
    %p126 = por %p124, %p125
    %p128 = scmp.ne.s32.totalorder %s113, %s127
    %p129 = scmp.eq.s32.totalorder %s19, 0
    %p130 = por %p128, %p129
    %s132 = sadd.s32 %s131, 1
    %p135 = scmp.eq.s32.totalorder %s13, 1
    %p136 = scmp.ne.s32.totalorder %s131, %s133
    %p137 = scmp.eq.s32.totalorder %s13, 0
    %p138 = por %p136, %p137
    %p139 = scmp.ne.s32.totalorder %s131, %s133
    %p140 = scmp.eq.s32.totalorder %s18, 1
    %p141 = por %p139, %p140
    %p142 = scmp.ne.s32.totalorder %s133, %s134
    %p143 = scmp.eq.s32.totalorder %s18, 0
    %p144 = por %p142, %p143
    %p145 = scmp.ne.s32.totalorder %s133, %s134
    %p146 = scmp.eq.s32.totalorder %s19, 1
    %p147 = por %p145, %p146
    %p149 = scmp.ne.s32.totalorder %s134, %s148
    %p150 = scmp.eq.s32.totalorder %s19, 0
    %p151 = por %p149, %p150
    %s153 = sadd.s32 %s152, 1
    %p156 = scmp.eq.s32.totalorder %s13, 1
    %p157 = scmp.ne.s32.totalorder %s152, %s154
    %p158 = scmp.eq.s32.totalorder %s13, 0
    %p159 = por %p157, %p158
    %p160 = scmp.ne.s32.totalorder %s152, %s154
    %p161 = scmp.eq.s32.totalorder %s18, 1
    %p162 = por %p160, %p161
    %p163 = scmp.ne.s32.totalorder %s154, %s155
    %p164 = scmp.eq.s32.totalorder %s18, 0
    %p165 = por %p163, %p164
    %p166 = scmp.ne.s32.totalorder %s154, %s155
    %p167 = scmp.eq.s32.totalorder %s19, 1
    %p168 = por %p166, %p167
    %p170 = scmp.ne.s32.totalorder %s155, %s169
    %p171 = scmp.eq.s32.totalorder %s19, 0
    %p172 = por %p170, %p171
    %s173 = ssub.s32 %s13, %s20
    %p174 = scmp.eq.s32.totalorder %s173, 0
    %s176 = sadd.s32 %s175, 1
    %s177 = scalar_select %p174, %s175, %s176
    %p180 = pneg %p174
    %p181 = scmp.eq.s32.totalorder %s13, 1
    %p182 = por %p180, %p181
    %p183 = scmp.ne.s32.totalorder %s175, %s178
    %p184 = scmp.eq.s32.totalorder %s13, 0
    %p185 = por %p183, %p184
    %p186 = scmp.ne.s32.totalorder %s175, %s178
    %p187 = scmp.eq.s32.totalorder %s18, 1
    %p188 = por %p186, %p187
    %p189 = scmp.ne.s32.totalorder %s178, %s179
    %p190 = scmp.eq.s32.totalorder %s18, 0
    %p191 = por %p189, %p190
    %p192 = scmp.ne.s32.totalorder %s178, %s179
    %p193 = scmp.eq.s32.totalorder %s19, 1
    %p194 = por %p192, %p193
    %p196 = scmp.ne.s32.totalorder %s179, %s195
    %p197 = scmp.eq.s32.totalorder %s19, 0
    %p198 = por %p196, %p197
    %p199 = scmp.le.s32.totalorder 1, %s13
    %p200 = scmp.lt.s32.totalorder %s13, 3
    %p201 = pnand %p199, %p200
    %p202 = pneg %p201
    // Predicated region
    $region9: #{dense_block_forward.1} parent=5 // pred_check
      _
    $region10: #{dense_block_forward.1} parent=5 // pred_check_branch
      %204 = sbr.rel (%p201) target = $region12
    $region11: #{dense_block_forward.1} parent=5 // pred_region
      %s205 = ssub.s32 %s13, 1
      // Predicated region
      $region13: #{dense_block_forward.1} parent=11 // pred_check
        %p206 = pneg %p60
      $region14: #{dense_block_forward.1} parent=11 // pred_check_branch
        %208 = sbr.rel (%p206) target = $region16
      $region15: #{dense_block_forward.1} parent=11 // pred_region
        _
      $region16: #{dense_block_forward.1} parent=11 // pred_fallthru
        _
      // Predicated region
      $region17: #{dense_block_forward.1} parent=11 // pred_check
        %p209 = pneg %p81
      $region18: #{dense_block_forward.1} parent=11 // pred_check_branch
        %211 = sbr.rel (%p209) target = $region20
      $region19: #{dense_block_forward.1} parent=11 // pred_region
        _
      $region20: #{dense_block_forward.1} parent=11 // pred_fallthru
        _
      // Predicated region
      $region21: #{dense_block_forward.1} parent=11 // pred_check
        %p212 = pneg %p102
      $region22: #{dense_block_forward.1} parent=11 // pred_check_branch
        %214 = sbr.rel (%p212) target = $region24
      $region23: #{dense_block_forward.1} parent=11 // pred_region
        _
      $region24: #{dense_block_forward.1} parent=11 // pred_fallthru
        _
      // Predicated region
      $region25: #{dense_block_forward.1} parent=11 // pred_check
        %p215 = pneg %p123
      $region26: #{dense_block_forward.1} parent=11 // pred_check_branch
        %217 = sbr.rel (%p215) target = $region28
      $region27: #{dense_block_forward.1} parent=11 // pred_region
        _
      $region28: #{dense_block_forward.1} parent=11 // pred_fallthru
        _
      // Predicated region
      $region29: #{dense_block_forward.1} parent=11 // pred_check
        %p218 = pneg %p144
      $region30: #{dense_block_forward.1} parent=11 // pred_check_branch
        %220 = sbr.rel (%p218) target = $region32
      $region31: #{dense_block_forward.1} parent=11 // pred_region
        _
      $region32: #{dense_block_forward.1} parent=11 // pred_fallthru
        _
      // Predicated region
      $region33: #{dense_block_forward.1} parent=11 // pred_check
        %p221 = pneg %p165
      $region34: #{dense_block_forward.1} parent=11 // pred_check_branch
        %223 = sbr.rel (%p221) target = $region36
      $region35: #{dense_block_forward.1} parent=11 // pred_region
        _
      $region36: #{dense_block_forward.1} parent=11 // pred_fallthru
        _
    $region12: #{dense_block_forward.1} parent=5 // pred_fallthru
      _
    %p224 = scmp.lt.s32.totalorder %s13, 2
    // Predicated region
    $region37: #{dense_block_forward.1} parent=5 // pred_check
      %p225 = pneg %p224
    $region38: #{dense_block_forward.1} parent=5 // pred_check_branch
      %227 = sbr.rel (%p225) target = $region40
    $region39: #{dense_block_forward.1} parent=5 // pred_region
      // Predicated region
      $region41: #{dense_block_forward.1} parent=39 // pred_check
        %p228 = pneg %p33
      $region42: #{dense_block_forward.1} parent=39 // pred_check_branch
        %230 = sbr.rel (%p228) target = $region44
      $region43: #{dense_block_forward.1} parent=39 // pred_region
        %p231 = scmp.lt.s32.totalorder %s13, 1
        %s232 = scalar_select %p231, %s13, 1
        %s233 = smul.addr %s232, 3
        %s234 = smul.addr %s233, 8
        %s235 = scalar_lea.vmem %s0, %s234
      $region44: #{dense_block_forward.1} parent=39 // pred_fallthru
        _
    $region40: #{dense_block_forward.1} parent=5 // pred_fallthru
      _
    %p236 = scmp.le.s32.totalorder 1, %s13
    %p237 = scmp.lt.s32.totalorder %s13, 3
    %p238 = pnand %p236, %p237
    %p239 = pneg %p238
    // Predicated region
    $region45: #{dense_block_forward.1} parent=5 // pred_check
      _
    $region46: #{dense_block_forward.1} parent=5 // pred_check_branch
      %241 = sbr.rel (%p238) target = $region48
    $region47: #{dense_block_forward.1} parent=5 // pred_region
      %s242 = ssub.s32 %s13, 1
      %p243 = scmp.lt.s32.totalorder %s18, 1
      %s244 = scalar_select %p243, %s18, 1
      %s245 = smul.addr %s244, 3
      %s246 = smul.addr %s245, 8
      %s247 = scalar_lea.vmem %s0, %s246
      %p248 = pneg %p39
      %p249 = pneg %p36
      %p250 = pneg %p60
      %p251 = pneg %p57
      %p252 = pneg %p81
      %p253 = pneg %p78
      %p254 = pneg %p102
      %p255 = pneg %p99
      %p256 = pneg %p123
      %p257 = pneg %p120
      %p258 = pneg %p144
      %p259 = pneg %p141
      %p260 = pneg %p165
      %p261 = pneg %p162
      %p262 = pneg %p191
      %p263 = pneg %p188
      %p264 = scmp.lt.s32.totalorder %s18, 1
      %s265 = scalar_select %p264, %s18, 1
      %s266 = smul.addr %s265, 3
      %s267 = smul.addr %s266, 8
      %s268 = scalar_lea.vmem %s7, %s267
      %p269 = scmp.lt.s32.totalorder %s18, 1
      %s270 = scalar_select %p269, %s18, 1
      %s271 = smul.addr %s270, 3
      %s272 = smul.addr %s271, 8
      %s273 = scalar_lea.vmem %s0, %s272
      %p274 = scmp.lt.s32.totalorder %s18, 1
      %s275 = scalar_select %p274, %s18, 1
      %s276 = smul.addr %s275, 3
      %s277 = smul.addr %s276, 8
      %s278 = scalar_lea.vmem %s7, %s277
      %279 = vst [vmem:[#allocation2] sm:$0xff] 0.0
      %280 = vst [vmem:[#allocation2 + $0x8] sm:$0xff] 0.0
      %281 = vst [vmem:[#allocation2 + $0x10] sm:$0xff] 0.0
      %282 = vst [vmem:[#allocation2 + $0x18] sm:$0xff] 0.0
      %283 = vst [vmem:[#allocation2 + $0x40] sm:$0xff] 0.0
      %284 = vst [vmem:[#allocation2 + $0x48] sm:$0xff] 0.0
      %285 = vst [vmem:[#allocation2 + $0x50] sm:$0xff] 0.0
      %286 = vst [vmem:[#allocation2 + $0x58] sm:$0xff] 0.0
      %287 = vst [vmem:[#allocation2 + $0x80] sm:$0xff] 0.0
      %288 = vst [vmem:[#allocation2 + $0x88] sm:$0xff] 0.0
      %289 = vst [vmem:[#allocation2 + $0x90] sm:$0xff] 0.0
      %290 = vst [vmem:[#allocation2 + $0x98] sm:$0xff] 0.0
      %291 = vst [vmem:[#allocation2 + $0xc0] sm:$0xff] 0.0
      %292 = vst [vmem:[#allocation2 + $0xc8] sm:$0xff] 0.0
      %293 = vst [vmem:[#allocation2 + $0xd0] sm:$0xff] 0.0
      %294 = vst [vmem:[#allocation2 + $0xd8] sm:$0xff] 0.0
      %295 = vst [vmem:[#allocation2 + $0x100] sm:$0xff] 0.0
      %296 = vst [vmem:[#allocation2 + $0x108] sm:$0xff] 0.0
      %297 = vst [vmem:[#allocation2 + $0x110] sm:$0xff] 0.0
      %298 = vst [vmem:[#allocation2 + $0x118] sm:$0xff] 0.0
      %299 = vst [vmem:[#allocation2 + $0x38] sm:$0xff] 0.0
      %300 = vst [vmem:[#allocation2 + $0x78] sm:$0xff] 0.0
      %301 = vst [vmem:[#allocation2 + $0xb8] sm:$0xff] 0.0
      %302 = vst [vmem:[#allocation2 + $0xf8] sm:$0xff] 0.0
      %303 = vst [vmem:[#allocation2 + $0x138] sm:$0xff] 0.0
      %v304 = vld [vmem:[%s273] sm:$0xff]
      %v305 = vld [vmem:[%s273 + $0x8] sm:$0xff]
      %v306 = vld [vmem:[%s273 + $0x10] sm:$0xff]
      %307 = vst [vmem:[#allocation2 + $0x20] sm:$0xff] %v304
      %308 = vst [vmem:[#allocation2 + $0x28] sm:$0xff] %v305
      %309 = vst [vmem:[#allocation2 + $0x30] sm:$0xff] %v306
      %v310 = vld [vmem:[%s5] sm:$0xff]
      %v311 = vld [vmem:[%s5 + $0x8] sm:$0xff]
      %v312 = vld [vmem:[%s5 + $0x10] sm:$0xff]
      %v313 = vld [vmem:[%s5 + $0x18] sm:$0xff]
      %v314 = vld [vmem:[%s5 + $0x20] sm:$0xff]
      %v315 = vld [vmem:[%s5 + $0x28] sm:$0xff]
      %v316 = vld [vmem:[%s5 + $0x30] sm:$0xff]
      %v317 = vld [vmem:[%s5 + $0x38] sm:$0xff]
      %v318 = vld [vmem:[%s5 + $0x40] sm:$0xff]
      %v319 = vld [vmem:[%s5 + $0x48] sm:$0xff]
      %v320 = vld [vmem:[%s5 + $0x50] sm:$0xff]
      %v321 = vld [vmem:[%s5 + $0x58] sm:$0xff]
      %v322 = vld [vmem:[%s5 + $0x60] sm:$0xff]
      %v323 = vld [vmem:[%s5 + $0x68] sm:$0xff]
      %v324 = vld [vmem:[%s5 + $0x70] sm:$0xff]
      %v325 = vld [vmem:[%s5 + $0x78] sm:$0xff]
      %v326 = vld [vmem:[%s5 + $0x80] sm:$0xff]
      %v327 = vld [vmem:[%s5 + $0x88] sm:$0xff]
      %v328 = vld [vmem:[%s5 + $0x90] sm:$0xff]
      %v329 = vld [vmem:[%s5 + $0x98] sm:$0xff]
      %v330 = vld [vmem:[%s5 + $0xa0] sm:$0xff]
      %v331 = vld [vmem:[%s5 + $0xa8] sm:$0xff]
      %v332 = vld [vmem:[%s5 + $0xb0] sm:$0xff]
      %v333 = vld [vmem:[%s5 + $0xb8] sm:$0xff]
      %v334 = vld [vmem:[%s5 + $0xc0] sm:$0xff]
      %v335 = vld [vmem:[%s5 + $0xc8] sm:$0xff]
      %v336 = vld [vmem:[%s5 + $0xd0] sm:$0xff]
      %v337 = vld [vmem:[%s5 + $0xd8] sm:$0xff]
      %v338 = vld [vmem:[%s5 + $0xe0] sm:$0xff]
      %v339 = vld [vmem:[%s5 + $0xe8] sm:$0xff]
      %v340 = vld [vmem:[%s5 + $0xf0] sm:$0xff]
      %v341 = vld [vmem:[%s5 + $0xf8] sm:$0xff]
      %v342 = vld [vmem:[%s5 + $0x100] sm:$0xff]
      %v343 = vld [vmem:[%s5 + $0x108] sm:$0xff]
      %v344 = vld [vmem:[%s5 + $0x110] sm:$0xff]
      %v345 = vld [vmem:[%s5 + $0x118] sm:$0xff]
      %v346 = vld [vmem:[%s5 + $0x120] sm:$0xff]
      %v347 = vld [vmem:[%s5 + $0x128] sm:$0xff]
      %v348 = vld [vmem:[%s5 + $0x130] sm:$0xff]
      %v349 = vld [vmem:[%s5 + $0x138] sm:$0xff]
      %v350 = vld [vmem:[%s5 + $0x140] sm:$0xff]
      %v351 = vld [vmem:[%s5 + $0x148] sm:$0xff]
      %v352 = vld [vmem:[%s5 + $0x150] sm:$0xff]
      %v353 = vld [vmem:[%s5 + $0x158] sm:$0xff]
      %v354 = vld [vmem:[%s5 + $0x160] sm:$0xff]
      %v355 = vld [vmem:[%s5 + $0x168] sm:$0xff]
      %v356 = vld [vmem:[%s5 + $0x170] sm:$0xff]
      %v357 = vld [vmem:[%s5 + $0x178] sm:$0xff]
      %v358 = vld [vmem:[%s6] sm:$0xff]
      %v359 = vld [vmem:[%s6 + $0x8] sm:$0xff]
      %v360 = vld [vmem:[%s6 + $0x10] sm:$0xff]
      %v361 = vld [vmem:[%s6 + $0x18] sm:$0xff]
      %v362 = vld [vmem:[%s6 + $0x20] sm:$0xff]
      %v363 = vld [vmem:[%s6 + $0x28] sm:$0xff]
      %v364 = vld [vmem:[#allocation2 + $0x18] sm:$0xff]
      %v365 = vld [vmem:[#allocation2 + $0x20] sm:$0xff]
      %v366 = vld [vmem:[#allocation2 + $0x28] sm:$0xff]
      %v367 = vld [vmem:[#allocation2 + $0x30] sm:$0xff]
      %372 = vrot.lane.b32.xlu0 %v364, 25
      %v373 = vpop.permute.xlu0 %372
      %374 = vrot.lane.b32.xlu0 %v365, 25
      %v375 = vpop.permute.xlu0 %374
      %376 = vrot.lane.b32.xlu0 %v366, 25
      %v377 = vpop.permute.xlu0 %376
      %378 = vrot.lane.b32.xlu0 %v367, 25
      %v379 = vpop.permute.xlu0 %378
      %vm380 = vcmask 203776
      %v381 = vsel %vm380, %v373, %v375
      %v382 = vsel %vm380, %v375, %v377
      %v383 = vsel %vm380, %v377, %v379
      %387 = vst [vmem:[#allocation3] sm:$0xff] %v381
      %388 = vst [vmem:[#allocation3 + $0x8] sm:$0xff] %v382
      %389 = vst [vmem:[#allocation3 + $0x10] sm:$0xff] %v383
      %v390 = vld [vmem:[#allocation2 + $0x18] sm:$0xff]
      %v391 = vld [vmem:[#allocation2 + $0x20] sm:$0xff]
      %v392 = vld [vmem:[#allocation2 + $0x28] sm:$0xff]
      %v393 = vld [vmem:[#allocation2 + $0x30] sm:$0xff]
      %398 = vrot.lane.b32.xlu0 %v390, 24
      %v399 = vpop.permute.xlu0 %398
      %400 = vrot.lane.b32.xlu0 %v391, 24
      %v401 = vpop.permute.xlu0 %400
      %402 = vrot.lane.b32.xlu0 %v392, 24
      %v403 = vpop.permute.xlu0 %402
      %404 = vrot.lane.b32.xlu0 %v393, 24
      %v405 = vpop.permute.xlu0 %404
      %vm406 = vcmask 195584
      %v407 = vsel %vm406, %v399, %v401
      %v408 = vsel %vm406, %v401, %v403
      %v409 = vsel %vm406, %v403, %v405
      %413 = vst [vmem:[#allocation3 + $0x18] sm:$0xff] %v407
      %414 = vst [vmem:[#allocation3 + $0x20] sm:$0xff] %v408
      %415 = vst [vmem:[#allocation3 + $0x28] sm:$0xff] %v409
      %v416 = vld [vmem:[#allocation2 + $0x18] sm:$0xff]
      %v417 = vld [vmem:[#allocation2 + $0x20] sm:$0xff]
      %v418 = vld [vmem:[#allocation2 + $0x28] sm:$0xff]
      %v419 = vld [vmem:[#allocation2 + $0x30] sm:$0xff]
      %424 = vrot.lane.b32.xlu0 %v416, 23
      %v425 = vpop.permute.xlu0 %424
      %426 = vrot.lane.b32.xlu0 %v417, 23
      %v427 = vpop.permute.xlu0 %426
      %428 = vrot.lane.b32.xlu0 %v418, 23
      %v429 = vpop.permute.xlu0 %428
      %430 = vrot.lane.b32.xlu0 %v419, 23
      %v431 = vpop.permute.xlu0 %430
      %vm432 = vcmask 187392
      %v433 = vsel %vm432, %v425, %v427
      %v434 = vsel %vm432, %v427, %v429
      %v435 = vsel %vm432, %v429, %v431
      %439 = vst [vmem:[#allocation3 + $0x30] sm:$0xff] %v433
      %440 = vst [vmem:[#allocation3 + $0x38] sm:$0xff] %v434
      %441 = vst [vmem:[#allocation3 + $0x40] sm:$0xff] %v435
      %v442 = vld [vmem:[#allocation2 + $0x18] sm:$0xff]
      %v443 = vld [vmem:[#allocation2 + $0x20] sm:$0xff]
      %v444 = vld [vmem:[#allocation2 + $0x28] sm:$0xff]
      %v445 = vld [vmem:[#allocation2 + $0x30] sm:$0xff]
      %450 = vrot.lane.b32.xlu0 %v442, 1
      %v451 = vpop.permute.xlu0 %450
      %452 = vrot.lane.b32.xlu0 %v443, 1
      %v453 = vpop.permute.xlu0 %452
      %454 = vrot.lane.b32.xlu0 %v444, 1
      %v455 = vpop.permute.xlu0 %454
      %456 = vrot.lane.b32.xlu0 %v445, 1
      %v457 = vpop.permute.xlu0 %456
      %vm458 = vcmask 7168
      %v459 = vsel %vm458, %v451, %v453
      %v460 = vsel %vm458, %v453, %v455
      %v461 = vsel %vm458, %v455, %v457
      %465 = vst [vmem:[#allocation3 + $0x48] sm:$0xff] %v459
      %466 = vst [vmem:[#allocation3 + $0x50] sm:$0xff] %v460
      %467 = vst [vmem:[#allocation3 + $0x58] sm:$0xff] %v461
      %v468 = vld [vmem:[#allocation2 + $0x20] sm:$0xff]
      %v469 = vld [vmem:[#allocation2 + $0x28] sm:$0xff]
      %v470 = vld [vmem:[#allocation2 + $0x30] sm:$0xff]
      %471 = vst [vmem:[#allocation3 + $0x60] sm:$0xff] %v468
      %472 = vst [vmem:[#allocation3 + $0x68] sm:$0xff] %v469
      %473 = vst [vmem:[#allocation3 + $0x70] sm:$0xff] %v470
      %v474 = vld [vmem:[#allocation2 + $0x20] sm:$0xff]
      %v475 = vld [vmem:[#allocation2 + $0x28] sm:$0xff]
      %v476 = vld [vmem:[#allocation2 + $0x30] sm:$0xff]
      %v477 = vld [vmem:[#allocation2 + $0x38] sm:$0xff]
      %482 = vrot.lane.b32.xlu0 %v474, 127
      %v483 = vpop.permute.xlu0 %482
      %484 = vrot.lane.b32.xlu0 %v475, 127
      %v485 = vpop.permute.xlu0 %484
      %486 = vrot.lane.b32.xlu0 %v476, 127
      %v487 = vpop.permute.xlu0 %486
      %488 = vrot.lane.b32.xlu0 %v477, 127
      %v489 = vpop.permute.xlu0 %488
      %vm490 = vcmask 1039360
      %v491 = vsel %vm490, %v483, %v485
      %v492 = vsel %vm490, %v485, %v487
      %v493 = vsel %vm490, %v487, %v489
      %497 = vst [vmem:[#allocation3 + $0x78] sm:$0xff] %v491
      %498 = vst [vmem:[#allocation3 + $0x80] sm:$0xff] %v492
      %499 = vst [vmem:[#allocation3 + $0x88] sm:$0xff] %v493
      %v500 = vld [vmem:[%s1] sm:$0xff]
      %v501 = vld [vmem:[#allocation3] sm:$0xff]
      %v502 = vld [vmem:[#allocation3 + $0x8] sm:$0xff]
      %v503 = vld [vmem:[#allocation3 + $0x10] sm:$0xff]
      %v504 = vld [vmem:[#allocation3 + $0x18] sm:$0xff]
      %v505 = vld [vmem:[#allocation3 + $0x20] sm:$0xff]
      %v506 = vld [vmem:[#allocation3 + $0x28] sm:$0xff]
      %v507 = vld [vmem:[#allocation3 + $0x30] sm:$0xff]
      %v508 = vld [vmem:[#allocation3 + $0x38] sm:$0xff]
      %v509 = vld [vmem:[#allocation3 + $0x40] sm:$0xff]
      %v510 = vld [vmem:[#allocation3 + $0x48] sm:$0xff]
      %v511 = vld [vmem:[#allocation3 + $0x50] sm:$0xff]
      %v512 = vld [vmem:[#allocation3 + $0x58] sm:$0xff]
      %v513 = vld [vmem:[#allocation3 + $0x60] sm:$0xff]
      %v514 = vld [vmem:[#allocation3 + $0x68] sm:$0xff]
      %v515 = vld [vmem:[#allocation3 + $0x70] sm:$0xff]
      %v516 = vld [vmem:[#allocation3 + $0x78] sm:$0xff]
      %v517 = vld [vmem:[#allocation3 + $0x80] sm:$0xff]
      %v518 = vld [vmem:[#allocation3 + $0x88] sm:$0xff]
      %vm519 = vcmask 392192
      %v521 = vsel %vm519, %v500, 0
      %523 = vmatpush.msra.mxu0 0.0
      %524 = vmatpush.msra.mxu0 0.0
      %525 = vmatpush.msra.mxu0 0.0
      %526 = vmatpush.msra.mxu0 0.0
      %527 = vmatpush.msra.mxu0 0.0
      %528 = vmatpush.msra.mxu0 0.0
      %529 = vmatpush.msra.mxu0 0.0
      %530 = vmatpush.msra.mxu0 0.0
      %531 = vmatpush.msra.mxu0 0.0
      %532 = vmatpush.msra.mxu0 0.0
      %533 = vmatpush.msra.mxu0 %v516
      %534 = vmatpush.msra.mxu0 %v513
      %535 = vmatpush.msra.mxu0 %v510
      %536 = vmatpush.msra.mxu0 %v507
      %537 = vmatpush.msra.mxu0 %v504
      %538 = vmatpush.msra.mxu0 %v501
      %539 = vmatmul.f32.gmra.mxu0 %v521
      %v540 = vpop.f32.mrf.mxu0
      %v541 = vadd.f32 0.0, %v540
      %542 = vdwg.mxu0
      %543 = vmatpush.msra.mxu0 0.0
      %544 = vmatpush.msra.mxu0 0.0
      %545 = vmatpush.msra.mxu0 0.0
      %546 = vmatpush.msra.mxu0 0.0
      %547 = vmatpush.msra.mxu0 0.0
      %548 = vmatpush.msra.mxu0 0.0
      %549 = vmatpush.msra.mxu0 0.0
      %550 = vmatpush.msra.mxu0 0.0
      %551 = vmatpush.msra.mxu0 0.0
      %552 = vmatpush.msra.mxu0 0.0
      %553 = vmatpush.msra.mxu0 %v517
      %554 = vmatpush.msra.mxu0 %v514
      %555 = vmatpush.msra.mxu0 %v511
      %556 = vmatpush.msra.mxu0 %v508
      %557 = vmatpush.msra.mxu0 %v505
      %558 = vmatpush.msra.mxu0 %v502
      %559 = vmatmul.f32.gmra.mxu0 %v521
      %v560 = vpop.f32.mrf.mxu0
      %v561 = vadd.f32 0.0, %v560
      %562 = vdwg.mxu0
      %563 = vmatpush.msra.mxu0 0.0
      %564 = vmatpush.msra.mxu0 0.0
      %565 = vmatpush.msra.mxu0 0.0
      %566 = vmatpush.msra.mxu0 0.0
      %567 = vmatpush.msra.mxu0 0.0
      %568 = vmatpush.msra.mxu0 0.0
      %569 = vmatpush.msra.mxu0 0.0
      %570 = vmatpush.msra.mxu0 0.0
      %571 = vmatpush.msra.mxu0 0.0
      %572 = vmatpush.msra.mxu0 0.0
      %573 = vmatpush.msra.mxu0 %v518
      %574 = vmatpush.msra.mxu0 %v515
      %575 = vmatpush.msra.mxu0 %v512
      %576 = vmatpush.msra.mxu0 %v509
      %577 = vmatpush.msra.mxu0 %v506
      %578 = vmatpush.msra.mxu0 %v503
      %579 = vmatmul.f32.gmra.mxu0 %v521
      %v580 = vpop.f32.mrf.mxu0
      %v581 = vadd.f32 0.0, %v580
      %582 = vdwg.mxu0
      %v583 = vmul.f32 %v541, %v541
      %v584 = vmul.f32 %v561, %v561
      %v585 = vmul.f32 %v581, %v581
      %586 = vmatpush.msra.mxu0 %v325
      %587 = vmatpush.msra.mxu0 %v324
      %588 = vmatpush.msra.mxu0 %v323
      %589 = vmatpush.msra.mxu0 %v322
      %590 = vmatpush.msra.mxu0 %v321
      %591 = vmatpush.msra.mxu0 %v320
      %592 = vmatpush.msra.mxu0 %v319
      %593 = vmatpush.msra.mxu0 %v318
      %594 = vmatpush.msra.mxu0 %v317
      %595 = vmatpush.msra.mxu0 %v316
      %596 = vmatpush.msra.mxu0 %v315
      %597 = vmatpush.msra.mxu0 %v314
      %598 = vmatpush.msra.mxu0 %v313
      %599 = vmatpush.msra.mxu0 %v312
      %600 = vmatpush.msra.mxu0 %v311
      %601 = vmatpush.msra.mxu0 %v310
      %602 = vmatmul.f32.gmra.mxu0 %v541
      %v603 = vpop.f32.mrf.mxu0
      %v604 = vadd.f32 0.0, %v603
      %605 = vmatmul.f32.gmra.mxu0 %v583
      %v606 = vpop.f32.mrf.mxu0
      %v607 = vadd.f32 0.0, %v606
      %608 = vdwg.mxu0
      %609 = vmatpush.msra.mxu0 %v341
      %610 = vmatpush.msra.mxu0 %v340
      %611 = vmatpush.msra.mxu0 %v339
      %612 = vmatpush.msra.mxu0 %v338
      %613 = vmatpush.msra.mxu0 %v337
      %614 = vmatpush.msra.mxu0 %v336
      %615 = vmatpush.msra.mxu0 %v335
      %616 = vmatpush.msra.mxu0 %v334
      %617 = vmatpush.msra.mxu0 %v333
      %618 = vmatpush.msra.mxu0 %v332
      %619 = vmatpush.msra.mxu0 %v331
      %620 = vmatpush.msra.mxu0 %v330
      %621 = vmatpush.msra.mxu0 %v329
      %622 = vmatpush.msra.mxu0 %v328
      %623 = vmatpush.msra.mxu0 %v327
      %624 = vmatpush.msra.mxu0 %v326
      %625 = vmatmul.f32.gmra.mxu0 %v561
      %v626 = vpop.f32.mrf.mxu0
      %v627 = vadd.f32 %v604, %v626
      %628 = vmatmul.f32.gmra.mxu0 %v584
      %v629 = vpop.f32.mrf.mxu0
      %v630 = vadd.f32 %v607, %v629
      %631 = vdwg.mxu0
      %632 = vmatpush.msra.mxu0 %v357
      %633 = vmatpush.msra.mxu0 %v356
      %634 = vmatpush.msra.mxu0 %v355
      %635 = vmatpush.msra.mxu0 %v354
      %636 = vmatpush.msra.mxu0 %v353
      %637 = vmatpush.msra.mxu0 %v352
      %638 = vmatpush.msra.mxu0 %v351
      %639 = vmatpush.msra.mxu0 %v350
      %640 = vmatpush.msra.mxu0 %v349
      %641 = vmatpush.msra.mxu0 %v348
      %642 = vmatpush.msra.mxu0 %v347
      %643 = vmatpush.msra.mxu0 %v346
      %644 = vmatpush.msra.mxu0 %v345
      %645 = vmatpush.msra.mxu0 %v344
      %646 = vmatpush.msra.mxu0 %v343
      %647 = vmatpush.msra.mxu0 %v342
      %648 = vmatmul.f32.gmra.mxu0 %v581
      %v649 = vpop.f32.mrf.mxu0
      %v650 = vadd.f32 %v627, %v649
      %651 = vmatmul.f32.gmra.mxu0 %v585
      %v652 = vpop.f32.mrf.mxu0
      %v653 = vadd.f32 %v630, %v652
      %654 = vdwg.mxu0
      %v655 = vmul.f32 %v650, 0.0625
      %v656 = vmul.f32 %v653, 0.0625
      %v657 = vmul.f32 %v655, %v655
      %v658 = vsub.f32 %v656, %v657
      %v659 = vmax.f32 %v658, 0.0
      %v660 = vadd.f32 %v659, 1e-05
      %v661 = vrsqrt.pop %v660
      %v662 = vmul.f32 %v661, %v660
      %v663 = vmul.f32 %v662, %v661
      %v664 = vmul.f32 0.5, %v663
      %v665 = vsub.f32 1.5, %v664
      %v666 = vmul.f32 %v661, %v665
      %vm667 = vweird.f32 %v660
      %vm668 = vweird.f32 %v661
      %vm669 = vmor %vm667, %vm668
      %v670 = vsel %vm669, %v661, %v666
      %vm671 = vcmask 130048
      %v673 = vsel %vm671, %v655, 0
      %v676 = vsel %vm671, %v670, 0
      %678 = vmatpush.msra.mxu0 0.0
      %679 = vmatpush.msra.mxu0 0.0
      %680 = vmatpush.msra.mxu0 0.0
      %681 = vmatpush.msra.mxu0 0.0
      %682 = vmatpush.msra.mxu0 0.0
      %683 = vmatpush.msra.mxu0 0.0
      %684 = vmatpush.msra.mxu0 0.0
      %685 = vmatpush.msra.mxu0 0.0
      %686 = vmatpush.msra.mxu0 0.0
      %687 = vmatpush.msra.mxu0 0.0
      %688 = vmatpush.msra.mxu0 0.0
      %689 = vmatpush.msra.mxu0 0.0
      %690 = vmatpush.msra.mxu0 0.0
      %691 = vmatpush.msra.mxu0 0.0
      %692 = vmatpush.msra.mxu0 %v361
      %693 = vmatpush.msra.mxu0 %v358
      %694 = vmatmul.f32.gmra.mxu0 %v673
      %v695 = vpop.f32.mrf.mxu0
      %v696 = vadd.f32 0.0, %v695
      %697 = vmatmul.f32.gmra.mxu0 %v676
      %v698 = vpop.f32.mrf.mxu0
      %v699 = vadd.f32 0.0, %v698
      %700 = vdwg.mxu0
      %701 = vmatpush.msra.mxu0 0.0
      %702 = vmatpush.msra.mxu0 0.0
      %703 = vmatpush.msra.mxu0 0.0
      %704 = vmatpush.msra.mxu0 0.0
      %705 = vmatpush.msra.mxu0 0.0
      %706 = vmatpush.msra.mxu0 0.0
      %707 = vmatpush.msra.mxu0 0.0
      %708 = vmatpush.msra.mxu0 0.0
      %709 = vmatpush.msra.mxu0 0.0
      %710 = vmatpush.msra.mxu0 0.0
      %711 = vmatpush.msra.mxu0 0.0
      %712 = vmatpush.msra.mxu0 0.0
      %713 = vmatpush.msra.mxu0 0.0
      %714 = vmatpush.msra.mxu0 0.0
      %715 = vmatpush.msra.mxu0 %v362
      %716 = vmatpush.msra.mxu0 %v359
      %717 = vmatmul.f32.gmra.mxu0 %v673
      %v718 = vpop.f32.mrf.mxu0
      %v719 = vadd.f32 0.0, %v718
      %720 = vmatmul.f32.gmra.mxu0 %v676
      %v721 = vpop.f32.mrf.mxu0
      %v722 = vadd.f32 0.0, %v721
      %723 = vdwg.mxu0
      %724 = vmatpush.msra.mxu0 0.0
      %725 = vmatpush.msra.mxu0 0.0
      %726 = vmatpush.msra.mxu0 0.0
      %727 = vmatpush.msra.mxu0 0.0
      %728 = vmatpush.msra.mxu0 0.0
      %729 = vmatpush.msra.mxu0 0.0
      %730 = vmatpush.msra.mxu0 0.0
      %731 = vmatpush.msra.mxu0 0.0
      %732 = vmatpush.msra.mxu0 0.0
      %733 = vmatpush.msra.mxu0 0.0
      %734 = vmatpush.msra.mxu0 0.0
      %735 = vmatpush.msra.mxu0 0.0
      %736 = vmatpush.msra.mxu0 0.0
      %737 = vmatpush.msra.mxu0 0.0
      %738 = vmatpush.msra.mxu0 %v363
      %739 = vmatpush.msra.mxu0 %v360
      %740 = vmatmul.f32.gmra.mxu0 %v673
      %v741 = vpop.f32.mrf.mxu0
      %v742 = vadd.f32 0.0, %v741
      %743 = vmatmul.f32.gmra.mxu0 %v676
      %v744 = vpop.f32.mrf.mxu0
      %v745 = vadd.f32 0.0, %v744
      %746 = vdwg.mxu0
      %v747 = vsub.f32 %v541, %v696
      %v748 = vsub.f32 %v561, %v719
      %v749 = vsub.f32 %v581, %v742
      %v750 = vmul.f32 %v747, %v699
      %v751 = vmul.f32 %v748, %v722
      %v752 = vmul.f32 %v749, %v745
      %v753 = vld [vmem:[%s2] sm:$0x7]
      %v755 = vperm.slane %v753, 0
      %v756 = vperm.slane %v753, 1
      %v757 = vperm.slane %v753, 2
      %v761 = vmul.f32 %v750, %v755
      %v762 = vmul.f32 %v751, %v756
      %v763 = vmul.f32 %v752, %v757
      %v764 = vld [vmem:[%s3] sm:$0x7]
      %v766 = vperm.slane %v764, 0
      %v767 = vperm.slane %v764, 1
      %v768 = vperm.slane %v764, 2
      %v772 = vadd.f32 %v761, %v766
      %v773 = vadd.f32 %v762, %v767
      %v774 = vadd.f32 %v763, %v768
      %v775 = vld [vmem:[%s4] sm:$0xff]
      %vm776 = vcmp.ge.f32.partialorder %v772, 0.0
      %vm777 = vcmp.ge.f32.partialorder %v773, 0.0
      %vm778 = vcmp.ge.f32.partialorder %v774, 0.0
      %780 = vset.pattern.permute.xlu0 0
      %781 = vperm.xlu0 %780, %v775
      %v782 = vpop.permute.xlu0 %781
      %v784 = vmul.f32 %v782, %v772
      %v785 = vmul.f32 %v782, %v773
      %v786 = vmul.f32 %v782, %v774
      %v787 = vsel %vm776, %v772, %v784
      %v788 = vsel %vm777, %v773, %v785
      %v789 = vsel %vm778, %v774, %v786
      %790 = vst [vmem:[#allocation2 + $0x60] sm:$0xff] %v787
      %791 = vst [vmem:[#allocation2 + $0x68] sm:$0xff] %v788
      %792 = vst [vmem:[#allocation2 + $0x70] sm:$0xff] %v789
      %v793 = vld [vmem:[#allocation2 + $0x18] sm:$0xff]
      %v794 = vld [vmem:[#allocation2 + $0x20] sm:$0xff]
      %v795 = vld [vmem:[#allocation2 + $0x28] sm:$0xff]
      %v796 = vld [vmem:[#allocation2 + $0x30] sm:$0xff]
      %v797 = vld [vmem:[#allocation2 + $0x58] sm:$0xff]
      %v798 = vld [vmem:[#allocation2 + $0x60] sm:$0xff]
      %v799 = vld [vmem:[#allocation2 + $0x68] sm:$0xff]
      %v800 = vld [vmem:[#allocation2 + $0x70] sm:$0xff]
      %809 = vrot.lane.b32.xlu0 %v793, 49
      %v810 = vpop.permute.xlu0 %809
      %811 = vrot.lane.b32.xlu0 %v794, 49
      %v812 = vpop.permute.xlu0 %811
      %813 = vrot.lane.b32.xlu0 %v795, 49
      %v814 = vpop.permute.xlu0 %813
      %815 = vrot.lane.b32.xlu0 %v796, 49
      %v816 = vpop.permute.xlu0 %815
      %817 = vrot.lane.b32.xlu0 %v797, 49
      %v818 = vpop.permute.xlu0 %817
      %819 = vrot.lane.b32.xlu0 %v798, 49
      %v820 = vpop.permute.xlu0 %819
      %821 = vrot.lane.b32.xlu0 %v799, 49
      %v822 = vpop.permute.xlu0 %821
      %823 = vrot.lane.b32.xlu0 %v800, 49
      %v824 = vpop.permute.xlu0 %823
      %vm825 = vcmask 400384
      %v826 = vsel %vm825, %v810, %v812
      %v827 = vsel %vm825, %v812, %v814
      %v828 = vsel %vm825, %v814, %v816
      %v829 = vsel %vm825, %v818, %v820
      %v830 = vsel %vm825, %v820, %v822
      %v831 = vsel %vm825, %v822, %v824
      %838 = vst [vmem:[#allocation3] sm:$0xff] %v826
      %839 = vst [vmem:[#allocation3 + $0x8] sm:$0xff] %v827
      %840 = vst [vmem:[#allocation3 + $0x10] sm:$0xff] %v828
      %841 = vst [vmem:[#allocation3 + $0x18] sm:$0xff] %v829
      %842 = vst [vmem:[#allocation3 + $0x20] sm:$0xff] %v830
      %843 = vst [vmem:[#allocation3 + $0x28] sm:$0xff] %v831
      %v844 = vld [vmem:[#allocation2 + $0x18] sm:$0xff]
      %v845 = vld [vmem:[#allocation2 + $0x20] sm:$0xff]
      %v846 = vld [vmem:[#allocation2 + $0x28] sm:$0xff]
      %v847 = vld [vmem:[#allocation2 + $0x30] sm:$0xff]
      %v848 = vld [vmem:[#allocation2 + $0x58] sm:$0xff]
      %v849 = vld [vmem:[#allocation2 + $0x60] sm:$0xff]
      %v850 = vld [vmem:[#allocation2 + $0x68] sm:$0xff]
      %v851 = vld [vmem:[#allocation2 + $0x70] sm:$0xff]
      %860 = vrot.lane.b32.xlu0 %v844, 48
      %v861 = vpop.permute.xlu0 %860
      %862 = vrot.lane.b32.xlu0 %v845, 48
      %v863 = vpop.permute.xlu0 %862
      %864 = vrot.lane.b32.xlu0 %v846, 48
      %v865 = vpop.permute.xlu0 %864
      %866 = vrot.lane.b32.xlu0 %v847, 48
      %v867 = vpop.permute.xlu0 %866
      %868 = vrot.lane.b32.xlu0 %v848, 48
      %v869 = vpop.permute.xlu0 %868
      %870 = vrot.lane.b32.xlu0 %v849, 48
      %v871 = vpop.permute.xlu0 %870
      %872 = vrot.lane.b32.xlu0 %v850, 48
      %v873 = vpop.permute.xlu0 %872
      %874 = vrot.lane.b32.xlu0 %v851, 48
      %v875 = vpop.permute.xlu0 %874
      %v876 = vsel %vm519, %v861, %v863
      %v877 = vsel %vm519, %v863, %v865
      %v878 = vsel %vm519, %v865, %v867
      %v879 = vsel %vm519, %v869, %v871
      %v880 = vsel %vm519, %v871, %v873
      %v881 = vsel %vm519, %v873, %v875
      %888 = vst [vmem:[#allocation3 + $0x30] sm:$0xff] %v876
      %889 = vst [vmem:[#allocation3 + $0x38] sm:$0xff] %v877
      %890 = vst [vmem:[#allocation3 + $0x40] sm:$0xff] %v878
      %891 = vst [vmem:[#allocation3 + $0x48] sm:$0xff] %v879
      %892 = vst [vmem:[#allocation3 + $0x50] sm:$0xff] %v880
      %893 = vst [vmem:[#allocation3 + $0x58] sm:$0xff] %v881
      %v894 = vld [vmem:[#allocation2 + $0x18] sm:$0xff]
      %v895 = vld [vmem:[#allocation2 + $0x20] sm:$0xff]
      %v896 = vld [vmem:[#allocation2 + $0x28] sm:$0xff]
      %v897 = vld [vmem:[#allocation2 + $0x30] sm:$0xff]
      %v898 = vld [vmem:[#allocation2 + $0x58] sm:$0xff]
      %v899 = vld [vmem:[#allocation2 + $0x60] sm:$0xff]
      %v900 = vld [vmem:[#allocation2 + $0x68] sm:$0xff]
      %v901 = vld [vmem:[#allocation2 + $0x70] sm:$0xff]
      %910 = vrot.lane.b32.xlu0 %v894, 47
      %v911 = vpop.permute.xlu0 %910
      %912 = vrot.lane.b32.xlu0 %v895, 47
      %v913 = vpop.permute.xlu0 %912
      %914 = vrot.lane.b32.xlu0 %v896, 47
      %v915 = vpop.permute.xlu0 %914
      %916 = vrot.lane.b32.xlu0 %v897, 47
      %v917 = vpop.permute.xlu0 %916
      %918 = vrot.lane.b32.xlu0 %v898, 47
      %v919 = vpop.permute.xlu0 %918
      %920 = vrot.lane.b32.xlu0 %v899, 47
      %v921 = vpop.permute.xlu0 %920
      %922 = vrot.lane.b32.xlu0 %v900, 47
      %v923 = vpop.permute.xlu0 %922
      %924 = vrot.lane.b32.xlu0 %v901, 47
      %v925 = vpop.permute.xlu0 %924
      %vm926 = vcmask 384000
      %v927 = vsel %vm926, %v911, %v913
      %v928 = vsel %vm926, %v913, %v915
      %v929 = vsel %vm926, %v915, %v917
      %v930 = vsel %vm926, %v919, %v921
      %v931 = vsel %vm926, %v921, %v923
      %v932 = vsel %vm926, %v923, %v925
      %939 = vst [vmem:[#allocation3 + $0x60] sm:$0xff] %v927
      %940 = vst [vmem:[#allocation3 + $0x68] sm:$0xff] %v928
      %941 = vst [vmem:[#allocation3 + $0x70] sm:$0xff] %v929
      %942 = vst [vmem:[#allocation3 + $0x78] sm:$0xff] %v930
      %943 = vst [vmem:[#allocation3 + $0x80] sm:$0xff] %v931
      %944 = vst [vmem:[#allocation3 + $0x88] sm:$0xff] %v932
      %v945 = vld [vmem:[#allocation2 + $0x18] sm:$0xff]
      %v946 = vld [vmem:[#allocation2 + $0x20] sm:$0xff]
      %v947 = vld [vmem:[#allocation2 + $0x28] sm:$0xff]
      %v948 = vld [vmem:[#allocation2 + $0x30] sm:$0xff]
      %v949 = vld [vmem:[#allocation2 + $0x58] sm:$0xff]
      %v950 = vld [vmem:[#allocation2 + $0x60] sm:$0xff]
      %v951 = vld [vmem:[#allocation2 + $0x68] sm:$0xff]
      %v952 = vld [vmem:[#allocation2 + $0x70] sm:$0xff]
      %961 = vrot.lane.b32.xlu0 %v945, 1
      %v962 = vpop.permute.xlu0 %961
      %963 = vrot.lane.b32.xlu0 %v946, 1
      %v964 = vpop.permute.xlu0 %963
      %965 = vrot.lane.b32.xlu0 %v947, 1
      %v966 = vpop.permute.xlu0 %965
      %967 = vrot.lane.b32.xlu0 %v948, 1
      %v968 = vpop.permute.xlu0 %967
      %969 = vrot.lane.b32.xlu0 %v949, 1
      %v970 = vpop.permute.xlu0 %969
      %971 = vrot.lane.b32.xlu0 %v950, 1
      %v972 = vpop.permute.xlu0 %971
      %973 = vrot.lane.b32.xlu0 %v951, 1
      %v974 = vpop.permute.xlu0 %973
      %975 = vrot.lane.b32.xlu0 %v952, 1
      %v976 = vpop.permute.xlu0 %975
      %v977 = vsel %vm458, %v962, %v964
      %v978 = vsel %vm458, %v964, %v966
      %v979 = vsel %vm458, %v966, %v968
      %v980 = vsel %vm458, %v970, %v972
      %v981 = vsel %vm458, %v972, %v974
      %v982 = vsel %vm458, %v974, %v976
      %989 = vst [vmem:[#allocation3 + $0x90] sm:$0xff] %v977
      %990 = vst [vmem:[#allocation3 + $0x98] sm:$0xff] %v978
      %991 = vst [vmem:[#allocation3 + $0xa0] sm:$0xff] %v979
      %992 = vst [vmem:[#allocation3 + $0xa8] sm:$0xff] %v980
      %993 = vst [vmem:[#allocation3 + $0xb0] sm:$0xff] %v981
      %994 = vst [vmem:[#allocation3 + $0xb8] sm:$0xff] %v982
      %v995 = vld [vmem:[#allocation2 + $0x20] sm:$0xff]
      %v996 = vld [vmem:[#allocation2 + $0x28] sm:$0xff]
      %v997 = vld [vmem:[#allocation2 + $0x30] sm:$0xff]
      %v998 = vld [vmem:[#allocation2 + $0x60] sm:$0xff]
      %v999 = vld [vmem:[#allocation2 + $0x68] sm:$0xff]
      %v1000 = vld [vmem:[#allocation2 + $0x70] sm:$0xff]
      %1001 = vst [vmem:[#allocation3 + $0xc0] sm:$0xff] %v995
      %1002 = vst [vmem:[#allocation3 + $0xc8] sm:$0xff] %v996
      %1003 = vst [vmem:[#allocation3 + $0xd0] sm:$0xff] %v997
      %1004 = vst [vmem:[#allocation3 + $0xd8] sm:$0xff] %v998
      %1005 = vst [vmem:[#allocation3 + $0xe0] sm:$0xff] %v999
      %1006 = vst [vmem:[#allocation3 + $0xe8] sm:$0xff] %v1000
      %v1007 = vld [vmem:[#allocation2 + $0x20] sm:$0xff]
      %v1008 = vld [vmem:[#allocation2 + $0x28] sm:$0xff]
      %v1009 = vld [vmem:[#allocation2 + $0x30] sm:$0xff]
      %v1010 = vld [vmem:[#allocation2 + $0x38] sm:$0xff]
      %v1011 = vld [vmem:[#allocation2 + $0x60] sm:$0xff]
      %v1012 = vld [vmem:[#allocation2 + $0x68] sm:$0xff]
      %v1013 = vld [vmem:[#allocation2 + $0x70] sm:$0xff]
      %v1014 = vld [vmem:[#allocation2 + $0x78] sm:$0xff]
      %1023 = vrot.lane.b32.xlu0 %v1007, 127
      %v1024 = vpop.permute.xlu0 %1023
      %1025 = vrot.lane.b32.xlu0 %v1008, 127
      %v1026 = vpop.permute.xlu0 %1025
      %1027 = vrot.lane.b32.xlu0 %v1009, 127
      %v1028 = vpop.permute.xlu0 %1027
      %1029 = vrot.lane.b32.xlu0 %v1010, 127
      %v1030 = vpop.permute.xlu0 %1029
      %1031 = vrot.lane.b32.xlu0 %v1011, 127
      %v1032 = vpop.permute.xlu0 %1031
      %1033 = vrot.lane.b32.xlu0 %v1012, 127
      %v1034 = vpop.permute.xlu0 %1033
      %1035 = vrot.lane.b32.xlu0 %v1013, 127
      %v1036 = vpop.permute.xlu0 %1035
      %1037 = vrot.lane.b32.xlu0 %v1014, 127
      %v1038 = vpop.permute.xlu0 %1037
      %v1039 = vsel %vm490, %v1024, %v1026
      %v1040 = vsel %vm490, %v1026, %v1028
      %v1041 = vsel %vm490, %v1028, %v1030
      %v1042 = vsel %vm490, %v1032, %v1034
      %v1043 = vsel %vm490, %v1034, %v1036
      %v1044 = vsel %vm490, %v1036, %v1038
      %1051 = vst [vmem:[#allocation3 + $0xf0] sm:$0xff] %v1039
      %1052 = vst [vmem:[#allocation3 + $0xf8] sm:$0xff] %v1040
      %1053 = vst [vmem:[#allocation3 + $0x100] sm:$0xff] %v1041
      %1054 = vst [vmem:[#allocation3 + $0x108] sm:$0xff] %v1042
      %1055 = vst [vmem:[#allocation3 + $0x110] sm:$0xff] %v1043
      %1056 = vst [vmem:[#allocation3 + $0x118] sm:$0xff] %v1044
      %s1057 = scalar_lea.vmem %s1, 16
      %v1058 = vld [vmem:[%s1057] sm:$0xff]
      %v1059 = vld [vmem:[#allocation3] sm:$0xff]
      %v1060 = vld [vmem:[#allocation3 + $0x8] sm:$0xff]
      %v1061 = vld [vmem:[#allocation3 + $0x10] sm:$0xff]
      %v1062 = vld [vmem:[#allocation3 + $0x18] sm:$0xff]
      %v1063 = vld [vmem:[#allocation3 + $0x20] sm:$0xff]
      %v1064 = vld [vmem:[#allocation3 + $0x28] sm:$0xff]
      %v1065 = vld [vmem:[#allocation3 + $0x30] sm:$0xff]
      %v1066 = vld [vmem:[#allocation3 + $0x38] sm:$0xff]
      %v1067 = vld [vmem:[#allocation3 + $0x40] sm:$0xff]
      %v1068 = vld [vmem:[#allocation3 + $0x48] sm:$0xff]
      %v1069 = vld [vmem:[#allocation3 + $0x50] sm:$0xff]
      %v1070 = vld [vmem:[#allocation3 + $0x58] sm:$0xff]
      %v1071 = vld [vmem:[#allocation3 + $0x60] sm:$0xff]
      %v1072 = vld [vmem:[#allocation3 + $0x68] sm:$0xff]
      %v1073 = vld [vmem:[#allocation3 + $0x70] sm:$0xff]
      %v1074 = vld [vmem:[#allocation3 + $0x78] sm:$0xff]
      %v1075 = vld [vmem:[#allocation3 + $0x80] sm:$0xff]
      %v1076 = vld [vmem:[#allocation3 + $0x88] sm:$0xff]
      %v1077 = vld [vmem:[#allocation3 + $0x90] sm:$0xff]
      %v1078 = vld [vmem:[#allocation3 + $0x98] sm:$0xff]
      %v1079 = vld [vmem:[#allocation3 + $0xa0] sm:$0xff]
      %v1080 = vld [vmem:[#allocation3 + $0xa8] sm:$0xff]
      %v1081 = vld [vmem:[#allocation3 + $0xb0] sm:$0xff]
      %v1082 = vld [vmem:[#allocation3 + $0xb8] sm:$0xff]
      %v1083 = vld [vmem:[#allocation3 + $0xc0] sm:$0xff]
      %v1084 = vld [vmem:[#allocation3 + $0xc8] sm:$0xff]
      %v1085 = vld [vmem:[#allocation3 + $0xd0] sm:$0xff]
      %v1086 = vld [vmem:[#allocation3 + $0xd8] sm:$0xff]
      %v1087 = vld [vmem:[#allocation3 + $0xe0] sm:$0xff]
      %v1088 = vld [vmem:[#allocation3 + $0xe8] sm:$0xff]
      %v1089 = vld [vmem:[#allocation3 + $0xf0] sm:$0xff]
      %v1090 = vld [vmem:[#allocation3 + $0xf8] sm:$0xff]
      %v1091 = vld [vmem:[#allocation3 + $0x100] sm:$0xff]
      %v1092 = vld [vmem:[#allocation3 + $0x108] sm:$0xff]
      %v1093 = vld [vmem:[#allocation3 + $0x110] sm:$0xff]
      %v1094 = vld [vmem:[#allocation3 + $0x118] sm:$0xff]
      %vm1095 = vcmask 785408
      %v1097 = vsel %vm1095, %v1058, 0
      %1099 = vmatpush.msra.mxu0 0.0
      %1100 = vmatpush.msra.mxu0 0.0
      %1101 = vmatpush.msra.mxu0 0.0
      %1102 = vmatpush.msra.mxu0 0.0
      %1103 = vmatpush.msra.mxu0 %v1092
      %1104 = vmatpush.msra.mxu0 %v1089
      %1105 = vmatpush.msra.mxu0 %v1086
      %1106 = vmatpush.msra.mxu0 %v1083
      %1107 = vmatpush.msra.mxu0 %v1080
      %1108 = vmatpush.msra.mxu0 %v1077
      %1109 = vmatpush.msra.mxu0 %v1074
      %1110 = vmatpush.msra.mxu0 %v1071
      %1111 = vmatpush.msra.mxu0 %v1068
      %1112 = vmatpush.msra.mxu0 %v1065
      %1113 = vmatpush.msra.mxu0 %v1062
      %1114 = vmatpush.msra.mxu0 %v1059
      %1115 = vmatmul.f32.gmra.mxu0 %v1097
      %v1116 = vpop.f32.mrf.mxu0
      %v1117 = vadd.f32 0.0, %v1116
      %1118 = vdwg.mxu0
      %1119 = vmatpush.msra.mxu0 0.0
      %1120 = vmatpush.msra.mxu0 0.0
      %1121 = vmatpush.msra.mxu0 0.0
      %1122 = vmatpush.msra.mxu0 0.0
      %1123 = vmatpush.msra.mxu0 %v1093
      %1124 = vmatpush.msra.mxu0 %v1090
      %1125 = vmatpush.msra.mxu0 %v1087
      %1126 = vmatpush.msra.mxu0 %v1084
      %1127 = vmatpush.msra.mxu0 %v1081
      %1128 = vmatpush.msra.mxu0 %v1078
      %1129 = vmatpush.msra.mxu0 %v1075
      %1130 = vmatpush.msra.mxu0 %v1072
      %1131 = vmatpush.msra.mxu0 %v1069
      %1132 = vmatpush.msra.mxu0 %v1066
      %1133 = vmatpush.msra.mxu0 %v1063
      %1134 = vmatpush.msra.mxu0 %v1060
      %1135 = vmatmul.f32.gmra.mxu0 %v1097
      %v1136 = vpop.f32.mrf.mxu0
      %v1137 = vadd.f32 0.0, %v1136
      %1138 = vdwg.mxu0
      %1139 = vmatpush.msra.mxu0 0.0
      %1140 = vmatpush.msra.mxu0 0.0
      %1141 = vmatpush.msra.mxu0 0.0
      %1142 = vmatpush.msra.mxu0 0.0
      %1143 = vmatpush.msra.mxu0 %v1094
      %1144 = vmatpush.msra.mxu0 %v1091
      %1145 = vmatpush.msra.mxu0 %v1088
      %1146 = vmatpush.msra.mxu0 %v1085
      %1147 = vmatpush.msra.mxu0 %v1082
      %1148 = vmatpush.msra.mxu0 %v1079
      %1149 = vmatpush.msra.mxu0 %v1076
      %1150 = vmatpush.msra.mxu0 %v1073
      %1151 = vmatpush.msra.mxu0 %v1070
      %1152 = vmatpush.msra.mxu0 %v1067
      %1153 = vmatpush.msra.mxu0 %v1064
      %1154 = vmatpush.msra.mxu0 %v1061
      %1155 = vmatmul.f32.gmra.mxu0 %v1097
      %v1156 = vpop.f32.mrf.mxu0
      %v1157 = vadd.f32 0.0, %v1156
      %1158 = vdwg.mxu0
      %v1159 = vmul.f32 %v1117, %v1117
      %v1160 = vmul.f32 %v1137, %v1137
      %v1161 = vmul.f32 %v1157, %v1157
      %1162 = vmatpush.msra.mxu0 %v325
      %1163 = vmatpush.msra.mxu0 %v324
      %1164 = vmatpush.msra.mxu0 %v323
      %1165 = vmatpush.msra.mxu0 %v322
      %1166 = vmatpush.msra.mxu0 %v321
      %1167 = vmatpush.msra.mxu0 %v320
      %1168 = vmatpush.msra.mxu0 %v319
      %1169 = vmatpush.msra.mxu0 %v318
      %1170 = vmatpush.msra.mxu0 %v317
      %1171 = vmatpush.msra.mxu0 %v316
      %1172 = vmatpush.msra.mxu0 %v315
      %1173 = vmatpush.msra.mxu0 %v314
      %1174 = vmatpush.msra.mxu0 %v313
      %1175 = vmatpush.msra.mxu0 %v312
      %1176 = vmatpush.msra.mxu0 %v311
      %1177 = vmatpush.msra.mxu0 %v310
      %1178 = vmatmul.f32.gmra.mxu0 %v1117
      %v1179 = vpop.f32.mrf.mxu0
      %v1180 = vadd.f32 0.0, %v1179
      %1181 = vmatmul.f32.gmra.mxu0 %v1159
      %v1182 = vpop.f32.mrf.mxu0
      %v1183 = vadd.f32 0.0, %v1182
      %1184 = vdwg.mxu0
      %1185 = vmatpush.msra.mxu0 %v341
      %1186 = vmatpush.msra.mxu0 %v340
      %1187 = vmatpush.msra.mxu0 %v339
      %1188 = vmatpush.msra.mxu0 %v338
      %1189 = vmatpush.msra.mxu0 %v337
      %1190 = vmatpush.msra.mxu0 %v336
      %1191 = vmatpush.msra.mxu0 %v335
      %1192 = vmatpush.msra.mxu0 %v334
      %1193 = vmatpush.msra.mxu0 %v333
      %1194 = vmatpush.msra.mxu0 %v332
      %1195 = vmatpush.msra.mxu0 %v331
      %1196 = vmatpush.msra.mxu0 %v330
      %1197 = vmatpush.msra.mxu0 %v329
      %1198 = vmatpush.msra.mxu0 %v328
      %1199 = vmatpush.msra.mxu0 %v327
      %1200 = vmatpush.msra.mxu0 %v326
      %1201 = vmatmul.f32.gmra.mxu0 %v1137
      %v1202 = vpop.f32.mrf.mxu0
      %v1203 = vadd.f32 %v1180, %v1202
      %1204 = vmatmul.f32.gmra.mxu0 %v1160
      %v1205 = vpop.f32.mrf.mxu0
      %v1206 = vadd.f32 %v1183, %v1205
      %1207 = vdwg.mxu0
      %1208 = vmatpush.msra.mxu0 %v357
      %1209 = vmatpush.msra.mxu0 %v356
      %1210 = vmatpush.msra.mxu0 %v355
      %1211 = vmatpush.msra.mxu0 %v354
      %1212 = vmatpush.msra.mxu0 %v353
      %1213 = vmatpush.msra.mxu0 %v352
      %1214 = vmatpush.msra.mxu0 %v351
      %1215 = vmatpush.msra.mxu0 %v350
      %1216 = vmatpush.msra.mxu0 %v349
      %1217 = vmatpush.msra.mxu0 %v348
      %1218 = vmatpush.msra.mxu0 %v347
      %1219 = vmatpush.msra.mxu0 %v346
      %1220 = vmatpush.msra.mxu0 %v345
      %1221 = vmatpush.msra.mxu0 %v344
      %1222 = vmatpush.msra.mxu0 %v343
      %1223 = vmatpush.msra.mxu0 %v342
      %1224 = vmatmul.f32.gmra.mxu0 %v1157
      %v1225 = vpop.f32.mrf.mxu0
      %v1226 = vadd.f32 %v1203, %v1225
      %1227 = vmatmul.f32.gmra.mxu0 %v1161
      %v1228 = vpop.f32.mrf.mxu0
      %v1229 = vadd.f32 %v1206, %v1228
      %1230 = vdwg.mxu0
      %v1231 = vmul.f32 %v1226, 0.0625
      %v1232 = vmul.f32 %v1229, 0.0625
      %v1233 = vmul.f32 %v1231, %v1231
      %v1234 = vsub.f32 %v1232, %v1233
      %v1235 = vmax.f32 %v1234, 0.0
      %v1236 = vadd.f32 %v1235, 1e-05
      %v1237 = vrsqrt.pop %v1236
      %v1238 = vmul.f32 %v1237, %v1236
      %v1239 = vmul.f32 %v1238, %v1237
      %v1240 = vmul.f32 0.5, %v1239
      %v1241 = vsub.f32 1.5, %v1240
      %v1242 = vmul.f32 %v1237, %v1241
      %vm1243 = vweird.f32 %v1236
      %vm1244 = vweird.f32 %v1237
      %vm1245 = vmor %vm1243, %vm1244
      %v1246 = vsel %vm1245, %v1237, %v1242
      %v1248 = vsel %vm671, %v1231, 0
      %v1251 = vsel %vm671, %v1246, 0
      %1253 = vmatpush.msra.mxu0 0.0
      %1254 = vmatpush.msra.mxu0 0.0
      %1255 = vmatpush.msra.mxu0 0.0
      %1256 = vmatpush.msra.mxu0 0.0
      %1257 = vmatpush.msra.mxu0 0.0
      %1258 = vmatpush.msra.mxu0 0.0
      %1259 = vmatpush.msra.mxu0 0.0
      %1260 = vmatpush.msra.mxu0 0.0
      %1261 = vmatpush.msra.mxu0 0.0
      %1262 = vmatpush.msra.mxu0 0.0
      %1263 = vmatpush.msra.mxu0 0.0
      %1264 = vmatpush.msra.mxu0 0.0
      %1265 = vmatpush.msra.mxu0 0.0
      %1266 = vmatpush.msra.mxu0 0.0
      %1267 = vmatpush.msra.mxu0 %v361
      %1268 = vmatpush.msra.mxu0 %v358
      %1269 = vmatmul.f32.gmra.mxu0 %v1248
      %v1270 = vpop.f32.mrf.mxu0
      %v1271 = vadd.f32 0.0, %v1270
      %1272 = vmatmul.f32.gmra.mxu0 %v1251
      %v1273 = vpop.f32.mrf.mxu0
      %v1274 = vadd.f32 0.0, %v1273
      %1275 = vdwg.mxu0
      %1276 = vmatpush.msra.mxu0 0.0
      %1277 = vmatpush.msra.mxu0 0.0
      %1278 = vmatpush.msra.mxu0 0.0
      %1279 = vmatpush.msra.mxu0 0.0
      %1280 = vmatpush.msra.mxu0 0.0
      %1281 = vmatpush.msra.mxu0 0.0
      %1282 = vmatpush.msra.mxu0 0.0
      %1283 = vmatpush.msra.mxu0 0.0
      %1284 = vmatpush.msra.mxu0 0.0
      %1285 = vmatpush.msra.mxu0 0.0
      %1286 = vmatpush.msra.mxu0 0.0
      %1287 = vmatpush.msra.mxu0 0.0
      %1288 = vmatpush.msra.mxu0 0.0
      %1289 = vmatpush.msra.mxu0 0.0
      %1290 = vmatpush.msra.mxu0 %v362
      %1291 = vmatpush.msra.mxu0 %v359
      %1292 = vmatmul.f32.gmra.mxu0 %v1248
      %v1293 = vpop.f32.mrf.mxu0
      %v1294 = vadd.f32 0.0, %v1293
      %1295 = vmatmul.f32.gmra.mxu0 %v1251
      %v1296 = vpop.f32.mrf.mxu0
      %v1297 = vadd.f32 0.0, %v1296
      %1298 = vdwg.mxu0
      %1299 = vmatpush.msra.mxu0 0.0
      %1300 = vmatpush.msra.mxu0 0.0
      %1301 = vmatpush.msra.mxu0 0.0
      %1302 = vmatpush.msra.mxu0 0.0
      %1303 = vmatpush.msra.mxu0 0.0
      %1304 = vmatpush.msra.mxu0 0.0
      %1305 = vmatpush.msra.mxu0 0.0
      %1306 = vmatpush.msra.mxu0 0.0
      %1307 = vmatpush.msra.mxu0 0.0
      %1308 = vmatpush.msra.mxu0 0.0
      %1309 = vmatpush.msra.mxu0 0.0
      %1310 = vmatpush.msra.mxu0 0.0
      %1311 = vmatpush.msra.mxu0 0.0
      %1312 = vmatpush.msra.mxu0 0.0
      %1313 = vmatpush.msra.mxu0 %v363
      %1314 = vmatpush.msra.mxu0 %v360
      %1315 = vmatmul.f32.gmra.mxu0 %v1248
      %v1316 = vpop.f32.mrf.mxu0
      %v1317 = vadd.f32 0.0, %v1316
      %1318 = vmatmul.f32.gmra.mxu0 %v1251
      %v1319 = vpop.f32.mrf.mxu0
      %v1320 = vadd.f32 0.0, %v1319
      %1321 = vdwg.mxu0
      %v1322 = vsub.f32 %v1117, %v1271
      %v1323 = vsub.f32 %v1137, %v1294
      %v1324 = vsub.f32 %v1157, %v1317
      %v1325 = vmul.f32 %v1322, %v1274
      %v1326 = vmul.f32 %v1323, %v1297
      %v1327 = vmul.f32 %v1324, %v1320
      %s1328 = scalar_lea.vmem %s2, 3
      %v1329 = vld [vmem:[%s1328] sm:$0x7]
      %v1331 = vperm.slane %v1329, 0
      %v1332 = vperm.slane %v1329, 1
      %v1333 = vperm.slane %v1329, 2
      %v1337 = vmul.f32 %v1325, %v1331
      %v1338 = vmul.f32 %v1326, %v1332
      %v1339 = vmul.f32 %v1327, %v1333
      %s1340 = scalar_lea.vmem %s3, 3
      %v1341 = vld [vmem:[%s1340] sm:$0x7]
      %v1343 = vperm.slane %v1341, 0
      %v1344 = vperm.slane %v1341, 1
      %v1345 = vperm.slane %v1341, 2
      %v1349 = vadd.f32 %v1337, %v1343
      %v1350 = vadd.f32 %v1338, %v1344
      %v1351 = vadd.f32 %v1339, %v1345
      %s1352 = scalar_lea.vmem %s4, 8
      %v1353 = vld [vmem:[%s1352] sm:$0xff]
      %vm1354 = vcmp.ge.f32.partialorder %v1349, 0.0
      %vm1355 = vcmp.ge.f32.partialorder %v1350, 0.0
      %vm1356 = vcmp.ge.f32.partialorder %v1351, 0.0
      %1358 = vset.pattern.permute.xlu0 0
      %1359 = vperm.xlu0 %1358, %v1353
      %v1360 = vpop.permute.xlu0 %1359
      %v1362 = vmul.f32 %v1360, %v1349
      %v1363 = vmul.f32 %v1360, %v1350
      %v1364 = vmul.f32 %v1360, %v1351
      %v1365 = vsel %vm1354, %v1349, %v1362
      %v1366 = vsel %vm1355, %v1350, %v1363
      %v1367 = vsel %vm1356, %v1351, %v1364
      %1368 = vst [vmem:[#allocation2 + $0xa0] sm:$0xff] %v1365
      %1369 = vst [vmem:[#allocation2 + $0xa8] sm:$0xff] %v1366
      %1370 = vst [vmem:[#allocation2 + $0xb0] sm:$0xff] %v1367
      %v1371 = vld [vmem:[#allocation2 + $0x18] sm:$0xff]
      %v1372 = vld [vmem:[#allocation2 + $0x20] sm:$0xff]
      %v1373 = vld [vmem:[#allocation2 + $0x28] sm:$0xff]
      %v1374 = vld [vmem:[#allocation2 + $0x30] sm:$0xff]
      %v1375 = vld [vmem:[#allocation2 + $0x58] sm:$0xff]
      %v1376 = vld [vmem:[#allocation2 + $0x60] sm:$0xff]
      %v1377 = vld [vmem:[#allocation2 + $0x68] sm:$0xff]
      %v1378 = vld [vmem:[#allocation2 + $0x70] sm:$0xff]
      %v1379 = vld [vmem:[#allocation2 + $0x98] sm:$0xff]
      %v1380 = vld [vmem:[#allocation2 + $0xa0] sm:$0xff]
      %v1381 = vld [vmem:[#allocation2 + $0xa8] sm:$0xff]
      %v1382 = vld [vmem:[#allocation2 + $0xb0] sm:$0xff]
      %1395 = vrot.lane.b32.xlu0 %v1371, 97
      %v1396 = vpop.permute.xlu0 %1395
      %1397 = vrot.lane.b32.xlu0 %v1372, 97
      %v1398 = vpop.permute.xlu0 %1397
      %1399 = vrot.lane.b32.xlu0 %v1373, 97
      %v1400 = vpop.permute.xlu0 %1399
      %1401 = vrot.lane.b32.xlu0 %v1374, 97
      %v1402 = vpop.permute.xlu0 %1401
      %1403 = vrot.lane.b32.xlu0 %v1375, 97
      %v1404 = vpop.permute.xlu0 %1403
      %1405 = vrot.lane.b32.xlu0 %v1376, 97
      %v1406 = vpop.permute.xlu0 %1405
      %1407 = vrot.lane.b32.xlu0 %v1377, 97
      %v1408 = vpop.permute.xlu0 %1407
      %1409 = vrot.lane.b32.xlu0 %v1378, 97
      %v1410 = vpop.permute.xlu0 %1409
      %1411 = vrot.lane.b32.xlu0 %v1379, 97
      %v1412 = vpop.permute.xlu0 %1411
      %1413 = vrot.lane.b32.xlu0 %v1380, 97
      %v1414 = vpop.permute.xlu0 %1413
      %1415 = vrot.lane.b32.xlu0 %v1381, 97
      %v1416 = vpop.permute.xlu0 %1415
      %1417 = vrot.lane.b32.xlu0 %v1382, 97
      %v1418 = vpop.permute.xlu0 %1417
      %vm1419 = vcmask 793600
      %v1420 = vsel %vm1419, %v1396, %v1398
      %v1421 = vsel %vm1419, %v1398, %v1400
      %v1422 = vsel %vm1419, %v1400, %v1402
      %v1423 = vsel %vm1419, %v1404, %v1406
      %v1424 = vsel %vm1419, %v1406, %v1408
      %v1425 = vsel %vm1419, %v1408, %v1410
      %v1426 = vsel %vm1419, %v1412, %v1414
      %v1427 = vsel %vm1419, %v1414, %v1416
      %v1428 = vsel %vm1419, %v1416, %v1418
      %1438 = vst [vmem:[#allocation3] sm:$0xff] %v1420
      %1439 = vst [vmem:[#allocation3 + $0x8] sm:$0xff] %v1421
      %1440 = vst [vmem:[#allocation3 + $0x10] sm:$0xff] %v1422
      %1441 = vst [vmem:[#allocation3 + $0x18] sm:$0xff] %v1423
      %1442 = vst [vmem:[#allocation3 + $0x20] sm:$0xff] %v1424
      %1443 = vst [vmem:[#allocation3 + $0x28] sm:$0xff] %v1425
      %1444 = vst [vmem:[#allocation3 + $0x30] sm:$0xff] %v1426
      %1445 = vst [vmem:[#allocation3 + $0x38] sm:$0xff] %v1427
      %1446 = vst [vmem:[#allocation3 + $0x40] sm:$0xff] %v1428
      %v1447 = vld [vmem:[#allocation2 + $0x18] sm:$0xff]
      %v1448 = vld [vmem:[#allocation2 + $0x20] sm:$0xff]
      %v1449 = vld [vmem:[#allocation2 + $0x28] sm:$0xff]
      %v1450 = vld [vmem:[#allocation2 + $0x30] sm:$0xff]
      %v1451 = vld [vmem:[#allocation2 + $0x58] sm:$0xff]
      %v1452 = vld [vmem:[#allocation2 + $0x60] sm:$0xff]
      %v1453 = vld [vmem:[#allocation2 + $0x68] sm:$0xff]
      %v1454 = vld [vmem:[#allocation2 + $0x70] sm:$0xff]
      %v1455 = vld [vmem:[#allocation2 + $0x98] sm:$0xff]
      %v1456 = vld [vmem:[#allocation2 + $0xa0] sm:$0xff]
      %v1457 = vld [vmem:[#allocation2 + $0xa8] sm:$0xff]
      %v1458 = vld [vmem:[#allocation2 + $0xb0] sm:$0xff]
      %1471 = vrot.lane.b32.xlu0 %v1447, 96
      %v1472 = vpop.permute.xlu0 %1471
      %1473 = vrot.lane.b32.xlu0 %v1448, 96
      %v1474 = vpop.permute.xlu0 %1473
      %1475 = vrot.lane.b32.xlu0 %v1449, 96
      %v1476 = vpop.permute.xlu0 %1475
      %1477 = vrot.lane.b32.xlu0 %v1450, 96
      %v1478 = vpop.permute.xlu0 %1477
      %1479 = vrot.lane.b32.xlu0 %v1451, 96
      %v1480 = vpop.permute.xlu0 %1479
      %1481 = vrot.lane.b32.xlu0 %v1452, 96
      %v1482 = vpop.permute.xlu0 %1481
      %1483 = vrot.lane.b32.xlu0 %v1453, 96
      %v1484 = vpop.permute.xlu0 %1483
      %1485 = vrot.lane.b32.xlu0 %v1454, 96
      %v1486 = vpop.permute.xlu0 %1485
      %1487 = vrot.lane.b32.xlu0 %v1455, 96
      %v1488 = vpop.permute.xlu0 %1487
      %1489 = vrot.lane.b32.xlu0 %v1456, 96
      %v1490 = vpop.permute.xlu0 %1489
      %1491 = vrot.lane.b32.xlu0 %v1457, 96
      %v1492 = vpop.permute.xlu0 %1491
      %1493 = vrot.lane.b32.xlu0 %v1458, 96
      %v1494 = vpop.permute.xlu0 %1493
      %v1495 = vsel %vm1095, %v1472, %v1474
      %v1496 = vsel %vm1095, %v1474, %v1476
      %v1497 = vsel %vm1095, %v1476, %v1478
      %v1498 = vsel %vm1095, %v1480, %v1482
      %v1499 = vsel %vm1095, %v1482, %v1484
      %v1500 = vsel %vm1095, %v1484, %v1486
      %v1501 = vsel %vm1095, %v1488, %v1490
      %v1502 = vsel %vm1095, %v1490, %v1492
      %v1503 = vsel %vm1095, %v1492, %v1494
      %1513 = vst [vmem:[#allocation3 + $0x48] sm:$0xff] %v1495
      %1514 = vst [vmem:[#allocation3 + $0x50] sm:$0xff] %v1496
      %1515 = vst [vmem:[#allocation3 + $0x58] sm:$0xff] %v1497
      %1516 = vst [vmem:[#allocation3 + $0x60] sm:$0xff] %v1498
      %1517 = vst [vmem:[#allocation3 + $0x68] sm:$0xff] %v1499
      %1518 = vst [vmem:[#allocation3 + $0x70] sm:$0xff] %v1500
      %1519 = vst [vmem:[#allocation3 + $0x78] sm:$0xff] %v1501
      %1520 = vst [vmem:[#allocation3 + $0x80] sm:$0xff] %v1502
      %1521 = vst [vmem:[#allocation3 + $0x88] sm:$0xff] %v1503
      %v1522 = vld [vmem:[#allocation2 + $0x18] sm:$0xff]
      %v1523 = vld [vmem:[#allocation2 + $0x20] sm:$0xff]
      %v1524 = vld [vmem:[#allocation2 + $0x28] sm:$0xff]
      %v1525 = vld [vmem:[#allocation2 + $0x30] sm:$0xff]
      %v1526 = vld [vmem:[#allocation2 + $0x58] sm:$0xff]
      %v1527 = vld [vmem:[#allocation2 + $0x60] sm:$0xff]
      %v1528 = vld [vmem:[#allocation2 + $0x68] sm:$0xff]
      %v1529 = vld [vmem:[#allocation2 + $0x70] sm:$0xff]
      %v1530 = vld [vmem:[#allocation2 + $0x98] sm:$0xff]
      %v1531 = vld [vmem:[#allocation2 + $0xa0] sm:$0xff]
      %v1532 = vld [vmem:[#allocation2 + $0xa8] sm:$0xff]
      %v1533 = vld [vmem:[#allocation2 + $0xb0] sm:$0xff]
      %1546 = vrot.lane.b32.xlu0 %v1522, 95
      %v1547 = vpop.permute.xlu0 %1546
      %1548 = vrot.lane.b32.xlu0 %v1523, 95
      %v1549 = vpop.permute.xlu0 %1548
      %1550 = vrot.lane.b32.xlu0 %v1524, 95
      %v1551 = vpop.permute.xlu0 %1550
      %1552 = vrot.lane.b32.xlu0 %v1525, 95
      %v1553 = vpop.permute.xlu0 %1552
      %1554 = vrot.lane.b32.xlu0 %v1526, 95
      %v1555 = vpop.permute.xlu0 %1554
      %1556 = vrot.lane.b32.xlu0 %v1527, 95
      %v1557 = vpop.permute.xlu0 %1556
      %1558 = vrot.lane.b32.xlu0 %v1528, 95
      %v1559 = vpop.permute.xlu0 %1558
      %1560 = vrot.lane.b32.xlu0 %v1529, 95
      %v1561 = vpop.permute.xlu0 %1560
      %1562 = vrot.lane.b32.xlu0 %v1530, 95
      %v1563 = vpop.permute.xlu0 %1562
      %1564 = vrot.lane.b32.xlu0 %v1531, 95
      %v1565 = vpop.permute.xlu0 %1564
      %1566 = vrot.lane.b32.xlu0 %v1532, 95
      %v1567 = vpop.permute.xlu0 %1566
      %1568 = vrot.lane.b32.xlu0 %v1533, 95
      %v1569 = vpop.permute.xlu0 %1568
      %vm1570 = vcmask 777216
      %v1571 = vsel %vm1570, %v1547, %v1549
      %v1572 = vsel %vm1570, %v1549, %v1551
      %v1573 = vsel %vm1570, %v1551, %v1553
      %v1574 = vsel %vm1570, %v1555, %v1557
      %v1575 = vsel %vm1570, %v1557, %v1559
      %v1576 = vsel %vm1570, %v1559, %v1561
      %v1577 = vsel %vm1570, %v1563, %v1565
      %v1578 = vsel %vm1570, %v1565, %v1567
      %v1579 = vsel %vm1570, %v1567, %v1569
      %1589 = vst [vmem:[#allocation3 + $0x90] sm:$0xff] %v1571
      %1590 = vst [vmem:[#allocation3 + $0x98] sm:$0xff] %v1572
      %1591 = vst [vmem:[#allocation3 + $0xa0] sm:$0xff] %v1573
      %1592 = vst [vmem:[#allocation3 + $0xa8] sm:$0xff] %v1574
      %1593 = vst [vmem:[#allocation3 + $0xb0] sm:$0xff] %v1575
      %1594 = vst [vmem:[#allocation3 + $0xb8] sm:$0xff] %v1576
      %1595 = vst [vmem:[#allocation3 + $0xc0] sm:$0xff] %v1577
      %1596 = vst [vmem:[#allocation3 + $0xc8] sm:$0xff] %v1578
      %1597 = vst [vmem:[#allocation3 + $0xd0] sm:$0xff] %v1579
      %v1598 = vld [vmem:[#allocation2 + $0x18] sm:$0xff]
      %v1599 = vld [vmem:[#allocation2 + $0x20] sm:$0xff]
      %v1600 = vld [vmem:[#allocation2 + $0x28] sm:$0xff]
      %v1601 = vld [vmem:[#allocation2 + $0x30] sm:$0xff]
      %v1602 = vld [vmem:[#allocation2 + $0x58] sm:$0xff]
      %v1603 = vld [vmem:[#allocation2 + $0x60] sm:$0xff]
      %v1604 = vld [vmem:[#allocation2 + $0x68] sm:$0xff]
      %v1605 = vld [vmem:[#allocation2 + $0x70] sm:$0xff]
      %v1606 = vld [vmem:[#allocation2 + $0x98] sm:$0xff]
      %v1607 = vld [vmem:[#allocation2 + $0xa0] sm:$0xff]
      %v1608 = vld [vmem:[#allocation2 + $0xa8] sm:$0xff]
      %v1609 = vld [vmem:[#allocation2 + $0xb0] sm:$0xff]
      %1622 = vrot.lane.b32.xlu0 %v1598, 1
      %v1623 = vpop.permute.xlu0 %1622
      %1624 = vrot.lane.b32.xlu0 %v1599, 1
      %v1625 = vpop.permute.xlu0 %1624
      %1626 = vrot.lane.b32.xlu0 %v1600, 1
      %v1627 = vpop.permute.xlu0 %1626
      %1628 = vrot.lane.b32.xlu0 %v1601, 1
      %v1629 = vpop.permute.xlu0 %1628
      %1630 = vrot.lane.b32.xlu0 %v1602, 1
      %v1631 = vpop.permute.xlu0 %1630
      %1632 = vrot.lane.b32.xlu0 %v1603, 1
      %v1633 = vpop.permute.xlu0 %1632
      %1634 = vrot.lane.b32.xlu0 %v1604, 1
      %v1635 = vpop.permute.xlu0 %1634
      %1636 = vrot.lane.b32.xlu0 %v1605, 1
      %v1637 = vpop.permute.xlu0 %1636
      %1638 = vrot.lane.b32.xlu0 %v1606, 1
      %v1639 = vpop.permute.xlu0 %1638
      %1640 = vrot.lane.b32.xlu0 %v1607, 1
      %v1641 = vpop.permute.xlu0 %1640
      %1642 = vrot.lane.b32.xlu0 %v1608, 1
      %v1643 = vpop.permute.xlu0 %1642
      %1644 = vrot.lane.b32.xlu0 %v1609, 1
      %v1645 = vpop.permute.xlu0 %1644
      %v1646 = vsel %vm458, %v1623, %v1625
      %v1647 = vsel %vm458, %v1625, %v1627
      %v1648 = vsel %vm458, %v1627, %v1629
      %v1649 = vsel %vm458, %v1631, %v1633
      %v1650 = vsel %vm458, %v1633, %v1635
      %v1651 = vsel %vm458, %v1635, %v1637
      %v1652 = vsel %vm458, %v1639, %v1641
      %v1653 = vsel %vm458, %v1641, %v1643
      %v1654 = vsel %vm458, %v1643, %v1645
      %1664 = vst [vmem:[#allocation3 + $0xd8] sm:$0xff] %v1646
      %1665 = vst [vmem:[#allocation3 + $0xe0] sm:$0xff] %v1647
      %1666 = vst [vmem:[#allocation3 + $0xe8] sm:$0xff] %v1648
      %1667 = vst [vmem:[#allocation3 + $0xf0] sm:$0xff] %v1649
      %1668 = vst [vmem:[#allocation3 + $0xf8] sm:$0xff] %v1650
      %1669 = vst [vmem:[#allocation3 + $0x100] sm:$0xff] %v1651
      %1670 = vst [vmem:[#allocation3 + $0x108] sm:$0xff] %v1652
      %1671 = vst [vmem:[#allocation3 + $0x110] sm:$0xff] %v1653
      %1672 = vst [vmem:[#allocation3 + $0x118] sm:$0xff] %v1654
      %v1673 = vld [vmem:[#allocation2 + $0x20] sm:$0xff]
      %v1674 = vld [vmem:[#allocation2 + $0x28] sm:$0xff]
      %v1675 = vld [vmem:[#allocation2 + $0x30] sm:$0xff]
      %v1676 = vld [vmem:[#allocation2 + $0x60] sm:$0xff]
      %v1677 = vld [vmem:[#allocation2 + $0x68] sm:$0xff]
      %v1678 = vld [vmem:[#allocation2 + $0x70] sm:$0xff]
      %v1679 = vld [vmem:[#allocation2 + $0xa0] sm:$0xff]
      %v1680 = vld [vmem:[#allocation2 + $0xa8] sm:$0xff]
      %v1681 = vld [vmem:[#allocation2 + $0xb0] sm:$0xff]
      %1682 = vst [vmem:[#allocation3 + $0x120] sm:$0xff] %v1673
      %1683 = vst [vmem:[#allocation3 + $0x128] sm:$0xff] %v1674
      %1684 = vst [vmem:[#allocation3 + $0x130] sm:$0xff] %v1675
      %1685 = vst [vmem:[#allocation3 + $0x138] sm:$0xff] %v1676
      %1686 = vst [vmem:[#allocation3 + $0x140] sm:$0xff] %v1677
      %1687 = vst [vmem:[#allocation3 + $0x148] sm:$0xff] %v1678
      %1688 = vst [vmem:[#allocation3 + $0x150] sm:$0xff] %v1679
      %1689 = vst [vmem:[#allocation3 + $0x158] sm:$0xff] %v1680
      %1690 = vst [vmem:[#allocation3 + $0x160] sm:$0xff] %v1681
      %v1691 = vld [vmem:[#allocation2 + $0x20] sm:$0xff]
      %v1692 = vld [vmem:[#allocation2 + $0x28] sm:$0xff]
      %v1693 = vld [vmem:[#allocation2 + $0x30] sm:$0xff]
      %v1694 = vld [vmem:[#allocation2 + $0x38] sm:$0xff]
      %v1695 = vld [vmem:[#allocation2 + $0x60] sm:$0xff]
      %v1696 = vld [vmem:[#allocation2 + $0x68] sm:$0xff]
      %v1697 = vld [vmem:[#allocation2 + $0x70] sm:$0xff]
      %v1698 = vld [vmem:[#allocation2 + $0x78] sm:$0xff]
      %v1699 = vld [vmem:[#allocation2 + $0xa0] sm:$0xff]
      %v1700 = vld [vmem:[#allocation2 + $0xa8] sm:$0xff]
      %v1701 = vld [vmem:[#allocation2 + $0xb0] sm:$0xff]
      %v1702 = vld [vmem:[#allocation2 + $0xb8] sm:$0xff]
      %1715 = vrot.lane.b32.xlu0 %v1691, 127
      %v1716 = vpop.permute.xlu0 %1715
      %1717 = vrot.lane.b32.xlu0 %v1692, 127
      %v1718 = vpop.permute.xlu0 %1717
      %1719 = vrot.lane.b32.xlu0 %v1693, 127
      %v1720 = vpop.permute.xlu0 %1719
      %1721 = vrot.lane.b32.xlu0 %v1694, 127
      %v1722 = vpop.permute.xlu0 %1721
      %1723 = vrot.lane.b32.xlu0 %v1695, 127
      %v1724 = vpop.permute.xlu0 %1723
      %1725 = vrot.lane.b32.xlu0 %v1696, 127
      %v1726 = vpop.permute.xlu0 %1725
      %1727 = vrot.lane.b32.xlu0 %v1697, 127
      %v1728 = vpop.permute.xlu0 %1727
      %1729 = vrot.lane.b32.xlu0 %v1698, 127
      %v1730 = vpop.permute.xlu0 %1729
      %1731 = vrot.lane.b32.xlu0 %v1699, 127
      %v1732 = vpop.permute.xlu0 %1731
      %1733 = vrot.lane.b32.xlu0 %v1700, 127
      %v1734 = vpop.permute.xlu0 %1733
      %1735 = vrot.lane.b32.xlu0 %v1701, 127
      %v1736 = vpop.permute.xlu0 %1735
      %1737 = vrot.lane.b32.xlu0 %v1702, 127
      %v1738 = vpop.permute.xlu0 %1737
      %v1739 = vsel %vm490, %v1716, %v1718
      %v1740 = vsel %vm490, %v1718, %v1720
      %v1741 = vsel %vm490, %v1720, %v1722
      %v1742 = vsel %vm490, %v1724, %v1726
      %v1743 = vsel %vm490, %v1726, %v1728
      %v1744 = vsel %vm490, %v1728, %v1730
      %v1745 = vsel %vm490, %v1732, %v1734
      %v1746 = vsel %vm490, %v1734, %v1736
      %v1747 = vsel %vm490, %v1736, %v1738
      %1757 = vst [vmem:[#allocation3 + $0x168] sm:$0xff] %v1739
      %1758 = vst [vmem:[#allocation3 + $0x170] sm:$0xff] %v1740
      %1759 = vst [vmem:[#allocation3 + $0x178] sm:$0xff] %v1741
      %1760 = vst [vmem:[#allocation3 + $0x180] sm:$0xff] %v1742
      %1761 = vst [vmem:[#allocation3 + $0x188] sm:$0xff] %v1743
      %1762 = vst [vmem:[#allocation3 + $0x190] sm:$0xff] %v1744
      %1763 = vst [vmem:[#allocation3 + $0x198] sm:$0xff] %v1745
      %1764 = vst [vmem:[#allocation3 + $0x1a0] sm:$0xff] %v1746
      %1765 = vst [vmem:[#allocation3 + $0x1a8] sm:$0xff] %v1747
      %s1766 = scalar_lea.vmem %s1, 32
      %v1767 = vld [vmem:[%s1766] sm:$0xff]
      %v1768 = vld [vmem:[%s1766 + $0x8] sm:$0xff]
      %v1769 = vld [vmem:[#allocation3] sm:$0xff]
      %v1770 = vld [vmem:[#allocation3 + $0x8] sm:$0xff]
      %v1771 = vld [vmem:[#allocation3 + $0x10] sm:$0xff]
      %v1772 = vld [vmem:[#allocation3 + $0x18] sm:$0xff]
      %v1773 = vld [vmem:[#allocation3 + $0x20] sm:$0xff]
      %v1774 = vld [vmem:[#allocation3 + $0x28] sm:$0xff]
      %v1775 = vld [vmem:[#allocation3 + $0x30] sm:$0xff]
      %v1776 = vld [vmem:[#allocation3 + $0x38] sm:$0xff]
      %v1777 = vld [vmem:[#allocation3 + $0x40] sm:$0xff]
      %v1778 = vld [vmem:[#allocation3 + $0x48] sm:$0xff]
      %v1779 = vld [vmem:[#allocation3 + $0x50] sm:$0xff]
      %v1780 = vld [vmem:[#allocation3 + $0x58] sm:$0xff]
      %v1781 = vld [vmem:[#allocation3 + $0x60] sm:$0xff]
      %v1782 = vld [vmem:[#allocation3 + $0x68] sm:$0xff]
      %v1783 = vld [vmem:[#allocation3 + $0x70] sm:$0xff]
      %v1784 = vld [vmem:[#allocation3 + $0x78] sm:$0xff]
      %v1785 = vld [vmem:[#allocation3 + $0x80] sm:$0xff]
      %v1786 = vld [vmem:[#allocation3 + $0x88] sm:$0xff]
      %v1787 = vld [vmem:[#allocation3 + $0x90] sm:$0xff]
      %v1788 = vld [vmem:[#allocation3 + $0x98] sm:$0xff]
      %v1789 = vld [vmem:[#allocation3 + $0xa0] sm:$0xff]
      %v1790 = vld [vmem:[#allocation3 + $0xa8] sm:$0xff]
      %v1791 = vld [vmem:[#allocation3 + $0xb0] sm:$0xff]
      %v1792 = vld [vmem:[#allocation3 + $0xb8] sm:$0xff]
      %v1793 = vld [vmem:[#allocation3 + $0xc0] sm:$0xff]
      %v1794 = vld [vmem:[#allocation3 + $0xc8] sm:$0xff]
      %v1795 = vld [vmem:[#allocation3 + $0xd0] sm:$0xff]
      %v1796 = vld [vmem:[#allocation3 + $0xd8] sm:$0xff]
      %v1797 = vld [vmem:[#allocation3 + $0xe0] sm:$0xff]
      %v1798 = vld [vmem:[#allocation3 + $0xe8] sm:$0xff]
      %v1799 = vld [vmem:[#allocation3 + $0xf0] sm:$0xff]
      %v1800 = vld [vmem:[#allocation3 + $0xf8] sm:$0xff]
      %v1801 = vld [vmem:[#allocation3 + $0x100] sm:$0xff]
      %v1802 = vld [vmem:[#allocation3 + $0x108] sm:$0xff]
      %v1803 = vld [vmem:[#allocation3 + $0x110] sm:$0xff]
      %v1804 = vld [vmem:[#allocation3 + $0x118] sm:$0xff]
      %v1805 = vld [vmem:[#allocation3 + $0x120] sm:$0xff]
      %v1806 = vld [vmem:[#allocation3 + $0x128] sm:$0xff]
      %v1807 = vld [vmem:[#allocation3 + $0x130] sm:$0xff]
      %v1808 = vld [vmem:[#allocation3 + $0x138] sm:$0xff]
      %v1809 = vld [vmem:[#allocation3 + $0x140] sm:$0xff]
      %v1810 = vld [vmem:[#allocation3 + $0x148] sm:$0xff]
      %v1811 = vld [vmem:[#allocation3 + $0x150] sm:$0xff]
      %v1812 = vld [vmem:[#allocation3 + $0x158] sm:$0xff]
      %v1813 = vld [vmem:[#allocation3 + $0x160] sm:$0xff]
      %v1814 = vld [vmem:[#allocation3 + $0x168] sm:$0xff]
      %v1815 = vld [vmem:[#allocation3 + $0x170] sm:$0xff]
      %v1816 = vld [vmem:[#allocation3 + $0x178] sm:$0xff]
      %v1817 = vld [vmem:[#allocation3 + $0x180] sm:$0xff]
      %v1818 = vld [vmem:[#allocation3 + $0x188] sm:$0xff]
      %v1819 = vld [vmem:[#allocation3 + $0x190] sm:$0xff]
      %v1820 = vld [vmem:[#allocation3 + $0x198] sm:$0xff]
      %v1821 = vld [vmem:[#allocation3 + $0x1a0] sm:$0xff]
      %v1822 = vld [vmem:[#allocation3 + $0x1a8] sm:$0xff]
      %v1824 = vsel %vm671, %v1768, 0
      %1826 = vmatpush.msra.mxu0 %v1814
      %1827 = vmatpush.msra.mxu0 %v1811
      %1828 = vmatpush.msra.mxu0 %v1808
      %1829 = vmatpush.msra.mxu0 %v1805
      %1830 = vmatpush.msra.mxu0 %v1802
      %1831 = vmatpush.msra.mxu0 %v1799
      %1832 = vmatpush.msra.mxu0 %v1796
      %1833 = vmatpush.msra.mxu0 %v1793
      %1834 = vmatpush.msra.mxu0 %v1790
      %1835 = vmatpush.msra.mxu0 %v1787
      %1836 = vmatpush.msra.mxu0 %v1784
      %1837 = vmatpush.msra.mxu0 %v1781
      %1838 = vmatpush.msra.mxu0 %v1778
      %1839 = vmatpush.msra.mxu0 %v1775
      %1840 = vmatpush.msra.mxu0 %v1772
      %1841 = vmatpush.msra.mxu0 %v1769
      %1842 = vmatmul.f32.gmra.mxu0 %v1767
      %v1843 = vpop.f32.mrf.mxu0
      %v1844 = vadd.f32 0.0, %v1843
      %1845 = vdwg.mxu0
      %1846 = vmatpush.msra.mxu0 0.0
      %1847 = vmatpush.msra.mxu0 0.0
      %1848 = vmatpush.msra.mxu0 0.0
      %1849 = vmatpush.msra.mxu0 0.0
      %1850 = vmatpush.msra.mxu0 0.0
      %1851 = vmatpush.msra.mxu0 0.0
      %1852 = vmatpush.msra.mxu0 0.0
      %1853 = vmatpush.msra.mxu0 0.0
      %1854 = vmatpush.msra.mxu0 0.0
      %1855 = vmatpush.msra.mxu0 0.0
      %1856 = vmatpush.msra.mxu0 0.0
      %1857 = vmatpush.msra.mxu0 0.0
      %1858 = vmatpush.msra.mxu0 0.0
      %1859 = vmatpush.msra.mxu0 0.0
      %1860 = vmatpush.msra.mxu0 %v1820
      %1861 = vmatpush.msra.mxu0 %v1817
      %1862 = vmatmul.f32.gmra.mxu0 %v1824
      %v1863 = vpop.f32.mrf.mxu0
      %v1864 = vadd.f32 %v1844, %v1863
      %1865 = vdwg.mxu0
      %1866 = vmatpush.msra.mxu0 %v1815
      %1867 = vmatpush.msra.mxu0 %v1812
      %1868 = vmatpush.msra.mxu0 %v1809
      %1869 = vmatpush.msra.mxu0 %v1806
      %1870 = vmatpush.msra.mxu0 %v1803
      %1871 = vmatpush.msra.mxu0 %v1800
      %1872 = vmatpush.msra.mxu0 %v1797
      %1873 = vmatpush.msra.mxu0 %v1794
      %1874 = vmatpush.msra.mxu0 %v1791
      %1875 = vmatpush.msra.mxu0 %v1788
      %1876 = vmatpush.msra.mxu0 %v1785
      %1877 = vmatpush.msra.mxu0 %v1782
      %1878 = vmatpush.msra.mxu0 %v1779
      %1879 = vmatpush.msra.mxu0 %v1776
      %1880 = vmatpush.msra.mxu0 %v1773
      %1881 = vmatpush.msra.mxu0 %v1770
      %1882 = vmatmul.f32.gmra.mxu0 %v1767
      %v1883 = vpop.f32.mrf.mxu0
      %v1884 = vadd.f32 0.0, %v1883
      %1885 = vdwg.mxu0
      %1886 = vmatpush.msra.mxu0 0.0
      %1887 = vmatpush.msra.mxu0 0.0
      %1888 = vmatpush.msra.mxu0 0.0
      %1889 = vmatpush.msra.mxu0 0.0
      %1890 = vmatpush.msra.mxu0 0.0
      %1891 = vmatpush.msra.mxu0 0.0
      %1892 = vmatpush.msra.mxu0 0.0
      %1893 = vmatpush.msra.mxu0 0.0
      %1894 = vmatpush.msra.mxu0 0.0
      %1895 = vmatpush.msra.mxu0 0.0
      %1896 = vmatpush.msra.mxu0 0.0
      %1897 = vmatpush.msra.mxu0 0.0
      %1898 = vmatpush.msra.mxu0 0.0
      %1899 = vmatpush.msra.mxu0 0.0
      %1900 = vmatpush.msra.mxu0 %v1821
      %1901 = vmatpush.msra.mxu0 %v1818
      %1902 = vmatmul.f32.gmra.mxu0 %v1824
      %v1903 = vpop.f32.mrf.mxu0
      %v1904 = vadd.f32 %v1884, %v1903
      %1905 = vdwg.mxu0
      %1906 = vmatpush.msra.mxu0 %v1816
      %1907 = vmatpush.msra.mxu0 %v1813
      %1908 = vmatpush.msra.mxu0 %v1810
      %1909 = vmatpush.msra.mxu0 %v1807
      %1910 = vmatpush.msra.mxu0 %v1804
      %1911 = vmatpush.msra.mxu0 %v1801
      %1912 = vmatpush.msra.mxu0 %v1798
      %1913 = vmatpush.msra.mxu0 %v1795
      %1914 = vmatpush.msra.mxu0 %v1792
      %1915 = vmatpush.msra.mxu0 %v1789
      %1916 = vmatpush.msra.mxu0 %v1786
      %1917 = vmatpush.msra.mxu0 %v1783
      %1918 = vmatpush.msra.mxu0 %v1780
      %1919 = vmatpush.msra.mxu0 %v1777
      %1920 = vmatpush.msra.mxu0 %v1774
      %1921 = vmatpush.msra.mxu0 %v1771
      %1922 = vmatmul.f32.gmra.mxu0 %v1767
      %v1923 = vpop.f32.mrf.mxu0
      %v1924 = vadd.f32 0.0, %v1923
      %1925 = vdwg.mxu0
      %1926 = vmatpush.msra.mxu0 0.0
      %1927 = vmatpush.msra.mxu0 0.0
      %1928 = vmatpush.msra.mxu0 0.0
      %1929 = vmatpush.msra.mxu0 0.0
      %1930 = vmatpush.msra.mxu0 0.0
      %1931 = vmatpush.msra.mxu0 0.0
      %1932 = vmatpush.msra.mxu0 0.0
      %1933 = vmatpush.msra.mxu0 0.0
      %1934 = vmatpush.msra.mxu0 0.0
      %1935 = vmatpush.msra.mxu0 0.0
      %1936 = vmatpush.msra.mxu0 0.0
      %1937 = vmatpush.msra.mxu0 0.0
      %1938 = vmatpush.msra.mxu0 0.0
      %1939 = vmatpush.msra.mxu0 0.0
      %1940 = vmatpush.msra.mxu0 %v1822
      %1941 = vmatpush.msra.mxu0 %v1819
      %1942 = vmatmul.f32.gmra.mxu0 %v1824
      %v1943 = vpop.f32.mrf.mxu0
      %v1944 = vadd.f32 %v1924, %v1943
      %1945 = vdwg.mxu0
      %v1946 = vmul.f32 %v1864, %v1864
      %v1947 = vmul.f32 %v1904, %v1904
      %v1948 = vmul.f32 %v1944, %v1944
      %1949 = vmatpush.msra.mxu0 %v325
      %1950 = vmatpush.msra.mxu0 %v324
      %1951 = vmatpush.msra.mxu0 %v323
      %1952 = vmatpush.msra.mxu0 %v322
      %1953 = vmatpush.msra.mxu0 %v321
      %1954 = vmatpush.msra.mxu0 %v320
      %1955 = vmatpush.msra.mxu0 %v319
      %1956 = vmatpush.msra.mxu0 %v318
      %1957 = vmatpush.msra.mxu0 %v317
      %1958 = vmatpush.msra.mxu0 %v316
      %1959 = vmatpush.msra.mxu0 %v315
      %1960 = vmatpush.msra.mxu0 %v314
      %1961 = vmatpush.msra.mxu0 %v313
      %1962 = vmatpush.msra.mxu0 %v312
      %1963 = vmatpush.msra.mxu0 %v311
      %1964 = vmatpush.msra.mxu0 %v310
      %1965 = vmatmul.f32.gmra.mxu0 %v1864
      %v1966 = vpop.f32.mrf.mxu0
      %v1967 = vadd.f32 0.0, %v1966
      %1968 = vmatmul.f32.gmra.mxu0 %v1946
      %v1969 = vpop.f32.mrf.mxu0
      %v1970 = vadd.f32 0.0, %v1969
      %1971 = vdwg.mxu0
      %1972 = vmatpush.msra.mxu0 %v341
      %1973 = vmatpush.msra.mxu0 %v340
      %1974 = vmatpush.msra.mxu0 %v339
      %1975 = vmatpush.msra.mxu0 %v338
      %1976 = vmatpush.msra.mxu0 %v337
      %1977 = vmatpush.msra.mxu0 %v336
      %1978 = vmatpush.msra.mxu0 %v335
      %1979 = vmatpush.msra.mxu0 %v334
      %1980 = vmatpush.msra.mxu0 %v333
      %1981 = vmatpush.msra.mxu0 %v332
      %1982 = vmatpush.msra.mxu0 %v331
      %1983 = vmatpush.msra.mxu0 %v330
      %1984 = vmatpush.msra.mxu0 %v329
      %1985 = vmatpush.msra.mxu0 %v328
      %1986 = vmatpush.msra.mxu0 %v327
      %1987 = vmatpush.msra.mxu0 %v326
      %1988 = vmatmul.f32.gmra.mxu0 %v1904
      %v1989 = vpop.f32.mrf.mxu0
      %v1990 = vadd.f32 %v1967, %v1989
      %1991 = vmatmul.f32.gmra.mxu0 %v1947
      %v1992 = vpop.f32.mrf.mxu0
      %v1993 = vadd.f32 %v1970, %v1992
      %1994 = vdwg.mxu0
      %1995 = vmatpush.msra.mxu0 %v357
      %1996 = vmatpush.msra.mxu0 %v356
      %1997 = vmatpush.msra.mxu0 %v355
      %1998 = vmatpush.msra.mxu0 %v354
      %1999 = vmatpush.msra.mxu0 %v353
      %2000 = vmatpush.msra.mxu0 %v352
      %2001 = vmatpush.msra.mxu0 %v351
      %2002 = vmatpush.msra.mxu0 %v350
      %2003 = vmatpush.msra.mxu0 %v349
      %2004 = vmatpush.msra.mxu0 %v348
      %2005 = vmatpush.msra.mxu0 %v347
      %2006 = vmatpush.msra.mxu0 %v346
      %2007 = vmatpush.msra.mxu0 %v345
      %2008 = vmatpush.msra.mxu0 %v344
      %2009 = vmatpush.msra.mxu0 %v343
      %2010 = vmatpush.msra.mxu0 %v342
      %2011 = vmatmul.f32.gmra.mxu0 %v1944
      %v2012 = vpop.f32.mrf.mxu0
      %v2013 = vadd.f32 %v1990, %v2012
      %2014 = vmatmul.f32.gmra.mxu0 %v1948
      %v2015 = vpop.f32.mrf.mxu0
      %v2016 = vadd.f32 %v1993, %v2015
      %2017 = vdwg.mxu0
      %v2018 = vmul.f32 %v2013, 0.0625
      %v2019 = vmul.f32 %v2016, 0.0625
      %v2020 = vmul.f32 %v2018, %v2018
      %v2021 = vsub.f32 %v2019, %v2020
      %v2022 = vmax.f32 %v2021, 0.0
      %v2023 = vadd.f32 %v2022, 1e-05
      %v2024 = vrsqrt.pop %v2023
      %v2025 = vmul.f32 %v2024, %v2023
      %v2026 = vmul.f32 %v2025, %v2024
      %v2027 = vmul.f32 0.5, %v2026
      %v2028 = vsub.f32 1.5, %v2027
      %v2029 = vmul.f32 %v2024, %v2028
      %vm2030 = vweird.f32 %v2023
      %vm2031 = vweird.f32 %v2024
      %vm2032 = vmor %vm2030, %vm2031
      %v2033 = vsel %vm2032, %v2024, %v2029
      %v2035 = vsel %vm671, %v2018, 0
      %v2038 = vsel %vm671, %v2033, 0
      %2040 = vmatpush.msra.mxu0 0.0
      %2041 = vmatpush.msra.mxu0 0.0
      %2042 = vmatpush.msra.mxu0 0.0
      %2043 = vmatpush.msra.mxu0 0.0
      %2044 = vmatpush.msra.mxu0 0.0
      %2045 = vmatpush.msra.mxu0 0.0
      %2046 = vmatpush.msra.mxu0 0.0
      %2047 = vmatpush.msra.mxu0 0.0
      %2048 = vmatpush.msra.mxu0 0.0
      %2049 = vmatpush.msra.mxu0 0.0
      %2050 = vmatpush.msra.mxu0 0.0
      %2051 = vmatpush.msra.mxu0 0.0
      %2052 = vmatpush.msra.mxu0 0.0
      %2053 = vmatpush.msra.mxu0 0.0
      %2054 = vmatpush.msra.mxu0 %v361
      %2055 = vmatpush.msra.mxu0 %v358
      %2056 = vmatmul.f32.gmra.mxu0 %v2035
      %v2057 = vpop.f32.mrf.mxu0
      %v2058 = vadd.f32 0.0, %v2057
      %2059 = vmatmul.f32.gmra.mxu0 %v2038
      %v2060 = vpop.f32.mrf.mxu0
      %v2061 = vadd.f32 0.0, %v2060
      %2062 = vdwg.mxu0
      %2063 = vmatpush.msra.mxu0 0.0
      %2064 = vmatpush.msra.mxu0 0.0
      %2065 = vmatpush.msra.mxu0 0.0
      %2066 = vmatpush.msra.mxu0 0.0
      %2067 = vmatpush.msra.mxu0 0.0
      %2068 = vmatpush.msra.mxu0 0.0
      %2069 = vmatpush.msra.mxu0 0.0
      %2070 = vmatpush.msra.mxu0 0.0
      %2071 = vmatpush.msra.mxu0 0.0
      %2072 = vmatpush.msra.mxu0 0.0
      %2073 = vmatpush.msra.mxu0 0.0
      %2074 = vmatpush.msra.mxu0 0.0
      %2075 = vmatpush.msra.mxu0 0.0
      %2076 = vmatpush.msra.mxu0 0.0
      %2077 = vmatpush.msra.mxu0 %v362
      %2078 = vmatpush.msra.mxu0 %v359
      %2079 = vmatmul.f32.gmra.mxu0 %v2035
      %v2080 = vpop.f32.mrf.mxu0
      %v2081 = vadd.f32 0.0, %v2080
      %2082 = vmatmul.f32.gmra.mxu0 %v2038
      %v2083 = vpop.f32.mrf.mxu0
      %v2084 = vadd.f32 0.0, %v2083
      %2085 = vdwg.mxu0
      %2086 = vmatpush.msra.mxu0 0.0
      %2087 = vmatpush.msra.mxu0 0.0
      %2088 = vmatpush.msra.mxu0 0.0
      %2089 = vmatpush.msra.mxu0 0.0
      %2090 = vmatpush.msra.mxu0 0.0
      %2091 = vmatpush.msra.mxu0 0.0
      %2092 = vmatpush.msra.mxu0 0.0
      %2093 = vmatpush.msra.mxu0 0.0
      %2094 = vmatpush.msra.mxu0 0.0
      %2095 = vmatpush.msra.mxu0 0.0
      %2096 = vmatpush.msra.mxu0 0.0
      %2097 = vmatpush.msra.mxu0 0.0
      %2098 = vmatpush.msra.mxu0 0.0
      %2099 = vmatpush.msra.mxu0 0.0
      %2100 = vmatpush.msra.mxu0 %v363
      %2101 = vmatpush.msra.mxu0 %v360
      %2102 = vmatmul.f32.gmra.mxu0 %v2035
      %v2103 = vpop.f32.mrf.mxu0
      %v2104 = vadd.f32 0.0, %v2103
      %2105 = vmatmul.f32.gmra.mxu0 %v2038
      %v2106 = vpop.f32.mrf.mxu0
      %v2107 = vadd.f32 0.0, %v2106
      %2108 = vdwg.mxu0
      %v2109 = vsub.f32 %v1864, %v2058
      %v2110 = vsub.f32 %v1904, %v2081
      %v2111 = vsub.f32 %v1944, %v2104
      %v2112 = vmul.f32 %v2109, %v2061
      %v2113 = vmul.f32 %v2110, %v2084
      %v2114 = vmul.f32 %v2111, %v2107
      %s2115 = scalar_lea.vmem %s2, 6
      %v2116 = vld [vmem:[%s2115] sm:$0x7]
      %v2118 = vperm.slane %v2116, 0
      %v2119 = vperm.slane %v2116, 1
      %v2120 = vperm.slane %v2116, 2
      %v2124 = vmul.f32 %v2112, %v2118
      %v2125 = vmul.f32 %v2113, %v2119
      %v2126 = vmul.f32 %v2114, %v2120
      %s2127 = scalar_lea.vmem %s3, 6
      %v2128 = vld [vmem:[%s2127] sm:$0x7]
      %v2130 = vperm.slane %v2128, 0
      %v2131 = vperm.slane %v2128, 1
      %v2132 = vperm.slane %v2128, 2
      %v2136 = vadd.f32 %v2124, %v2130
      %v2137 = vadd.f32 %v2125, %v2131
      %v2138 = vadd.f32 %v2126, %v2132
      %s2139 = scalar_lea.vmem %s4, 16
      %v2140 = vld [vmem:[%s2139] sm:$0xff]
      %vm2141 = vcmp.ge.f32.partialorder %v2136, 0.0
      %vm2142 = vcmp.ge.f32.partialorder %v2137, 0.0
      %vm2143 = vcmp.ge.f32.partialorder %v2138, 0.0
      %2145 = vset.pattern.permute.xlu0 0
      %2146 = vperm.xlu0 %2145, %v2140
      %v2147 = vpop.permute.xlu0 %2146
      %v2149 = vmul.f32 %v2147, %v2136
      %v2150 = vmul.f32 %v2147, %v2137
      %v2151 = vmul.f32 %v2147, %v2138
      %v2152 = vsel %vm2141, %v2136, %v2149
      %v2153 = vsel %vm2142, %v2137, %v2150
      %v2154 = vsel %vm2143, %v2138, %v2151
      %2155 = vst [vmem:[#allocation2 + $0xe0] sm:$0xff] %v2152
      %2156 = vst [vmem:[#allocation2 + $0xe8] sm:$0xff] %v2153
      %2157 = vst [vmem:[#allocation2 + $0xf0] sm:$0xff] %v2154
      %v2158 = vld [vmem:[#allocation2 + $0x10] sm:$0xff]
      %v2159 = vld [vmem:[#allocation2 + $0x18] sm:$0xff]
      %v2160 = vld [vmem:[#allocation2 + $0x20] sm:$0xff]
      %v2161 = vld [vmem:[#allocation2 + $0x28] sm:$0xff]
      %v2162 = vld [vmem:[#allocation2 + $0x50] sm:$0xff]
      %v2163 = vld [vmem:[#allocation2 + $0x58] sm:$0xff]
      %v2164 = vld [vmem:[#allocation2 + $0x60] sm:$0xff]
      %v2165 = vld [vmem:[#allocation2 + $0x68] sm:$0xff]
      %v2166 = vld [vmem:[#allocation2 + $0x90] sm:$0xff]
      %v2167 = vld [vmem:[#allocation2 + $0x98] sm:$0xff]
      %v2168 = vld [vmem:[#allocation2 + $0xa0] sm:$0xff]
      %v2169 = vld [vmem:[#allocation2 + $0xa8] sm:$0xff]
      %v2170 = vld [vmem:[#allocation2 + $0xd0] sm:$0xff]
      %v2171 = vld [vmem:[#allocation2 + $0xd8] sm:$0xff]
      %v2172 = vld [vmem:[#allocation2 + $0xe0] sm:$0xff]
      %v2173 = vld [vmem:[#allocation2 + $0xe8] sm:$0xff]
      %2190 = vrot.lane.b32.xlu0 %v2158, 65
      %v2191 = vpop.permute.xlu0 %2190
      %2192 = vrot.lane.b32.xlu0 %v2159, 65
      %v2193 = vpop.permute.xlu0 %2192
      %2194 = vrot.lane.b32.xlu0 %v2160, 65
      %v2195 = vpop.permute.xlu0 %2194
      %2196 = vrot.lane.b32.xlu0 %v2161, 65
      %v2197 = vpop.permute.xlu0 %2196
      %2198 = vrot.lane.b32.xlu0 %v2162, 65
      %v2199 = vpop.permute.xlu0 %2198
      %2200 = vrot.lane.b32.xlu0 %v2163, 65
      %v2201 = vpop.permute.xlu0 %2200
      %2202 = vrot.lane.b32.xlu0 %v2164, 65
      %v2203 = vpop.permute.xlu0 %2202
      %2204 = vrot.lane.b32.xlu0 %v2165, 65
      %v2205 = vpop.permute.xlu0 %2204
      %2206 = vrot.lane.b32.xlu0 %v2166, 65
      %v2207 = vpop.permute.xlu0 %2206
      %2208 = vrot.lane.b32.xlu0 %v2167, 65
      %v2209 = vpop.permute.xlu0 %2208
      %2210 = vrot.lane.b32.xlu0 %v2168, 65
      %v2211 = vpop.permute.xlu0 %2210
      %2212 = vrot.lane.b32.xlu0 %v2169, 65
      %v2213 = vpop.permute.xlu0 %2212
      %2214 = vrot.lane.b32.xlu0 %v2170, 65
      %v2215 = vpop.permute.xlu0 %2214
      %2216 = vrot.lane.b32.xlu0 %v2171, 65
      %v2217 = vpop.permute.xlu0 %2216
      %2218 = vrot.lane.b32.xlu0 %v2172, 65
      %v2219 = vpop.permute.xlu0 %2218
      %2220 = vrot.lane.b32.xlu0 %v2173, 65
      %v2221 = vpop.permute.xlu0 %2220
      %vm2222 = vcmask 531456
      %v2223 = vsel %vm2222, %v2191, %v2193
      %v2224 = vsel %vm2222, %v2193, %v2195
      %v2225 = vsel %vm2222, %v2195, %v2197
      %v2226 = vsel %vm2222, %v2199, %v2201
      %v2227 = vsel %vm2222, %v2201, %v2203
      %v2228 = vsel %vm2222, %v2203, %v2205
      %v2229 = vsel %vm2222, %v2207, %v2209
      %v2230 = vsel %vm2222, %v2209, %v2211
      %v2231 = vsel %vm2222, %v2211, %v2213
      %v2232 = vsel %vm2222, %v2215, %v2217
      %v2233 = vsel %vm2222, %v2217, %v2219
      %v2234 = vsel %vm2222, %v2219, %v2221
      %2247 = vst [vmem:[#allocation3] sm:$0xff] %v2223
      %2248 = vst [vmem:[#allocation3 + $0x8] sm:$0xff] %v2224
      %2249 = vst [vmem:[#allocation3 + $0x10] sm:$0xff] %v2225
      %2250 = vst [vmem:[#allocation3 + $0x18] sm:$0xff] %v2226
      %2251 = vst [vmem:[#allocation3 + $0x20] sm:$0xff] %v2227
      %2252 = vst [vmem:[#allocation3 + $0x28] sm:$0xff] %v2228
      %2253 = vst [vmem:[#allocation3 + $0x30] sm:$0xff] %v2229
      %2254 = vst [vmem:[#allocation3 + $0x38] sm:$0xff] %v2230
      %2255 = vst [vmem:[#allocation3 + $0x40] sm:$0xff] %v2231
      %2256 = vst [vmem:[#allocation3 + $0x48] sm:$0xff] %v2232
      %2257 = vst [vmem:[#allocation3 + $0x50] sm:$0xff] %v2233
      %2258 = vst [vmem:[#allocation3 + $0x58] sm:$0xff] %v2234
      %v2259 = vld [vmem:[#allocation2 + $0x10] sm:$0xff]
      %v2260 = vld [vmem:[#allocation2 + $0x18] sm:$0xff]
      %v2261 = vld [vmem:[#allocation2 + $0x20] sm:$0xff]
      %v2262 = vld [vmem:[#allocation2 + $0x28] sm:$0xff]
      %v2263 = vld [vmem:[#allocation2 + $0x50] sm:$0xff]
      %v2264 = vld [vmem:[#allocation2 + $0x58] sm:$0xff]
      %v2265 = vld [vmem:[#allocation2 + $0x60] sm:$0xff]
      %v2266 = vld [vmem:[#allocation2 + $0x68] sm:$0xff]
      %v2267 = vld [vmem:[#allocation2 + $0x90] sm:$0xff]
      %v2268 = vld [vmem:[#allocation2 + $0x98] sm:$0xff]
      %v2269 = vld [vmem:[#allocation2 + $0xa0] sm:$0xff]
      %v2270 = vld [vmem:[#allocation2 + $0xa8] sm:$0xff]
      %v2271 = vld [vmem:[#allocation2 + $0xd0] sm:$0xff]
      %v2272 = vld [vmem:[#allocation2 + $0xd8] sm:$0xff]
      %v2273 = vld [vmem:[#allocation2 + $0xe0] sm:$0xff]
      %v2274 = vld [vmem:[#allocation2 + $0xe8] sm:$0xff]
      %2291 = vrot.lane.b32.xlu0 %v2259, 64
      %v2292 = vpop.permute.xlu0 %2291
      %2293 = vrot.lane.b32.xlu0 %v2260, 64
      %v2294 = vpop.permute.xlu0 %2293
      %2295 = vrot.lane.b32.xlu0 %v2261, 64
      %v2296 = vpop.permute.xlu0 %2295
      %2297 = vrot.lane.b32.xlu0 %v2262, 64
      %v2298 = vpop.permute.xlu0 %2297
      %2299 = vrot.lane.b32.xlu0 %v2263, 64
      %v2300 = vpop.permute.xlu0 %2299
      %2301 = vrot.lane.b32.xlu0 %v2264, 64
      %v2302 = vpop.permute.xlu0 %2301
      %2303 = vrot.lane.b32.xlu0 %v2265, 64
      %v2304 = vpop.permute.xlu0 %2303
      %2305 = vrot.lane.b32.xlu0 %v2266, 64
      %v2306 = vpop.permute.xlu0 %2305
      %2307 = vrot.lane.b32.xlu0 %v2267, 64
      %v2308 = vpop.permute.xlu0 %2307
      %2309 = vrot.lane.b32.xlu0 %v2268, 64
      %v2310 = vpop.permute.xlu0 %2309
      %2311 = vrot.lane.b32.xlu0 %v2269, 64
      %v2312 = vpop.permute.xlu0 %2311
      %2313 = vrot.lane.b32.xlu0 %v2270, 64
      %v2314 = vpop.permute.xlu0 %2313
      %2315 = vrot.lane.b32.xlu0 %v2271, 64
      %v2316 = vpop.permute.xlu0 %2315
      %2317 = vrot.lane.b32.xlu0 %v2272, 64
      %v2318 = vpop.permute.xlu0 %2317
      %2319 = vrot.lane.b32.xlu0 %v2273, 64
      %v2320 = vpop.permute.xlu0 %2319
      %2321 = vrot.lane.b32.xlu0 %v2274, 64
      %v2322 = vpop.permute.xlu0 %2321
      %vm2323 = vcmask 523264
      %v2324 = vsel %vm2323, %v2292, %v2294
      %v2325 = vsel %vm2323, %v2294, %v2296
      %v2326 = vsel %vm2323, %v2296, %v2298
      %v2327 = vsel %vm2323, %v2300, %v2302
      %v2328 = vsel %vm2323, %v2302, %v2304
      %v2329 = vsel %vm2323, %v2304, %v2306
      %v2330 = vsel %vm2323, %v2308, %v2310
      %v2331 = vsel %vm2323, %v2310, %v2312
      %v2332 = vsel %vm2323, %v2312, %v2314
      %v2333 = vsel %vm2323, %v2316, %v2318
      %v2334 = vsel %vm2323, %v2318, %v2320
      %v2335 = vsel %vm2323, %v2320, %v2322
      %2348 = vst [vmem:[#allocation3 + $0x60] sm:$0xff] %v2324
      %2349 = vst [vmem:[#allocation3 + $0x68] sm:$0xff] %v2325
      %2350 = vst [vmem:[#allocation3 + $0x70] sm:$0xff] %v2326
      %2351 = vst [vmem:[#allocation3 + $0x78] sm:$0xff] %v2327
      %2352 = vst [vmem:[#allocation3 + $0x80] sm:$0xff] %v2328
      %2353 = vst [vmem:[#allocation3 + $0x88] sm:$0xff] %v2329
      %2354 = vst [vmem:[#allocation3 + $0x90] sm:$0xff] %v2330
      %2355 = vst [vmem:[#allocation3 + $0x98] sm:$0xff] %v2331
      %2356 = vst [vmem:[#allocation3 + $0xa0] sm:$0xff] %v2332
      %2357 = vst [vmem:[#allocation3 + $0xa8] sm:$0xff] %v2333
      %2358 = vst [vmem:[#allocation3 + $0xb0] sm:$0xff] %v2334
      %2359 = vst [vmem:[#allocation3 + $0xb8] sm:$0xff] %v2335
      %v2360 = vld [vmem:[#allocation2 + $0x10] sm:$0xff]
      %v2361 = vld [vmem:[#allocation2 + $0x18] sm:$0xff]
      %v2362 = vld [vmem:[#allocation2 + $0x20] sm:$0xff]
      %v2363 = vld [vmem:[#allocation2 + $0x28] sm:$0xff]
      %v2364 = vld [vmem:[#allocation2 + $0x50] sm:$0xff]
      %v2365 = vld [vmem:[#allocation2 + $0x58] sm:$0xff]
      %v2366 = vld [vmem:[#allocation2 + $0x60] sm:$0xff]
      %v2367 = vld [vmem:[#allocation2 + $0x68] sm:$0xff]
      %v2368 = vld [vmem:[#allocation2 + $0x90] sm:$0xff]
      %v2369 = vld [vmem:[#allocation2 + $0x98] sm:$0xff]
      %v2370 = vld [vmem:[#allocation2 + $0xa0] sm:$0xff]
      %v2371 = vld [vmem:[#allocation2 + $0xa8] sm:$0xff]
      %v2372 = vld [vmem:[#allocation2 + $0xd0] sm:$0xff]
      %v2373 = vld [vmem:[#allocation2 + $0xd8] sm:$0xff]
      %v2374 = vld [vmem:[#allocation2 + $0xe0] sm:$0xff]
      %v2375 = vld [vmem:[#allocation2 + $0xe8] sm:$0xff]
      %2392 = vrot.lane.b32.xlu0 %v2360, 63
      %v2393 = vpop.permute.xlu0 %2392
      %2394 = vrot.lane.b32.xlu0 %v2361, 63
      %v2395 = vpop.permute.xlu0 %2394
      %2396 = vrot.lane.b32.xlu0 %v2362, 63
      %v2397 = vpop.permute.xlu0 %2396
      %2398 = vrot.lane.b32.xlu0 %v2363, 63
      %v2399 = vpop.permute.xlu0 %2398
      %2400 = vrot.lane.b32.xlu0 %v2364, 63
      %v2401 = vpop.permute.xlu0 %2400
      %2402 = vrot.lane.b32.xlu0 %v2365, 63
      %v2403 = vpop.permute.xlu0 %2402
      %2404 = vrot.lane.b32.xlu0 %v2366, 63
      %v2405 = vpop.permute.xlu0 %2404
      %2406 = vrot.lane.b32.xlu0 %v2367, 63
      %v2407 = vpop.permute.xlu0 %2406
      %2408 = vrot.lane.b32.xlu0 %v2368, 63
      %v2409 = vpop.permute.xlu0 %2408
      %2410 = vrot.lane.b32.xlu0 %v2369, 63
      %v2411 = vpop.permute.xlu0 %2410
      %2412 = vrot.lane.b32.xlu0 %v2370, 63
      %v2413 = vpop.permute.xlu0 %2412
      %2414 = vrot.lane.b32.xlu0 %v2371, 63
      %v2415 = vpop.permute.xlu0 %2414
      %2416 = vrot.lane.b32.xlu0 %v2372, 63
      %v2417 = vpop.permute.xlu0 %2416
      %2418 = vrot.lane.b32.xlu0 %v2373, 63
      %v2419 = vpop.permute.xlu0 %2418
      %2420 = vrot.lane.b32.xlu0 %v2374, 63
      %v2421 = vpop.permute.xlu0 %2420
      %2422 = vrot.lane.b32.xlu0 %v2375, 63
      %v2423 = vpop.permute.xlu0 %2422
      %vm2424 = vcmask 515072
      %v2425 = vsel %vm2424, %v2393, %v2395
      %v2426 = vsel %vm2424, %v2395, %v2397
      %v2427 = vsel %vm2424, %v2397, %v2399
      %v2428 = vsel %vm2424, %v2401, %v2403
      %v2429 = vsel %vm2424, %v2403, %v2405
      %v2430 = vsel %vm2424, %v2405, %v2407
      %v2431 = vsel %vm2424, %v2409, %v2411
      %v2432 = vsel %vm2424, %v2411, %v2413
      %v2433 = vsel %vm2424, %v2413, %v2415
      %v2434 = vsel %vm2424, %v2417, %v2419
      %v2435 = vsel %vm2424, %v2419, %v2421
      %v2436 = vsel %vm2424, %v2421, %v2423
      %2449 = vst [vmem:[#allocation3 + $0xc0] sm:$0xff] %v2425
      %2450 = vst [vmem:[#allocation3 + $0xc8] sm:$0xff] %v2426
      %2451 = vst [vmem:[#allocation3 + $0xd0] sm:$0xff] %v2427
      %2452 = vst [vmem:[#allocation3 + $0xd8] sm:$0xff] %v2428
      %2453 = vst [vmem:[#allocation3 + $0xe0] sm:$0xff] %v2429
      %2454 = vst [vmem:[#allocation3 + $0xe8] sm:$0xff] %v2430
      %2455 = vst [vmem:[#allocation3 + $0xf0] sm:$0xff] %v2431
      %2456 = vst [vmem:[#allocation3 + $0xf8] sm:$0xff] %v2432
      %2457 = vst [vmem:[#allocation3 + $0x100] sm:$0xff] %v2433
      %2458 = vst [vmem:[#allocation3 + $0x108] sm:$0xff] %v2434
      %2459 = vst [vmem:[#allocation3 + $0x110] sm:$0xff] %v2435
      %2460 = vst [vmem:[#allocation3 + $0x118] sm:$0xff] %v2436
      %v2461 = vld [vmem:[#allocation2 + $0x18] sm:$0xff]
      %v2462 = vld [vmem:[#allocation2 + $0x20] sm:$0xff]
      %v2463 = vld [vmem:[#allocation2 + $0x28] sm:$0xff]
      %v2464 = vld [vmem:[#allocation2 + $0x30] sm:$0xff]
      %v2465 = vld [vmem:[#allocation2 + $0x58] sm:$0xff]
      %v2466 = vld [vmem:[#allocation2 + $0x60] sm:$0xff]
      %v2467 = vld [vmem:[#allocation2 + $0x68] sm:$0xff]
      %v2468 = vld [vmem:[#allocation2 + $0x70] sm:$0xff]
      %v2469 = vld [vmem:[#allocation2 + $0x98] sm:$0xff]
      %v2470 = vld [vmem:[#allocation2 + $0xa0] sm:$0xff]
      %v2471 = vld [vmem:[#allocation2 + $0xa8] sm:$0xff]
      %v2472 = vld [vmem:[#allocation2 + $0xb0] sm:$0xff]
      %v2473 = vld [vmem:[#allocation2 + $0xd8] sm:$0xff]
      %v2474 = vld [vmem:[#allocation2 + $0xe0] sm:$0xff]
      %v2475 = vld [vmem:[#allocation2 + $0xe8] sm:$0xff]
      %v2476 = vld [vmem:[#allocation2 + $0xf0] sm:$0xff]
      %2493 = vrot.lane.b32.xlu0 %v2461, 1
      %v2494 = vpop.permute.xlu0 %2493
      %2495 = vrot.lane.b32.xlu0 %v2462, 1
      %v2496 = vpop.permute.xlu0 %2495
      %2497 = vrot.lane.b32.xlu0 %v2463, 1
      %v2498 = vpop.permute.xlu0 %2497
      %2499 = vrot.lane.b32.xlu0 %v2464, 1
      %v2500 = vpop.permute.xlu0 %2499
      %2501 = vrot.lane.b32.xlu0 %v2465, 1
      %v2502 = vpop.permute.xlu0 %2501
      %2503 = vrot.lane.b32.xlu0 %v2466, 1
      %v2504 = vpop.permute.xlu0 %2503
      %2505 = vrot.lane.b32.xlu0 %v2467, 1
      %v2506 = vpop.permute.xlu0 %2505
      %2507 = vrot.lane.b32.xlu0 %v2468, 1
      %v2508 = vpop.permute.xlu0 %2507
      %2509 = vrot.lane.b32.xlu0 %v2469, 1
      %v2510 = vpop.permute.xlu0 %2509
      %2511 = vrot.lane.b32.xlu0 %v2470, 1
      %v2512 = vpop.permute.xlu0 %2511
      %2513 = vrot.lane.b32.xlu0 %v2471, 1
      %v2514 = vpop.permute.xlu0 %2513
      %2515 = vrot.lane.b32.xlu0 %v2472, 1
      %v2516 = vpop.permute.xlu0 %2515
      %2517 = vrot.lane.b32.xlu0 %v2473, 1
      %v2518 = vpop.permute.xlu0 %2517
      %2519 = vrot.lane.b32.xlu0 %v2474, 1
      %v2520 = vpop.permute.xlu0 %2519
      %2521 = vrot.lane.b32.xlu0 %v2475, 1
      %v2522 = vpop.permute.xlu0 %2521
      %2523 = vrot.lane.b32.xlu0 %v2476, 1
      %v2524 = vpop.permute.xlu0 %2523
      %v2525 = vsel %vm458, %v2494, %v2496
      %v2526 = vsel %vm458, %v2496, %v2498
      %v2527 = vsel %vm458, %v2498, %v2500
      %v2528 = vsel %vm458, %v2502, %v2504
      %v2529 = vsel %vm458, %v2504, %v2506
      %v2530 = vsel %vm458, %v2506, %v2508
      %v2531 = vsel %vm458, %v2510, %v2512
      %v2532 = vsel %vm458, %v2512, %v2514
      %v2533 = vsel %vm458, %v2514, %v2516
      %v2534 = vsel %vm458, %v2518, %v2520
      %v2535 = vsel %vm458, %v2520, %v2522
      %v2536 = vsel %vm458, %v2522, %v2524
      %2549 = vst [vmem:[#allocation3 + $0x120] sm:$0xff] %v2525
      %2550 = vst [vmem:[#allocation3 + $0x128] sm:$0xff] %v2526
      %2551 = vst [vmem:[#allocation3 + $0x130] sm:$0xff] %v2527
      %2552 = vst [vmem:[#allocation3 + $0x138] sm:$0xff] %v2528
      %2553 = vst [vmem:[#allocation3 + $0x140] sm:$0xff] %v2529
      %2554 = vst [vmem:[#allocation3 + $0x148] sm:$0xff] %v2530
      %2555 = vst [vmem:[#allocation3 + $0x150] sm:$0xff] %v2531
      %2556 = vst [vmem:[#allocation3 + $0x158] sm:$0xff] %v2532
      %2557 = vst [vmem:[#allocation3 + $0x160] sm:$0xff] %v2533
      %2558 = vst [vmem:[#allocation3 + $0x168] sm:$0xff] %v2534
      %2559 = vst [vmem:[#allocation3 + $0x170] sm:$0xff] %v2535
      %2560 = vst [vmem:[#allocation3 + $0x178] sm:$0xff] %v2536
      %v2561 = vld [vmem:[#allocation2 + $0x20] sm:$0xff]
      %v2562 = vld [vmem:[#allocation2 + $0x28] sm:$0xff]
      %v2563 = vld [vmem:[#allocation2 + $0x30] sm:$0xff]
      %v2564 = vld [vmem:[#allocation2 + $0x60] sm:$0xff]
      %v2565 = vld [vmem:[#allocation2 + $0x68] sm:$0xff]
      %v2566 = vld [vmem:[#allocation2 + $0x70] sm:$0xff]
      %v2567 = vld [vmem:[#allocation2 + $0xa0] sm:$0xff]
      %v2568 = vld [vmem:[#allocation2 + $0xa8] sm:$0xff]
      %v2569 = vld [vmem:[#allocation2 + $0xb0] sm:$0xff]
      %v2570 = vld [vmem:[#allocation2 + $0xe0] sm:$0xff]
      %v2571 = vld [vmem:[#allocation2 + $0xe8] sm:$0xff]
      %v2572 = vld [vmem:[#allocation2 + $0xf0] sm:$0xff]
      %2573 = vst [vmem:[#allocation3 + $0x180] sm:$0xff] %v2561
      %2574 = vst [vmem:[#allocation3 + $0x188] sm:$0xff] %v2562
      %2575 = vst [vmem:[#allocation3 + $0x190] sm:$0xff] %v2563
      %2576 = vst [vmem:[#allocation3 + $0x198] sm:$0xff] %v2564
      %2577 = vst [vmem:[#allocation3 + $0x1a0] sm:$0xff] %v2565
      %2578 = vst [vmem:[#allocation3 + $0x1a8] sm:$0xff] %v2566
      %2579 = vst [vmem:[#allocation3 + $0x1b0] sm:$0xff] %v2567
      %2580 = vst [vmem:[#allocation3 + $0x1b8] sm:$0xff] %v2568
      %2581 = vst [vmem:[#allocation3 + $0x1c0] sm:$0xff] %v2569
      %2582 = vst [vmem:[#allocation3 + $0x1c8] sm:$0xff] %v2570
      %2583 = vst [vmem:[#allocation3 + $0x1d0] sm:$0xff] %v2571
      %2584 = vst [vmem:[#allocation3 + $0x1d8] sm:$0xff] %v2572
      %v2585 = vld [vmem:[#allocation2 + $0x20] sm:$0xff]
      %v2586 = vld [vmem:[#allocation2 + $0x28] sm:$0xff]
      %v2587 = vld [vmem:[#allocation2 + $0x30] sm:$0xff]
      %v2588 = vld [vmem:[#allocation2 + $0x38] sm:$0xff]
      %v2589 = vld [vmem:[#allocation2 + $0x60] sm:$0xff]
      %v2590 = vld [vmem:[#allocation2 + $0x68] sm:$0xff]
      %v2591 = vld [vmem:[#allocation2 + $0x70] sm:$0xff]
      %v2592 = vld [vmem:[#allocation2 + $0x78] sm:$0xff]
      %v2593 = vld [vmem:[#allocation2 + $0xa0] sm:$0xff]
      %v2594 = vld [vmem:[#allocation2 + $0xa8] sm:$0xff]
      %v2595 = vld [vmem:[#allocation2 + $0xb0] sm:$0xff]
      %v2596 = vld [vmem:[#allocation2 + $0xb8] sm:$0xff]
      %v2597 = vld [vmem:[#allocation2 + $0xe0] sm:$0xff]
      %v2598 = vld [vmem:[#allocation2 + $0xe8] sm:$0xff]
      %v2599 = vld [vmem:[#allocation2 + $0xf0] sm:$0xff]
      %v2600 = vld [vmem:[#allocation2 + $0xf8] sm:$0xff]
      %2617 = vrot.lane.b32.xlu0 %v2585, 127
      %v2618 = vpop.permute.xlu0 %2617
      %2619 = vrot.lane.b32.xlu0 %v2586, 127
      %v2620 = vpop.permute.xlu0 %2619
      %2621 = vrot.lane.b32.xlu0 %v2587, 127
      %v2622 = vpop.permute.xlu0 %2621
      %2623 = vrot.lane.b32.xlu0 %v2588, 127
      %v2624 = vpop.permute.xlu0 %2623
      %2625 = vrot.lane.b32.xlu0 %v2589, 127
      %v2626 = vpop.permute.xlu0 %2625
      %2627 = vrot.lane.b32.xlu0 %v2590, 127
      %v2628 = vpop.permute.xlu0 %2627
      %2629 = vrot.lane.b32.xlu0 %v2591, 127
      %v2630 = vpop.permute.xlu0 %2629
      %2631 = vrot.lane.b32.xlu0 %v2592, 127
      %v2632 = vpop.permute.xlu0 %2631
      %2633 = vrot.lane.b32.xlu0 %v2593, 127
      %v2634 = vpop.permute.xlu0 %2633
      %2635 = vrot.lane.b32.xlu0 %v2594, 127
      %v2636 = vpop.permute.xlu0 %2635
      %2637 = vrot.lane.b32.xlu0 %v2595, 127
      %v2638 = vpop.permute.xlu0 %2637
      %2639 = vrot.lane.b32.xlu0 %v2596, 127
      %v2640 = vpop.permute.xlu0 %2639
      %2641 = vrot.lane.b32.xlu0 %v2597, 127
      %v2642 = vpop.permute.xlu0 %2641
      %2643 = vrot.lane.b32.xlu0 %v2598, 127
      %v2644 = vpop.permute.xlu0 %2643
      %2645 = vrot.lane.b32.xlu0 %v2599, 127
      %v2646 = vpop.permute.xlu0 %2645
      %2647 = vrot.lane.b32.xlu0 %v2600, 127
      %v2648 = vpop.permute.xlu0 %2647
      %v2649 = vsel %vm490, %v2618, %v2620
      %v2650 = vsel %vm490, %v2620, %v2622
      %v2651 = vsel %vm490, %v2622, %v2624
      %v2652 = vsel %vm490, %v2626, %v2628
      %v2653 = vsel %vm490, %v2628, %v2630
      %v2654 = vsel %vm490, %v2630, %v2632
      %v2655 = vsel %vm490, %v2634, %v2636
      %v2656 = vsel %vm490, %v2636, %v2638
      %v2657 = vsel %vm490, %v2638, %v2640
      %v2658 = vsel %vm490, %v2642, %v2644
      %v2659 = vsel %vm490, %v2644, %v2646
      %v2660 = vsel %vm490, %v2646, %v2648
      %2673 = vst [vmem:[#allocation3 + $0x1e0] sm:$0xff] %v2649
      %2674 = vst [vmem:[#allocation3 + $0x1e8] sm:$0xff] %v2650
      %2675 = vst [vmem:[#allocation3 + $0x1f0] sm:$0xff] %v2651
      %2676 = vst [vmem:[#allocation3 + $0x1f8] sm:$0xff] %v2652
      %2677 = vst [vmem:[#allocation3 + $0x200] sm:$0xff] %v2653
      %2678 = vst [vmem:[#allocation3 + $0x208] sm:$0xff] %v2654
      %2679 = vst [vmem:[#allocation3 + $0x210] sm:$0xff] %v2655
      %2680 = vst [vmem:[#allocation3 + $0x218] sm:$0xff] %v2656
      %2681 = vst [vmem:[#allocation3 + $0x220] sm:$0xff] %v2657
      %2682 = vst [vmem:[#allocation3 + $0x228] sm:$0xff] %v2658
      %2683 = vst [vmem:[#allocation3 + $0x230] sm:$0xff] %v2659
      %2684 = vst [vmem:[#allocation3 + $0x238] sm:$0xff] %v2660
      %s2685 = scalar_lea.vmem %s1, 48
      %v2686 = vld [vmem:[%s2685] sm:$0xff]
      %v2687 = vld [vmem:[%s2685 + $0x8] sm:$0xff]
      %v2688 = vld [vmem:[#allocation3] sm:$0xff]
      %v2689 = vld [vmem:[#allocation3 + $0x8] sm:$0xff]
      %v2690 = vld [vmem:[#allocation3 + $0x10] sm:$0xff]
      %v2691 = vld [vmem:[#allocation3 + $0x18] sm:$0xff]
      %v2692 = vld [vmem:[#allocation3 + $0x20] sm:$0xff]
      %v2693 = vld [vmem:[#allocation3 + $0x28] sm:$0xff]
      %v2694 = vld [vmem:[#allocation3 + $0x30] sm:$0xff]
      %v2695 = vld [vmem:[#allocation3 + $0x38] sm:$0xff]
      %v2696 = vld [vmem:[#allocation3 + $0x40] sm:$0xff]
      %v2697 = vld [vmem:[#allocation3 + $0x48] sm:$0xff]
      %v2698 = vld [vmem:[#allocation3 + $0x50] sm:$0xff]
      %v2699 = vld [vmem:[#allocation3 + $0x58] sm:$0xff]
      %v2700 = vld [vmem:[#allocation3 + $0x60] sm:$0xff]
      %v2701 = vld [vmem:[#allocation3 + $0x68] sm:$0xff]
      %v2702 = vld [vmem:[#allocation3 + $0x70] sm:$0xff]
      %v2703 = vld [vmem:[#allocation3 + $0x78] sm:$0xff]
      %v2704 = vld [vmem:[#allocation3 + $0x80] sm:$0xff]
      %v2705 = vld [vmem:[#allocation3 + $0x88] sm:$0xff]
      %v2706 = vld [vmem:[#allocation3 + $0x90] sm:$0xff]
      %v2707 = vld [vmem:[#allocation3 + $0x98] sm:$0xff]
      %v2708 = vld [vmem:[#allocation3 + $0xa0] sm:$0xff]
      %v2709 = vld [vmem:[#allocation3 + $0xa8] sm:$0xff]
      %v2710 = vld [vmem:[#allocation3 + $0xb0] sm:$0xff]
      %v2711 = vld [vmem:[#allocation3 + $0xb8] sm:$0xff]
      %v2712 = vld [vmem:[#allocation3 + $0xc0] sm:$0xff]
      %v2713 = vld [vmem:[#allocation3 + $0xc8] sm:$0xff]
      %v2714 = vld [vmem:[#allocation3 + $0xd0] sm:$0xff]
      %v2715 = vld [vmem:[#allocation3 + $0xd8] sm:$0xff]
      %v2716 = vld [vmem:[#allocation3 + $0xe0] sm:$0xff]
      %v2717 = vld [vmem:[#allocation3 + $0xe8] sm:$0xff]
      %v2718 = vld [vmem:[#allocation3 + $0xf0] sm:$0xff]
      %v2719 = vld [vmem:[#allocation3 + $0xf8] sm:$0xff]
      %v2720 = vld [vmem:[#allocation3 + $0x100] sm:$0xff]
      %v2721 = vld [vmem:[#allocation3 + $0x108] sm:$0xff]
      %v2722 = vld [vmem:[#allocation3 + $0x110] sm:$0xff]
      %v2723 = vld [vmem:[#allocation3 + $0x118] sm:$0xff]
      %v2724 = vld [vmem:[#allocation3 + $0x120] sm:$0xff]
      %v2725 = vld [vmem:[#allocation3 + $0x128] sm:$0xff]
      %v2726 = vld [vmem:[#allocation3 + $0x130] sm:$0xff]
      %v2727 = vld [vmem:[#allocation3 + $0x138] sm:$0xff]
      %v2728 = vld [vmem:[#allocation3 + $0x140] sm:$0xff]
      %v2729 = vld [vmem:[#allocation3 + $0x148] sm:$0xff]
      %v2730 = vld [vmem:[#allocation3 + $0x150] sm:$0xff]
      %v2731 = vld [vmem:[#allocation3 + $0x158] sm:$0xff]
      %v2732 = vld [vmem:[#allocation3 + $0x160] sm:$0xff]
      %v2733 = vld [vmem:[#allocation3 + $0x168] sm:$0xff]
      %v2734 = vld [vmem:[#allocation3 + $0x170] sm:$0xff]
      %v2735 = vld [vmem:[#allocation3 + $0x178] sm:$0xff]
      %v2736 = vld [vmem:[#allocation3 + $0x180] sm:$0xff]
      %v2737 = vld [vmem:[#allocation3 + $0x188] sm:$0xff]
      %v2738 = vld [vmem:[#allocation3 + $0x190] sm:$0xff]
      %v2739 = vld [vmem:[#allocation3 + $0x198] sm:$0xff]
      %v2740 = vld [vmem:[#allocation3 + $0x1a0] sm:$0xff]
      %v2741 = vld [vmem:[#allocation3 + $0x1a8] sm:$0xff]
      %v2742 = vld [vmem:[#allocation3 + $0x1b0] sm:$0xff]
      %v2743 = vld [vmem:[#allocation3 + $0x1b8] sm:$0xff]
      %v2744 = vld [vmem:[#allocation3 + $0x1c0] sm:$0xff]
      %v2745 = vld [vmem:[#allocation3 + $0x1c8] sm:$0xff]
      %v2746 = vld [vmem:[#allocation3 + $0x1d0] sm:$0xff]
      %v2747 = vld [vmem:[#allocation3 + $0x1d8] sm:$0xff]
      %v2748 = vld [vmem:[#allocation3 + $0x1e0] sm:$0xff]
      %v2749 = vld [vmem:[#allocation3 + $0x1e8] sm:$0xff]
      %v2750 = vld [vmem:[#allocation3 + $0x1f0] sm:$0xff]
      %v2751 = vld [vmem:[#allocation3 + $0x1f8] sm:$0xff]
      %v2752 = vld [vmem:[#allocation3 + $0x200] sm:$0xff]
      %v2753 = vld [vmem:[#allocation3 + $0x208] sm:$0xff]
      %v2754 = vld [vmem:[#allocation3 + $0x210] sm:$0xff]
      %v2755 = vld [vmem:[#allocation3 + $0x218] sm:$0xff]
      %v2756 = vld [vmem:[#allocation3 + $0x220] sm:$0xff]
      %v2757 = vld [vmem:[#allocation3 + $0x228] sm:$0xff]
      %v2758 = vld [vmem:[#allocation3 + $0x230] sm:$0xff]
      %v2759 = vld [vmem:[#allocation3 + $0x238] sm:$0xff]
      %v2761 = vsel %vm2323, %v2687, 0
      %2763 = vmatpush.msra.mxu0 %v2733
      %2764 = vmatpush.msra.mxu0 %v2730
      %2765 = vmatpush.msra.mxu0 %v2727
      %2766 = vmatpush.msra.mxu0 %v2724
      %2767 = vmatpush.msra.mxu0 %v2721
      %2768 = vmatpush.msra.mxu0 %v2718
      %2769 = vmatpush.msra.mxu0 %v2715
      %2770 = vmatpush.msra.mxu0 %v2712
      %2771 = vmatpush.msra.mxu0 %v2709
      %2772 = vmatpush.msra.mxu0 %v2706
      %2773 = vmatpush.msra.mxu0 %v2703
      %2774 = vmatpush.msra.mxu0 %v2700
      %2775 = vmatpush.msra.mxu0 %v2697
      %2776 = vmatpush.msra.mxu0 %v2694
      %2777 = vmatpush.msra.mxu0 %v2691
      %2778 = vmatpush.msra.mxu0 %v2688
      %2779 = vmatmul.f32.gmra.mxu0 %v2686
      %v2780 = vpop.f32.mrf.mxu0
      %v2781 = vadd.f32 0.0, %v2780
      %2782 = vdwg.mxu0
      %2783 = vmatpush.msra.mxu0 0.0
      %2784 = vmatpush.msra.mxu0 0.0
      %2785 = vmatpush.msra.mxu0 0.0
      %2786 = vmatpush.msra.mxu0 0.0
      %2787 = vmatpush.msra.mxu0 0.0
      %2788 = vmatpush.msra.mxu0 0.0
      %2789 = vmatpush.msra.mxu0 0.0
      %2790 = vmatpush.msra.mxu0 0.0
      %2791 = vmatpush.msra.mxu0 %v2757
      %2792 = vmatpush.msra.mxu0 %v2754
      %2793 = vmatpush.msra.mxu0 %v2751
      %2794 = vmatpush.msra.mxu0 %v2748
      %2795 = vmatpush.msra.mxu0 %v2745
      %2796 = vmatpush.msra.mxu0 %v2742
      %2797 = vmatpush.msra.mxu0 %v2739
      %2798 = vmatpush.msra.mxu0 %v2736
      %2799 = vmatmul.f32.gmra.mxu0 %v2761
      %v2800 = vpop.f32.mrf.mxu0
      %v2801 = vadd.f32 %v2781, %v2800
      %2802 = vdwg.mxu0
      %2803 = vmatpush.msra.mxu0 %v2734
      %2804 = vmatpush.msra.mxu0 %v2731
      %2805 = vmatpush.msra.mxu0 %v2728
      %2806 = vmatpush.msra.mxu0 %v2725
      %2807 = vmatpush.msra.mxu0 %v2722
      %2808 = vmatpush.msra.mxu0 %v2719
      %2809 = vmatpush.msra.mxu0 %v2716
      %2810 = vmatpush.msra.mxu0 %v2713
      %2811 = vmatpush.msra.mxu0 %v2710
      %2812 = vmatpush.msra.mxu0 %v2707
      %2813 = vmatpush.msra.mxu0 %v2704
      %2814 = vmatpush.msra.mxu0 %v2701
      %2815 = vmatpush.msra.mxu0 %v2698
      %2816 = vmatpush.msra.mxu0 %v2695
      %2817 = vmatpush.msra.mxu0 %v2692
      %2818 = vmatpush.msra.mxu0 %v2689
      %2819 = vmatmul.f32.gmra.mxu0 %v2686
      %v2820 = vpop.f32.mrf.mxu0
      %v2821 = vadd.f32 0.0, %v2820
      %2822 = vdwg.mxu0
      %2823 = vmatpush.msra.mxu0 0.0
      %2824 = vmatpush.msra.mxu0 0.0
      %2825 = vmatpush.msra.mxu0 0.0
      %2826 = vmatpush.msra.mxu0 0.0
      %2827 = vmatpush.msra.mxu0 0.0
      %2828 = vmatpush.msra.mxu0 0.0
      %2829 = vmatpush.msra.mxu0 0.0
      %2830 = vmatpush.msra.mxu0 0.0
      %2831 = vmatpush.msra.mxu0 %v2758
      %2832 = vmatpush.msra.mxu0 %v2755
      %2833 = vmatpush.msra.mxu0 %v2752
      %2834 = vmatpush.msra.mxu0 %v2749
      %2835 = vmatpush.msra.mxu0 %v2746
      %2836 = vmatpush.msra.mxu0 %v2743
      %2837 = vmatpush.msra.mxu0 %v2740
      %2838 = vmatpush.msra.mxu0 %v2737
      %2839 = vmatmul.f32.gmra.mxu0 %v2761
      %v2840 = vpop.f32.mrf.mxu0
      %v2841 = vadd.f32 %v2821, %v2840
      %2842 = vdwg.mxu0
      %2843 = vmatpush.msra.mxu0 %v2735
      %2844 = vmatpush.msra.mxu0 %v2732
      %2845 = vmatpush.msra.mxu0 %v2729
      %2846 = vmatpush.msra.mxu0 %v2726
      %2847 = vmatpush.msra.mxu0 %v2723
      %2848 = vmatpush.msra.mxu0 %v2720
      %2849 = vmatpush.msra.mxu0 %v2717
      %2850 = vmatpush.msra.mxu0 %v2714
      %2851 = vmatpush.msra.mxu0 %v2711
      %2852 = vmatpush.msra.mxu0 %v2708
      %2853 = vmatpush.msra.mxu0 %v2705
      %2854 = vmatpush.msra.mxu0 %v2702
      %2855 = vmatpush.msra.mxu0 %v2699
      %2856 = vmatpush.msra.mxu0 %v2696
      %2857 = vmatpush.msra.mxu0 %v2693
      %2858 = vmatpush.msra.mxu0 %v2690
      %2859 = vmatmul.f32.gmra.mxu0 %v2686
      %v2860 = vpop.f32.mrf.mxu0
      %v2861 = vadd.f32 0.0, %v2860
      %2862 = vdwg.mxu0
      %2863 = vmatpush.msra.mxu0 0.0
      %2864 = vmatpush.msra.mxu0 0.0
      %2865 = vmatpush.msra.mxu0 0.0
      %2866 = vmatpush.msra.mxu0 0.0
      %2867 = vmatpush.msra.mxu0 0.0
      %2868 = vmatpush.msra.mxu0 0.0
      %2869 = vmatpush.msra.mxu0 0.0
      %2870 = vmatpush.msra.mxu0 0.0
      %2871 = vmatpush.msra.mxu0 %v2759
      %2872 = vmatpush.msra.mxu0 %v2756
      %2873 = vmatpush.msra.mxu0 %v2753
      %2874 = vmatpush.msra.mxu0 %v2750
      %2875 = vmatpush.msra.mxu0 %v2747
      %2876 = vmatpush.msra.mxu0 %v2744
      %2877 = vmatpush.msra.mxu0 %v2741
      %2878 = vmatpush.msra.mxu0 %v2738
      %2879 = vmatmul.f32.gmra.mxu0 %v2761
      %v2880 = vpop.f32.mrf.mxu0
      %v2881 = vadd.f32 %v2861, %v2880
      %2882 = vdwg.mxu0
      %v2883 = vmul.f32 %v2801, %v2801
      %v2884 = vmul.f32 %v2841, %v2841
      %v2885 = vmul.f32 %v2881, %v2881
      %2886 = vmatpush.msra.mxu0 %v325
      %2887 = vmatpush.msra.mxu0 %v324
      %2888 = vmatpush.msra.mxu0 %v323
      %2889 = vmatpush.msra.mxu0 %v322
      %2890 = vmatpush.msra.mxu0 %v321
      %2891 = vmatpush.msra.mxu0 %v320
      %2892 = vmatpush.msra.mxu0 %v319
      %2893 = vmatpush.msra.mxu0 %v318
      %2894 = vmatpush.msra.mxu0 %v317
      %2895 = vmatpush.msra.mxu0 %v316
      %2896 = vmatpush.msra.mxu0 %v315
      %2897 = vmatpush.msra.mxu0 %v314
      %2898 = vmatpush.msra.mxu0 %v313
      %2899 = vmatpush.msra.mxu0 %v312
      %2900 = vmatpush.msra.mxu0 %v311
      %2901 = vmatpush.msra.mxu0 %v310
      %2902 = vmatmul.f32.gmra.mxu0 %v2801
      %v2903 = vpop.f32.mrf.mxu0
      %v2904 = vadd.f32 0.0, %v2903
      %2905 = vmatmul.f32.gmra.mxu0 %v2883
      %v2906 = vpop.f32.mrf.mxu0
      %v2907 = vadd.f32 0.0, %v2906
      %2908 = vdwg.mxu0
      %2909 = vmatpush.msra.mxu0 %v341
      %2910 = vmatpush.msra.mxu0 %v340
      %2911 = vmatpush.msra.mxu0 %v339
      %2912 = vmatpush.msra.mxu0 %v338
      %2913 = vmatpush.msra.mxu0 %v337
      %2914 = vmatpush.msra.mxu0 %v336
      %2915 = vmatpush.msra.mxu0 %v335
      %2916 = vmatpush.msra.mxu0 %v334
      %2917 = vmatpush.msra.mxu0 %v333
      %2918 = vmatpush.msra.mxu0 %v332
      %2919 = vmatpush.msra.mxu0 %v331
      %2920 = vmatpush.msra.mxu0 %v330
      %2921 = vmatpush.msra.mxu0 %v329
      %2922 = vmatpush.msra.mxu0 %v328
      %2923 = vmatpush.msra.mxu0 %v327
      %2924 = vmatpush.msra.mxu0 %v326
      %2925 = vmatmul.f32.gmra.mxu0 %v2841
      %v2926 = vpop.f32.mrf.mxu0
      %v2927 = vadd.f32 %v2904, %v2926
      %2928 = vmatmul.f32.gmra.mxu0 %v2884
      %v2929 = vpop.f32.mrf.mxu0
      %v2930 = vadd.f32 %v2907, %v2929
      %2931 = vdwg.mxu0
      %2932 = vmatpush.msra.mxu0 %v357
      %2933 = vmatpush.msra.mxu0 %v356
      %2934 = vmatpush.msra.mxu0 %v355
      %2935 = vmatpush.msra.mxu0 %v354
      %2936 = vmatpush.msra.mxu0 %v353
      %2937 = vmatpush.msra.mxu0 %v352
      %2938 = vmatpush.msra.mxu0 %v351
      %2939 = vmatpush.msra.mxu0 %v350
      %2940 = vmatpush.msra.mxu0 %v349
      %2941 = vmatpush.msra.mxu0 %v348
      %2942 = vmatpush.msra.mxu0 %v347
      %2943 = vmatpush.msra.mxu0 %v346
      %2944 = vmatpush.msra.mxu0 %v345
      %2945 = vmatpush.msra.mxu0 %v344
      %2946 = vmatpush.msra.mxu0 %v343
      %2947 = vmatpush.msra.mxu0 %v342
      %2948 = vmatmul.f32.gmra.mxu0 %v2881
      %v2949 = vpop.f32.mrf.mxu0
      %v2950 = vadd.f32 %v2927, %v2949
      %2951 = vmatmul.f32.gmra.mxu0 %v2885
      %v2952 = vpop.f32.mrf.mxu0
      %v2953 = vadd.f32 %v2930, %v2952
      %2954 = vdwg.mxu0
      %v2955 = vmul.f32 %v2950, 0.0625
      %v2956 = vmul.f32 %v2953, 0.0625
      %v2957 = vmul.f32 %v2955, %v2955
      %v2958 = vsub.f32 %v2956, %v2957
      %v2959 = vmax.f32 %v2958, 0.0
      %v2960 = vadd.f32 %v2959, 1e-05
      %v2961 = vrsqrt.pop %v2960
      %v2962 = vmul.f32 %v2961, %v2960
      %v2963 = vmul.f32 %v2962, %v2961
      %v2964 = vmul.f32 0.5, %v2963
      %v2965 = vsub.f32 1.5, %v2964
      %v2966 = vmul.f32 %v2961, %v2965
      %vm2967 = vweird.f32 %v2960
      %vm2968 = vweird.f32 %v2961
      %vm2969 = vmor %vm2967, %vm2968
      %v2970 = vsel %vm2969, %v2961, %v2966
      %v2972 = vsel %vm671, %v2955, 0
      %v2975 = vsel %vm671, %v2970, 0
      %2977 = vmatpush.msra.mxu0 0.0
      %2978 = vmatpush.msra.mxu0 0.0
      %2979 = vmatpush.msra.mxu0 0.0
      %2980 = vmatpush.msra.mxu0 0.0
      %2981 = vmatpush.msra.mxu0 0.0
      %2982 = vmatpush.msra.mxu0 0.0
      %2983 = vmatpush.msra.mxu0 0.0
      %2984 = vmatpush.msra.mxu0 0.0
      %2985 = vmatpush.msra.mxu0 0.0
      %2986 = vmatpush.msra.mxu0 0.0
      %2987 = vmatpush.msra.mxu0 0.0
      %2988 = vmatpush.msra.mxu0 0.0
      %2989 = vmatpush.msra.mxu0 0.0
      %2990 = vmatpush.msra.mxu0 0.0
      %2991 = vmatpush.msra.mxu0 %v361
      %2992 = vmatpush.msra.mxu0 %v358
      %2993 = vmatmul.f32.gmra.mxu0 %v2972
      %v2994 = vpop.f32.mrf.mxu0
      %v2995 = vadd.f32 0.0, %v2994
      %2996 = vmatmul.f32.gmra.mxu0 %v2975
      %v2997 = vpop.f32.mrf.mxu0
      %v2998 = vadd.f32 0.0, %v2997
      %2999 = vdwg.mxu0
      %3000 = vmatpush.msra.mxu0 0.0
      %3001 = vmatpush.msra.mxu0 0.0
      %3002 = vmatpush.msra.mxu0 0.0
      %3003 = vmatpush.msra.mxu0 0.0
      %3004 = vmatpush.msra.mxu0 0.0
      %3005 = vmatpush.msra.mxu0 0.0
      %3006 = vmatpush.msra.mxu0 0.0
      %3007 = vmatpush.msra.mxu0 0.0
      %3008 = vmatpush.msra.mxu0 0.0
      %3009 = vmatpush.msra.mxu0 0.0
      %3010 = vmatpush.msra.mxu0 0.0
      %3011 = vmatpush.msra.mxu0 0.0
      %3012 = vmatpush.msra.mxu0 0.0
      %3013 = vmatpush.msra.mxu0 0.0
      %3014 = vmatpush.msra.mxu0 %v362
      %3015 = vmatpush.msra.mxu0 %v359
      %3016 = vmatmul.f32.gmra.mxu0 %v2972
      %v3017 = vpop.f32.mrf.mxu0
      %v3018 = vadd.f32 0.0, %v3017
      %3019 = vmatmul.f32.gmra.mxu0 %v2975
      %v3020 = vpop.f32.mrf.mxu0
      %v3021 = vadd.f32 0.0, %v3020
      %3022 = vdwg.mxu0
      %3023 = vmatpush.msra.mxu0 0.0
      %3024 = vmatpush.msra.mxu0 0.0
      %3025 = vmatpush.msra.mxu0 0.0
      %3026 = vmatpush.msra.mxu0 0.0
      %3027 = vmatpush.msra.mxu0 0.0
      %3028 = vmatpush.msra.mxu0 0.0
      %3029 = vmatpush.msra.mxu0 0.0
      %3030 = vmatpush.msra.mxu0 0.0
      %3031 = vmatpush.msra.mxu0 0.0
      %3032 = vmatpush.msra.mxu0 0.0
      %3033 = vmatpush.msra.mxu0 0.0
      %3034 = vmatpush.msra.mxu0 0.0
      %3035 = vmatpush.msra.mxu0 0.0
      %3036 = vmatpush.msra.mxu0 0.0
      %3037 = vmatpush.msra.mxu0 %v363
      %3038 = vmatpush.msra.mxu0 %v360
      %3039 = vmatmul.f32.gmra.mxu0 %v2972
      %v3040 = vpop.f32.mrf.mxu0
      %v3041 = vadd.f32 0.0, %v3040
      %3042 = vmatmul.f32.gmra.mxu0 %v2975
      %v3043 = vpop.f32.mrf.mxu0
      %v3044 = vadd.f32 0.0, %v3043
      %3045 = vdwg.mxu0
      %v3046 = vsub.f32 %v2801, %v2995
      %v3047 = vsub.f32 %v2841, %v3018
      %v3048 = vsub.f32 %v2881, %v3041
      %v3049 = vmul.f32 %v3046, %v2998
      %v3050 = vmul.f32 %v3047, %v3021
      %v3051 = vmul.f32 %v3048, %v3044
      %s3052 = scalar_lea.vmem %s2, 9
      %v3053 = vld [vmem:[%s3052] sm:$0x7]
      %v3055 = vperm.slane %v3053, 0
      %v3056 = vperm.slane %v3053, 1
      %v3057 = vperm.slane %v3053, 2
      %v3061 = vmul.f32 %v3049, %v3055
      %v3062 = vmul.f32 %v3050, %v3056
      %v3063 = vmul.f32 %v3051, %v3057
      %s3064 = scalar_lea.vmem %s3, 9
      %v3065 = vld [vmem:[%s3064] sm:$0x7]
      %v3067 = vperm.slane %v3065, 0
      %v3068 = vperm.slane %v3065, 1
      %v3069 = vperm.slane %v3065, 2
      %v3073 = vadd.f32 %v3061, %v3067
      %v3074 = vadd.f32 %v3062, %v3068
      %v3075 = vadd.f32 %v3063, %v3069
      %s3076 = scalar_lea.vmem %s4, 24
      %v3077 = vld [vmem:[%s3076] sm:$0xff]
      %vm3078 = vcmp.ge.f32.partialorder %v3073, 0.0
      %vm3079 = vcmp.ge.f32.partialorder %v3074, 0.0
      %vm3080 = vcmp.ge.f32.partialorder %v3075, 0.0
      %3082 = vset.pattern.permute.xlu0 0
      %3083 = vperm.xlu0 %3082, %v3077
      %v3084 = vpop.permute.xlu0 %3083
      %v3086 = vmul.f32 %v3084, %v3073
      %v3087 = vmul.f32 %v3084, %v3074
      %v3088 = vmul.f32 %v3084, %v3075
      %v3089 = vsel %vm3078, %v3073, %v3086
      %v3090 = vsel %vm3079, %v3074, %v3087
      %v3091 = vsel %vm3080, %v3075, %v3088
      %3092 = vst [vmem:[#allocation2 + $0x120] sm:$0xff] %v3089
      %3093 = vst [vmem:[#allocation2 + $0x128] sm:$0xff] %v3090
      %3094 = vst [vmem:[#allocation2 + $0x130] sm:$0xff] %v3091
      %v3095 = vld [vmem:[#allocation2] sm:$0xff]
      %v3096 = vld [vmem:[#allocation2 + $0x8] sm:$0xff]
      %v3097 = vld [vmem:[#allocation2 + $0x10] sm:$0xff]
      %v3098 = vld [vmem:[#allocation2 + $0x18] sm:$0xff]
      %v3099 = vld [vmem:[#allocation2 + $0x40] sm:$0xff]
      %v3100 = vld [vmem:[#allocation2 + $0x48] sm:$0xff]
      %v3101 = vld [vmem:[#allocation2 + $0x50] sm:$0xff]
      %v3102 = vld [vmem:[#allocation2 + $0x58] sm:$0xff]
      %v3103 = vld [vmem:[#allocation2 + $0x80] sm:$0xff]
      %v3104 = vld [vmem:[#allocation2 + $0x88] sm:$0xff]
      %v3105 = vld [vmem:[#allocation2 + $0x90] sm:$0xff]
      %v3106 = vld [vmem:[#allocation2 + $0x98] sm:$0xff]
      %v3107 = vld [vmem:[#allocation2 + $0xc0] sm:$0xff]
      %v3108 = vld [vmem:[#allocation2 + $0xc8] sm:$0xff]
      %v3109 = vld [vmem:[#allocation2 + $0xd0] sm:$0xff]
      %v3110 = vld [vmem:[#allocation2 + $0xd8] sm:$0xff]
      %v3111 = vld [vmem:[#allocation2 + $0x100] sm:$0xff]
      %v3112 = vld [vmem:[#allocation2 + $0x108] sm:$0xff]
      %v3113 = vld [vmem:[#allocation2 + $0x110] sm:$0xff]
      %v3114 = vld [vmem:[#allocation2 + $0x118] sm:$0xff]
      %3135 = vrot.lane.b32.xlu0 %v3095, 1
      %v3136 = vpop.permute.xlu0 %3135
      %3137 = vrot.lane.b32.xlu0 %v3096, 1
      %v3138 = vpop.permute.xlu0 %3137
      %3139 = vrot.lane.b32.xlu0 %v3097, 1
      %v3140 = vpop.permute.xlu0 %3139
      %3141 = vrot.lane.b32.xlu0 %v3098, 1
      %v3142 = vpop.permute.xlu0 %3141
      %3143 = vrot.lane.b32.xlu0 %v3099, 1
      %v3144 = vpop.permute.xlu0 %3143
      %3145 = vrot.lane.b32.xlu0 %v3100, 1
      %v3146 = vpop.permute.xlu0 %3145
      %3147 = vrot.lane.b32.xlu0 %v3101, 1
      %v3148 = vpop.permute.xlu0 %3147
      %3149 = vrot.lane.b32.xlu0 %v3102, 1
      %v3150 = vpop.permute.xlu0 %3149
      %3151 = vrot.lane.b32.xlu0 %v3103, 1
      %v3152 = vpop.permute.xlu0 %3151
      %3153 = vrot.lane.b32.xlu0 %v3104, 1
      %v3154 = vpop.permute.xlu0 %3153
      %3155 = vrot.lane.b32.xlu0 %v3105, 1
      %v3156 = vpop.permute.xlu0 %3155
      %3157 = vrot.lane.b32.xlu0 %v3106, 1
      %v3158 = vpop.permute.xlu0 %3157
      %3159 = vrot.lane.b32.xlu0 %v3107, 1
      %v3160 = vpop.permute.xlu0 %3159
      %3161 = vrot.lane.b32.xlu0 %v3108, 1
      %v3162 = vpop.permute.xlu0 %3161
      %3163 = vrot.lane.b32.xlu0 %v3109, 1
      %v3164 = vpop.permute.xlu0 %3163
      %3165 = vrot.lane.b32.xlu0 %v3110, 1
      %v3166 = vpop.permute.xlu0 %3165
      %3167 = vrot.lane.b32.xlu0 %v3111, 1
      %v3168 = vpop.permute.xlu0 %3167
      %3169 = vrot.lane.b32.xlu0 %v3112, 1
      %v3170 = vpop.permute.xlu0 %3169
      %3171 = vrot.lane.b32.xlu0 %v3113, 1
      %v3172 = vpop.permute.xlu0 %3171
      %3173 = vrot.lane.b32.xlu0 %v3114, 1
      %v3174 = vpop.permute.xlu0 %3173
      %v3175 = vsel %vm458, %v3136, %v3138
      %v3176 = vsel %vm458, %v3138, %v3140
      %v3177 = vsel %vm458, %v3140, %v3142
      %v3178 = vsel %vm458, %v3144, %v3146
      %v3179 = vsel %vm458, %v3146, %v3148
      %v3180 = vsel %vm458, %v3148, %v3150
      %v3181 = vsel %vm458, %v3152, %v3154
      %v3182 = vsel %vm458, %v3154, %v3156
      %v3183 = vsel %vm458, %v3156, %v3158
      %v3184 = vsel %vm458, %v3160, %v3162
      %v3185 = vsel %vm458, %v3162, %v3164
      %v3186 = vsel %vm458, %v3164, %v3166
      %v3187 = vsel %vm458, %v3168, %v3170
      %v3188 = vsel %vm458, %v3170, %v3172
      %v3189 = vsel %vm458, %v3172, %v3174
      %3205 = vst [vmem:[#allocation3] sm:$0xff] %v3175
      %3206 = vst [vmem:[#allocation3 + $0x8] sm:$0xff] %v3176
      %3207 = vst [vmem:[#allocation3 + $0x10] sm:$0xff] %v3177
      %3208 = vst [vmem:[#allocation3 + $0x18] sm:$0xff] %v3178
      %3209 = vst [vmem:[#allocation3 + $0x20] sm:$0xff] %v3179
      %3210 = vst [vmem:[#allocation3 + $0x28] sm:$0xff] %v3180
      %3211 = vst [vmem:[#allocation3 + $0x30] sm:$0xff] %v3181
      %3212 = vst [vmem:[#allocation3 + $0x38] sm:$0xff] %v3182
      %3213 = vst [vmem:[#allocation3 + $0x40] sm:$0xff] %v3183
      %3214 = vst [vmem:[#allocation3 + $0x48] sm:$0xff] %v3184
      %3215 = vst [vmem:[#allocation3 + $0x50] sm:$0xff] %v3185
      %3216 = vst [vmem:[#allocation3 + $0x58] sm:$0xff] %v3186
      %3217 = vst [vmem:[#allocation3 + $0x60] sm:$0xff] %v3187
      %3218 = vst [vmem:[#allocation3 + $0x68] sm:$0xff] %v3188
      %3219 = vst [vmem:[#allocation3 + $0x70] sm:$0xff] %v3189
      %v3220 = vld [vmem:[#allocation2 + $0x8] sm:$0xff]
      %v3221 = vld [vmem:[#allocation2 + $0x10] sm:$0xff]
      %v3222 = vld [vmem:[#allocation2 + $0x18] sm:$0xff]
      %v3223 = vld [vmem:[#allocation2 + $0x48] sm:$0xff]
      %v3224 = vld [vmem:[#allocation2 + $0x50] sm:$0xff]
      %v3225 = vld [vmem:[#allocation2 + $0x58] sm:$0xff]
      %v3226 = vld [vmem:[#allocation2 + $0x88] sm:$0xff]
      %v3227 = vld [vmem:[#allocation2 + $0x90] sm:$0xff]
      %v3228 = vld [vmem:[#allocation2 + $0x98] sm:$0xff]
      %v3229 = vld [vmem:[#allocation2 + $0xc8] sm:$0xff]
      %v3230 = vld [vmem:[#allocation2 + $0xd0] sm:$0xff]
      %v3231 = vld [vmem:[#allocation2 + $0xd8] sm:$0xff]
      %v3232 = vld [vmem:[#allocation2 + $0x108] sm:$0xff]
      %v3233 = vld [vmem:[#allocation2 + $0x110] sm:$0xff]
      %v3234 = vld [vmem:[#allocation2 + $0x118] sm:$0xff]
      %3235 = vst [vmem:[#allocation3 + $0x78] sm:$0xff] %v3220
      %3236 = vst [vmem:[#allocation3 + $0x80] sm:$0xff] %v3221
      %3237 = vst [vmem:[#allocation3 + $0x88] sm:$0xff] %v3222
      %3238 = vst [vmem:[#allocation3 + $0x90] sm:$0xff] %v3223
      %3239 = vst [vmem:[#allocation3 + $0x98] sm:$0xff] %v3224
      %3240 = vst [vmem:[#allocation3 + $0xa0] sm:$0xff] %v3225
      %3241 = vst [vmem:[#allocation3 + $0xa8] sm:$0xff] %v3226
      %3242 = vst [vmem:[#allocation3 + $0xb0] sm:$0xff] %v3227
      %3243 = vst [vmem:[#allocation3 + $0xb8] sm:$0xff] %v3228
      %3244 = vst [vmem:[#allocation3 + $0xc0] sm:$0xff] %v3229
      %3245 = vst [vmem:[#allocation3 + $0xc8] sm:$0xff] %v3230
      %3246 = vst [vmem:[#allocation3 + $0xd0] sm:$0xff] %v3231
      %3247 = vst [vmem:[#allocation3 + $0xd8] sm:$0xff] %v3232
      %3248 = vst [vmem:[#allocation3 + $0xe0] sm:$0xff] %v3233
      %3249 = vst [vmem:[#allocation3 + $0xe8] sm:$0xff] %v3234
      %v3250 = vld [vmem:[#allocation2 + $0x8] sm:$0xff]
      %v3251 = vld [vmem:[#allocation2 + $0x10] sm:$0xff]
      %v3252 = vld [vmem:[#allocation2 + $0x18] sm:$0xff]
      %v3253 = vld [vmem:[#allocation2 + $0x20] sm:$0xff]
      %v3254 = vld [vmem:[#allocation2 + $0x48] sm:$0xff]
      %v3255 = vld [vmem:[#allocation2 + $0x50] sm:$0xff]
      %v3256 = vld [vmem:[#allocation2 + $0x58] sm:$0xff]
      %v3257 = vld [vmem:[#allocation2 + $0x60] sm:$0xff]
      %v3258 = vld [vmem:[#allocation2 + $0x88] sm:$0xff]
      %v3259 = vld [vmem:[#allocation2 + $0x90] sm:$0xff]
      %v3260 = vld [vmem:[#allocation2 + $0x98] sm:$0xff]
      %v3261 = vld [vmem:[#allocation2 + $0xa0] sm:$0xff]
      %v3262 = vld [vmem:[#allocation2 + $0xc8] sm:$0xff]
      %v3263 = vld [vmem:[#allocation2 + $0xd0] sm:$0xff]
      %v3264 = vld [vmem:[#allocation2 + $0xd8] sm:$0xff]
      %v3265 = vld [vmem:[#allocation2 + $0xe0] sm:$0xff]
      %v3266 = vld [vmem:[#allocation2 + $0x108] sm:$0xff]
      %v3267 = vld [vmem:[#allocation2 + $0x110] sm:$0xff]
      %v3268 = vld [vmem:[#allocation2 + $0x118] sm:$0xff]
      %v3269 = vld [vmem:[#allocation2 + $0x120] sm:$0xff]
      %3290 = vrot.lane.b32.xlu0 %v3250, 127
      %v3291 = vpop.permute.xlu0 %3290
      %3292 = vrot.lane.b32.xlu0 %v3251, 127
      %v3293 = vpop.permute.xlu0 %3292
      %3294 = vrot.lane.b32.xlu0 %v3252, 127
      %v3295 = vpop.permute.xlu0 %3294
      %3296 = vrot.lane.b32.xlu0 %v3253, 127
      %v3297 = vpop.permute.xlu0 %3296
      %3298 = vrot.lane.b32.xlu0 %v3254, 127
      %v3299 = vpop.permute.xlu0 %3298
      %3300 = vrot.lane.b32.xlu0 %v3255, 127
      %v3301 = vpop.permute.xlu0 %3300
      %3302 = vrot.lane.b32.xlu0 %v3256, 127
      %v3303 = vpop.permute.xlu0 %3302
      %3304 = vrot.lane.b32.xlu0 %v3257, 127
      %v3305 = vpop.permute.xlu0 %3304
      %3306 = vrot.lane.b32.xlu0 %v3258, 127
      %v3307 = vpop.permute.xlu0 %3306
      %3308 = vrot.lane.b32.xlu0 %v3259, 127
      %v3309 = vpop.permute.xlu0 %3308
      %3310 = vrot.lane.b32.xlu0 %v3260, 127
      %v3311 = vpop.permute.xlu0 %3310
      %3312 = vrot.lane.b32.xlu0 %v3261, 127
      %v3313 = vpop.permute.xlu0 %3312
      %3314 = vrot.lane.b32.xlu0 %v3262, 127
      %v3315 = vpop.permute.xlu0 %3314
      %3316 = vrot.lane.b32.xlu0 %v3263, 127
      %v3317 = vpop.permute.xlu0 %3316
      %3318 = vrot.lane.b32.xlu0 %v3264, 127
      %v3319 = vpop.permute.xlu0 %3318
      %3320 = vrot.lane.b32.xlu0 %v3265, 127
      %v3321 = vpop.permute.xlu0 %3320
      %3322 = vrot.lane.b32.xlu0 %v3266, 127
      %v3323 = vpop.permute.xlu0 %3322
      %3324 = vrot.lane.b32.xlu0 %v3267, 127
      %v3325 = vpop.permute.xlu0 %3324
      %3326 = vrot.lane.b32.xlu0 %v3268, 127
      %v3327 = vpop.permute.xlu0 %3326
      %3328 = vrot.lane.b32.xlu0 %v3269, 127
      %v3329 = vpop.permute.xlu0 %3328
      %v3330 = vsel %vm490, %v3291, %v3293
      %v3331 = vsel %vm490, %v3293, %v3295
      %v3332 = vsel %vm490, %v3295, %v3297
      %v3333 = vsel %vm490, %v3299, %v3301
      %v3334 = vsel %vm490, %v3301, %v3303
      %v3335 = vsel %vm490, %v3303, %v3305
      %v3336 = vsel %vm490, %v3307, %v3309
      %v3337 = vsel %vm490, %v3309, %v3311
      %v3338 = vsel %vm490, %v3311, %v3313
      %v3339 = vsel %vm490, %v3315, %v3317
      %v3340 = vsel %vm490, %v3317, %v3319
      %v3341 = vsel %vm490, %v3319, %v3321
      %v3342 = vsel %vm490, %v3323, %v3325
      %v3343 = vsel %vm490, %v3325, %v3327
      %v3344 = vsel %vm490, %v3327, %v3329
      %3360 = vst [vmem:[#allocation3 + $0xf0] sm:$0xff] %v3330
      %3361 = vst [vmem:[#allocation3 + $0xf8] sm:$0xff] %v3331
      %3362 = vst [vmem:[#allocation3 + $0x100] sm:$0xff] %v3332
      %3363 = vst [vmem:[#allocation3 + $0x108] sm:$0xff] %v3333
      %3364 = vst [vmem:[#allocation3 + $0x110] sm:$0xff] %v3334
      %3365 = vst [vmem:[#allocation3 + $0x118] sm:$0xff] %v3335
      %3366 = vst [vmem:[#allocation3 + $0x120] sm:$0xff] %v3336
      %3367 = vst [vmem:[#allocation3 + $0x128] sm:$0xff] %v3337
      %3368 = vst [vmem:[#allocation3 + $0x130] sm:$0xff] %v3338
      %3369 = vst [vmem:[#allocation3 + $0x138] sm:$0xff] %v3339
      %3370 = vst [vmem:[#allocation3 + $0x140] sm:$0xff] %v3340
      %3371 = vst [vmem:[#allocation3 + $0x148] sm:$0xff] %v3341
      %3372 = vst [vmem:[#allocation3 + $0x150] sm:$0xff] %v3342
      %3373 = vst [vmem:[#allocation3 + $0x158] sm:$0xff] %v3343
      %3374 = vst [vmem:[#allocation3 + $0x160] sm:$0xff] %v3344
      %v3375 = vld [vmem:[#allocation2 + $0x18] sm:$0xff]
      %v3376 = vld [vmem:[#allocation2 + $0x20] sm:$0xff]
      %v3377 = vld [vmem:[#allocation2 + $0x28] sm:$0xff]
      %v3378 = vld [vmem:[#allocation2 + $0x30] sm:$0xff]
      %v3379 = vld [vmem:[#allocation2 + $0x58] sm:$0xff]
      %v3380 = vld [vmem:[#allocation2 + $0x60] sm:$0xff]
      %v3381 = vld [vmem:[#allocation2 + $0x68] sm:$0xff]
      %v3382 = vld [vmem:[#allocation2 + $0x70] sm:$0xff]
      %v3383 = vld [vmem:[#allocation2 + $0x98] sm:$0xff]
      %v3384 = vld [vmem:[#allocation2 + $0xa0] sm:$0xff]
      %v3385 = vld [vmem:[#allocation2 + $0xa8] sm:$0xff]
      %v3386 = vld [vmem:[#allocation2 + $0xb0] sm:$0xff]
      %v3387 = vld [vmem:[#allocation2 + $0xd8] sm:$0xff]
      %v3388 = vld [vmem:[#allocation2 + $0xe0] sm:$0xff]
      %v3389 = vld [vmem:[#allocation2 + $0xe8] sm:$0xff]
      %v3390 = vld [vmem:[#allocation2 + $0xf0] sm:$0xff]
      %v3391 = vld [vmem:[#allocation2 + $0x118] sm:$0xff]
      %v3392 = vld [vmem:[#allocation2 + $0x120] sm:$0xff]
      %v3393 = vld [vmem:[#allocation2 + $0x128] sm:$0xff]
      %v3394 = vld [vmem:[#allocation2 + $0x130] sm:$0xff]
      %3415 = vrot.lane.b32.xlu0 %v3375, 1
      %v3416 = vpop.permute.xlu0 %3415
      %3417 = vrot.lane.b32.xlu0 %v3376, 1
      %v3418 = vpop.permute.xlu0 %3417
      %3419 = vrot.lane.b32.xlu0 %v3377, 1
      %v3420 = vpop.permute.xlu0 %3419
      %3421 = vrot.lane.b32.xlu0 %v3378, 1
      %v3422 = vpop.permute.xlu0 %3421
      %3423 = vrot.lane.b32.xlu0 %v3379, 1
      %v3424 = vpop.permute.xlu0 %3423
      %3425 = vrot.lane.b32.xlu0 %v3380, 1
      %v3426 = vpop.permute.xlu0 %3425
      %3427 = vrot.lane.b32.xlu0 %v3381, 1
      %v3428 = vpop.permute.xlu0 %3427
      %3429 = vrot.lane.b32.xlu0 %v3382, 1
      %v3430 = vpop.permute.xlu0 %3429
      %3431 = vrot.lane.b32.xlu0 %v3383, 1
      %v3432 = vpop.permute.xlu0 %3431
      %3433 = vrot.lane.b32.xlu0 %v3384, 1
      %v3434 = vpop.permute.xlu0 %3433
      %3435 = vrot.lane.b32.xlu0 %v3385, 1
      %v3436 = vpop.permute.xlu0 %3435
      %3437 = vrot.lane.b32.xlu0 %v3386, 1
      %v3438 = vpop.permute.xlu0 %3437
      %3439 = vrot.lane.b32.xlu0 %v3387, 1
      %v3440 = vpop.permute.xlu0 %3439
      %3441 = vrot.lane.b32.xlu0 %v3388, 1
      %v3442 = vpop.permute.xlu0 %3441
      %3443 = vrot.lane.b32.xlu0 %v3389, 1
      %v3444 = vpop.permute.xlu0 %3443
      %3445 = vrot.lane.b32.xlu0 %v3390, 1
      %v3446 = vpop.permute.xlu0 %3445
      %3447 = vrot.lane.b32.xlu0 %v3391, 1
      %v3448 = vpop.permute.xlu0 %3447
      %3449 = vrot.lane.b32.xlu0 %v3392, 1
      %v3450 = vpop.permute.xlu0 %3449
      %3451 = vrot.lane.b32.xlu0 %v3393, 1
      %v3452 = vpop.permute.xlu0 %3451
      %3453 = vrot.lane.b32.xlu0 %v3394, 1
      %v3454 = vpop.permute.xlu0 %3453
      %v3455 = vsel %vm458, %v3416, %v3418
      %v3456 = vsel %vm458, %v3418, %v3420
      %v3457 = vsel %vm458, %v3420, %v3422
      %v3458 = vsel %vm458, %v3424, %v3426
      %v3459 = vsel %vm458, %v3426, %v3428
      %v3460 = vsel %vm458, %v3428, %v3430
      %v3461 = vsel %vm458, %v3432, %v3434
      %v3462 = vsel %vm458, %v3434, %v3436
      %v3463 = vsel %vm458, %v3436, %v3438
      %v3464 = vsel %vm458, %v3440, %v3442
      %v3465 = vsel %vm458, %v3442, %v3444
      %v3466 = vsel %vm458, %v3444, %v3446
      %v3467 = vsel %vm458, %v3448, %v3450
      %v3468 = vsel %vm458, %v3450, %v3452
      %v3469 = vsel %vm458, %v3452, %v3454
      %3485 = vst [vmem:[#allocation3 + $0x168] sm:$0xff] %v3455
      %3486 = vst [vmem:[#allocation3 + $0x170] sm:$0xff] %v3456
      %3487 = vst [vmem:[#allocation3 + $0x178] sm:$0xff] %v3457
      %3488 = vst [vmem:[#allocation3 + $0x180] sm:$0xff] %v3458
      %3489 = vst [vmem:[#allocation3 + $0x188] sm:$0xff] %v3459
      %3490 = vst [vmem:[#allocation3 + $0x190] sm:$0xff] %v3460
      %3491 = vst [vmem:[#allocation3 + $0x198] sm:$0xff] %v3461
      %3492 = vst [vmem:[#allocation3 + $0x1a0] sm:$0xff] %v3462
      %3493 = vst [vmem:[#allocation3 + $0x1a8] sm:$0xff] %v3463
      %3494 = vst [vmem:[#allocation3 + $0x1b0] sm:$0xff] %v3464
      %3495 = vst [vmem:[#allocation3 + $0x1b8] sm:$0xff] %v3465
      %3496 = vst [vmem:[#allocation3 + $0x1c0] sm:$0xff] %v3466
      %3497 = vst [vmem:[#allocation3 + $0x1c8] sm:$0xff] %v3467
      %3498 = vst [vmem:[#allocation3 + $0x1d0] sm:$0xff] %v3468
      %3499 = vst [vmem:[#allocation3 + $0x1d8] sm:$0xff] %v3469
      %v3500 = vld [vmem:[#allocation2 + $0x20] sm:$0xff]
      %v3501 = vld [vmem:[#allocation2 + $0x28] sm:$0xff]
      %v3502 = vld [vmem:[#allocation2 + $0x30] sm:$0xff]
      %v3503 = vld [vmem:[#allocation2 + $0x60] sm:$0xff]
      %v3504 = vld [vmem:[#allocation2 + $0x68] sm:$0xff]
      %v3505 = vld [vmem:[#allocation2 + $0x70] sm:$0xff]
      %v3506 = vld [vmem:[#allocation2 + $0xa0] sm:$0xff]
      %v3507 = vld [vmem:[#allocation2 + $0xa8] sm:$0xff]
      %v3508 = vld [vmem:[#allocation2 + $0xb0] sm:$0xff]
      %v3509 = vld [vmem:[#allocation2 + $0xe0] sm:$0xff]
      %v3510 = vld [vmem:[#allocation2 + $0xe8] sm:$0xff]
      %v3511 = vld [vmem:[#allocation2 + $0xf0] sm:$0xff]
      %v3512 = vld [vmem:[#allocation2 + $0x120] sm:$0xff]
      %v3513 = vld [vmem:[#allocation2 + $0x128] sm:$0xff]
      %v3514 = vld [vmem:[#allocation2 + $0x130] sm:$0xff]
      %3515 = vst [vmem:[#allocation3 + $0x1e0] sm:$0xff] %v3500
      %3516 = vst [vmem:[#allocation3 + $0x1e8] sm:$0xff] %v3501
      %3517 = vst [vmem:[#allocation3 + $0x1f0] sm:$0xff] %v3502
      %3518 = vst [vmem:[#allocation3 + $0x1f8] sm:$0xff] %v3503
      %3519 = vst [vmem:[#allocation3 + $0x200] sm:$0xff] %v3504
      %3520 = vst [vmem:[#allocation3 + $0x208] sm:$0xff] %v3505
      %3521 = vst [vmem:[#allocation3 + $0x210] sm:$0xff] %v3506
      %3522 = vst [vmem:[#allocation3 + $0x218] sm:$0xff] %v3507
      %3523 = vst [vmem:[#allocation3 + $0x220] sm:$0xff] %v3508
      %3524 = vst [vmem:[#allocation3 + $0x228] sm:$0xff] %v3509
      %3525 = vst [vmem:[#allocation3 + $0x230] sm:$0xff] %v3510
      %3526 = vst [vmem:[#allocation3 + $0x238] sm:$0xff] %v3511
      %3527 = vst [vmem:[#allocation3 + $0x240] sm:$0xff] %v3512
      %3528 = vst [vmem:[#allocation3 + $0x248] sm:$0xff] %v3513
      %3529 = vst [vmem:[#allocation3 + $0x250] sm:$0xff] %v3514
      %v3530 = vld [vmem:[#allocation2 + $0x20] sm:$0xff]
      %v3531 = vld [vmem:[#allocation2 + $0x28] sm:$0xff]
      %v3532 = vld [vmem:[#allocation2 + $0x30] sm:$0xff]
      %v3533 = vld [vmem:[#allocation2 + $0x38] sm:$0xff]
      %v3534 = vld [vmem:[#allocation2 + $0x60] sm:$0xff]
      %v3535 = vld [vmem:[#allocation2 + $0x68] sm:$0xff]
      %v3536 = vld [vmem:[#allocation2 + $0x70] sm:$0xff]
      %v3537 = vld [vmem:[#allocation2 + $0x78] sm:$0xff]
      %v3538 = vld [vmem:[#allocation2 + $0xa0] sm:$0xff]
      %v3539 = vld [vmem:[#allocation2 + $0xa8] sm:$0xff]
      %v3540 = vld [vmem:[#allocation2 + $0xb0] sm:$0xff]
      %v3541 = vld [vmem:[#allocation2 + $0xb8] sm:$0xff]
      %v3542 = vld [vmem:[#allocation2 + $0xe0] sm:$0xff]
      %v3543 = vld [vmem:[#allocation2 + $0xe8] sm:$0xff]
      %v3544 = vld [vmem:[#allocation2 + $0xf0] sm:$0xff]
      %v3545 = vld [vmem:[#allocation2 + $0xf8] sm:$0xff]
      %v3546 = vld [vmem:[#allocation2 + $0x120] sm:$0xff]
      %v3547 = vld [vmem:[#allocation2 + $0x128] sm:$0xff]
      %v3548 = vld [vmem:[#allocation2 + $0x130] sm:$0xff]
      %v3549 = vld [vmem:[#allocation2 + $0x138] sm:$0xff]
      %3570 = vrot.lane.b32.xlu0 %v3530, 127
      %v3571 = vpop.permute.xlu0 %3570
      %3572 = vrot.lane.b32.xlu0 %v3531, 127
      %v3573 = vpop.permute.xlu0 %3572
      %3574 = vrot.lane.b32.xlu0 %v3532, 127
      %v3575 = vpop.permute.xlu0 %3574
      %3576 = vrot.lane.b32.xlu0 %v3533, 127
      %v3577 = vpop.permute.xlu0 %3576
      %3578 = vrot.lane.b32.xlu0 %v3534, 127
      %v3579 = vpop.permute.xlu0 %3578
      %3580 = vrot.lane.b32.xlu0 %v3535, 127
      %v3581 = vpop.permute.xlu0 %3580
      %3582 = vrot.lane.b32.xlu0 %v3536, 127
      %v3583 = vpop.permute.xlu0 %3582
      %3584 = vrot.lane.b32.xlu0 %v3537, 127
      %v3585 = vpop.permute.xlu0 %3584
      %3586 = vrot.lane.b32.xlu0 %v3538, 127
      %v3587 = vpop.permute.xlu0 %3586
      %3588 = vrot.lane.b32.xlu0 %v3539, 127
      %v3589 = vpop.permute.xlu0 %3588
      %3590 = vrot.lane.b32.xlu0 %v3540, 127
      %v3591 = vpop.permute.xlu0 %3590
      %3592 = vrot.lane.b32.xlu0 %v3541, 127
      %v3593 = vpop.permute.xlu0 %3592
      %3594 = vrot.lane.b32.xlu0 %v3542, 127
      %v3595 = vpop.permute.xlu0 %3594
      %3596 = vrot.lane.b32.xlu0 %v3543, 127
      %v3597 = vpop.permute.xlu0 %3596
      %3598 = vrot.lane.b32.xlu0 %v3544, 127
      %v3599 = vpop.permute.xlu0 %3598
      %3600 = vrot.lane.b32.xlu0 %v3545, 127
      %v3601 = vpop.permute.xlu0 %3600
      %3602 = vrot.lane.b32.xlu0 %v3546, 127
      %v3603 = vpop.permute.xlu0 %3602
      %3604 = vrot.lane.b32.xlu0 %v3547, 127
      %v3605 = vpop.permute.xlu0 %3604
      %3606 = vrot.lane.b32.xlu0 %v3548, 127
      %v3607 = vpop.permute.xlu0 %3606
      %3608 = vrot.lane.b32.xlu0 %v3549, 127
      %v3609 = vpop.permute.xlu0 %3608
      %v3610 = vsel %vm490, %v3571, %v3573
      %v3611 = vsel %vm490, %v3573, %v3575
      %v3612 = vsel %vm490, %v3575, %v3577
      %v3613 = vsel %vm490, %v3579, %v3581
      %v3614 = vsel %vm490, %v3581, %v3583
      %v3615 = vsel %vm490, %v3583, %v3585
      %v3616 = vsel %vm490, %v3587, %v3589
      %v3617 = vsel %vm490, %v3589, %v3591
      %v3618 = vsel %vm490, %v3591, %v3593
      %v3619 = vsel %vm490, %v3595, %v3597
      %v3620 = vsel %vm490, %v3597, %v3599
      %v3621 = vsel %vm490, %v3599, %v3601
      %v3622 = vsel %vm490, %v3603, %v3605
      %v3623 = vsel %vm490, %v3605, %v3607
      %v3624 = vsel %vm490, %v3607, %v3609
      %3640 = vst [vmem:[#allocation3 + $0x258] sm:$0xff] %v3610
      %3641 = vst [vmem:[#allocation3 + $0x260] sm:$0xff] %v3611
      %3642 = vst [vmem:[#allocation3 + $0x268] sm:$0xff] %v3612
      %3643 = vst [vmem:[#allocation3 + $0x270] sm:$0xff] %v3613
      %3644 = vst [vmem:[#allocation3 + $0x278] sm:$0xff] %v3614
      %3645 = vst [vmem:[#allocation3 + $0x280] sm:$0xff] %v3615
      %3646 = vst [vmem:[#allocation3 + $0x288] sm:$0xff] %v3616
      %3647 = vst [vmem:[#allocation3 + $0x290] sm:$0xff] %v3617
      %3648 = vst [vmem:[#allocation3 + $0x298] sm:$0xff] %v3618
      %3649 = vst [vmem:[#allocation3 + $0x2a0] sm:$0xff] %v3619
      %3650 = vst [vmem:[#allocation3 + $0x2a8] sm:$0xff] %v3620
      %3651 = vst [vmem:[#allocation3 + $0x2b0] sm:$0xff] %v3621
      %3652 = vst [vmem:[#allocation3 + $0x2b8] sm:$0xff] %v3622
      %3653 = vst [vmem:[#allocation3 + $0x2c0] sm:$0xff] %v3623
      %3654 = vst [vmem:[#allocation3 + $0x2c8] sm:$0xff] %v3624
      %s3655 = scalar_lea.vmem %s1, 64
      %v3656 = vld [vmem:[%s3655] sm:$0xff]
      %v3657 = vld [vmem:[%s3655 + $0x8] sm:$0xff]
      %v3658 = vld [vmem:[#allocation3] sm:$0xff]
      %v3659 = vld [vmem:[#allocation3 + $0x8] sm:$0xff]
      %v3660 = vld [vmem:[#allocation3 + $0x10] sm:$0xff]
      %v3661 = vld [vmem:[#allocation3 + $0x18] sm:$0xff]
      %v3662 = vld [vmem:[#allocation3 + $0x20] sm:$0xff]
      %v3663 = vld [vmem:[#allocation3 + $0x28] sm:$0xff]
      %v3664 = vld [vmem:[#allocation3 + $0x30] sm:$0xff]
      %v3665 = vld [vmem:[#allocation3 + $0x38] sm:$0xff]
      %v3666 = vld [vmem:[#allocation3 + $0x40] sm:$0xff]
      %v3667 = vld [vmem:[#allocation3 + $0x48] sm:$0xff]
      %v3668 = vld [vmem:[#allocation3 + $0x50] sm:$0xff]
      %v3669 = vld [vmem:[#allocation3 + $0x58] sm:$0xff]
      %v3670 = vld [vmem:[#allocation3 + $0x60] sm:$0xff]
      %v3671 = vld [vmem:[#allocation3 + $0x68] sm:$0xff]
      %v3672 = vld [vmem:[#allocation3 + $0x70] sm:$0xff]
      %v3673 = vld [vmem:[#allocation3 + $0x78] sm:$0xff]
      %v3674 = vld [vmem:[#allocation3 + $0x80] sm:$0xff]
      %v3675 = vld [vmem:[#allocation3 + $0x88] sm:$0xff]
      %v3676 = vld [vmem:[#allocation3 + $0x90] sm:$0xff]
      %v3677 = vld [vmem:[#allocation3 + $0x98] sm:$0xff]
      %v3678 = vld [vmem:[#allocation3 + $0xa0] sm:$0xff]
      %v3679 = vld [vmem:[#allocation3 + $0xa8] sm:$0xff]
      %v3680 = vld [vmem:[#allocation3 + $0xb0] sm:$0xff]
      %v3681 = vld [vmem:[#allocation3 + $0xb8] sm:$0xff]
      %v3682 = vld [vmem:[#allocation3 + $0xc0] sm:$0xff]
      %v3683 = vld [vmem:[#allocation3 + $0xc8] sm:$0xff]
      %v3684 = vld [vmem:[#allocation3 + $0xd0] sm:$0xff]
      %v3685 = vld [vmem:[#allocation3 + $0xd8] sm:$0xff]
      %v3686 = vld [vmem:[#allocation3 + $0xe0] sm:$0xff]
      %v3687 = vld [vmem:[#allocation3 + $0xe8] sm:$0xff]
      %v3688 = vld [vmem:[#allocation3 + $0xf0] sm:$0xff]
      %v3689 = vld [vmem:[#allocation3 + $0xf8] sm:$0xff]
      %v3690 = vld [vmem:[#allocation3 + $0x100] sm:$0xff]
      %v3691 = vld [vmem:[#allocation3 + $0x108] sm:$0xff]
      %v3692 = vld [vmem:[#allocation3 + $0x110] sm:$0xff]
      %v3693 = vld [vmem:[#allocation3 + $0x118] sm:$0xff]
      %v3694 = vld [vmem:[#allocation3 + $0x120] sm:$0xff]
      %v3695 = vld [vmem:[#allocation3 + $0x128] sm:$0xff]
      %v3696 = vld [vmem:[#allocation3 + $0x130] sm:$0xff]
      %v3697 = vld [vmem:[#allocation3 + $0x138] sm:$0xff]
      %v3698 = vld [vmem:[#allocation3 + $0x140] sm:$0xff]
      %v3699 = vld [vmem:[#allocation3 + $0x148] sm:$0xff]
      %v3700 = vld [vmem:[#allocation3 + $0x150] sm:$0xff]
      %v3701 = vld [vmem:[#allocation3 + $0x158] sm:$0xff]
      %v3702 = vld [vmem:[#allocation3 + $0x160] sm:$0xff]
      %v3703 = vld [vmem:[#allocation3 + $0x168] sm:$0xff]
      %v3704 = vld [vmem:[#allocation3 + $0x170] sm:$0xff]
      %v3705 = vld [vmem:[#allocation3 + $0x178] sm:$0xff]
      %v3706 = vld [vmem:[#allocation3 + $0x180] sm:$0xff]
      %v3707 = vld [vmem:[#allocation3 + $0x188] sm:$0xff]
      %v3708 = vld [vmem:[#allocation3 + $0x190] sm:$0xff]
      %v3709 = vld [vmem:[#allocation3 + $0x198] sm:$0xff]
      %v3710 = vld [vmem:[#allocation3 + $0x1a0] sm:$0xff]
      %v3711 = vld [vmem:[#allocation3 + $0x1a8] sm:$0xff]
      %v3712 = vld [vmem:[#allocation3 + $0x1b0] sm:$0xff]
      %v3713 = vld [vmem:[#allocation3 + $0x1b8] sm:$0xff]
      %v3714 = vld [vmem:[#allocation3 + $0x1c0] sm:$0xff]
      %v3715 = vld [vmem:[#allocation3 + $0x1c8] sm:$0xff]
      %v3716 = vld [vmem:[#allocation3 + $0x1d0] sm:$0xff]
      %v3717 = vld [vmem:[#allocation3 + $0x1d8] sm:$0xff]
      %v3718 = vld [vmem:[#allocation3 + $0x1e0] sm:$0xff]
      %v3719 = vld [vmem:[#allocation3 + $0x1e8] sm:$0xff]
      %v3720 = vld [vmem:[#allocation3 + $0x1f0] sm:$0xff]
      %v3721 = vld [vmem:[#allocation3 + $0x1f8] sm:$0xff]
      %v3722 = vld [vmem:[#allocation3 + $0x200] sm:$0xff]
      %v3723 = vld [vmem:[#allocation3 + $0x208] sm:$0xff]
      %v3724 = vld [vmem:[#allocation3 + $0x210] sm:$0xff]
      %v3725 = vld [vmem:[#allocation3 + $0x218] sm:$0xff]
      %v3726 = vld [vmem:[#allocation3 + $0x220] sm:$0xff]
      %v3727 = vld [vmem:[#allocation3 + $0x228] sm:$0xff]
      %v3728 = vld [vmem:[#allocation3 + $0x230] sm:$0xff]
      %v3729 = vld [vmem:[#allocation3 + $0x238] sm:$0xff]
      %v3730 = vld [vmem:[#allocation3 + $0x240] sm:$0xff]
      %v3731 = vld [vmem:[#allocation3 + $0x248] sm:$0xff]
      %v3732 = vld [vmem:[#allocation3 + $0x250] sm:$0xff]
      %v3733 = vld [vmem:[#allocation3 + $0x258] sm:$0xff]
      %v3734 = vld [vmem:[#allocation3 + $0x260] sm:$0xff]
      %v3735 = vld [vmem:[#allocation3 + $0x268] sm:$0xff]
      %v3736 = vld [vmem:[#allocation3 + $0x270] sm:$0xff]
      %v3737 = vld [vmem:[#allocation3 + $0x278] sm:$0xff]
      %v3738 = vld [vmem:[#allocation3 + $0x280] sm:$0xff]
      %v3739 = vld [vmem:[#allocation3 + $0x288] sm:$0xff]
      %v3740 = vld [vmem:[#allocation3 + $0x290] sm:$0xff]
      %v3741 = vld [vmem:[#allocation3 + $0x298] sm:$0xff]
      %v3742 = vld [vmem:[#allocation3 + $0x2a0] sm:$0xff]
      %v3743 = vld [vmem:[#allocation3 + $0x2a8] sm:$0xff]
      %v3744 = vld [vmem:[#allocation3 + $0x2b0] sm:$0xff]
      %v3745 = vld [vmem:[#allocation3 + $0x2b8] sm:$0xff]
      %v3746 = vld [vmem:[#allocation3 + $0x2c0] sm:$0xff]
      %v3747 = vld [vmem:[#allocation3 + $0x2c8] sm:$0xff]
      %vm3748 = vcmask 916480
      %v3750 = vsel %vm3748, %v3657, 0
      %3752 = vmatpush.msra.mxu0 %v3703
      %3753 = vmatpush.msra.mxu0 %v3700
      %3754 = vmatpush.msra.mxu0 %v3697
      %3755 = vmatpush.msra.mxu0 %v3694
      %3756 = vmatpush.msra.mxu0 %v3691
      %3757 = vmatpush.msra.mxu0 %v3688
      %3758 = vmatpush.msra.mxu0 %v3685
      %3759 = vmatpush.msra.mxu0 %v3682
      %3760 = vmatpush.msra.mxu0 %v3679
      %3761 = vmatpush.msra.mxu0 %v3676
      %3762 = vmatpush.msra.mxu0 %v3673
      %3763 = vmatpush.msra.mxu0 %v3670
      %3764 = vmatpush.msra.mxu0 %v3667
      %3765 = vmatpush.msra.mxu0 %v3664
      %3766 = vmatpush.msra.mxu0 %v3661
      %3767 = vmatpush.msra.mxu0 %v3658
      %3768 = vmatmul.f32.gmra.mxu0 %v3656
      %v3769 = vpop.f32.mrf.mxu0
      %v3770 = vadd.f32 0.0, %v3769
      %3771 = vdwg.mxu0
      %3772 = vmatpush.msra.mxu0 0.0
      %3773 = vmatpush.msra.mxu0 0.0
      %3774 = vmatpush.msra.mxu0 %v3745
      %3775 = vmatpush.msra.mxu0 %v3742
      %3776 = vmatpush.msra.mxu0 %v3739
      %3777 = vmatpush.msra.mxu0 %v3736
      %3778 = vmatpush.msra.mxu0 %v3733
      %3779 = vmatpush.msra.mxu0 %v3730
      %3780 = vmatpush.msra.mxu0 %v3727
      %3781 = vmatpush.msra.mxu0 %v3724
      %3782 = vmatpush.msra.mxu0 %v3721
      %3783 = vmatpush.msra.mxu0 %v3718
      %3784 = vmatpush.msra.mxu0 %v3715
      %3785 = vmatpush.msra.mxu0 %v3712
      %3786 = vmatpush.msra.mxu0 %v3709
      %3787 = vmatpush.msra.mxu0 %v3706
      %3788 = vmatmul.f32.gmra.mxu0 %v3750
      %v3789 = vpop.f32.mrf.mxu0
      %v3790 = vadd.f32 %v3770, %v3789
      %3791 = vdwg.mxu0
      %3792 = vmatpush.msra.mxu0 %v3704
      %3793 = vmatpush.msra.mxu0 %v3701
      %3794 = vmatpush.msra.mxu0 %v3698
      %3795 = vmatpush.msra.mxu0 %v3695
      %3796 = vmatpush.msra.mxu0 %v3692
      %3797 = vmatpush.msra.mxu0 %v3689
      %3798 = vmatpush.msra.mxu0 %v3686
      %3799 = vmatpush.msra.mxu0 %v3683
      %3800 = vmatpush.msra.mxu0 %v3680
      %3801 = vmatpush.msra.mxu0 %v3677
      %3802 = vmatpush.msra.mxu0 %v3674
      %3803 = vmatpush.msra.mxu0 %v3671
      %3804 = vmatpush.msra.mxu0 %v3668
      %3805 = vmatpush.msra.mxu0 %v3665
      %3806 = vmatpush.msra.mxu0 %v3662
      %3807 = vmatpush.msra.mxu0 %v3659
      %3808 = vmatmul.f32.gmra.mxu0 %v3656
      %v3809 = vpop.f32.mrf.mxu0
      %v3810 = vadd.f32 0.0, %v3809
      %3811 = vdwg.mxu0
      %3812 = vmatpush.msra.mxu0 0.0
      %3813 = vmatpush.msra.mxu0 0.0
      %3814 = vmatpush.msra.mxu0 %v3746
      %3815 = vmatpush.msra.mxu0 %v3743
      %3816 = vmatpush.msra.mxu0 %v3740
      %3817 = vmatpush.msra.mxu0 %v3737
      %3818 = vmatpush.msra.mxu0 %v3734
      %3819 = vmatpush.msra.mxu0 %v3731
      %3820 = vmatpush.msra.mxu0 %v3728
      %3821 = vmatpush.msra.mxu0 %v3725
      %3822 = vmatpush.msra.mxu0 %v3722
      %3823 = vmatpush.msra.mxu0 %v3719
      %3824 = vmatpush.msra.mxu0 %v3716
      %3825 = vmatpush.msra.mxu0 %v3713
      %3826 = vmatpush.msra.mxu0 %v3710
      %3827 = vmatpush.msra.mxu0 %v3707
      %3828 = vmatmul.f32.gmra.mxu0 %v3750
      %v3829 = vpop.f32.mrf.mxu0
      %v3830 = vadd.f32 %v3810, %v3829
      %3831 = vdwg.mxu0
      %3832 = vmatpush.msra.mxu0 %v3705
      %3833 = vmatpush.msra.mxu0 %v3702
      %3834 = vmatpush.msra.mxu0 %v3699
      %3835 = vmatpush.msra.mxu0 %v3696
      %3836 = vmatpush.msra.mxu0 %v3693
      %3837 = vmatpush.msra.mxu0 %v3690
      %3838 = vmatpush.msra.mxu0 %v3687
      %3839 = vmatpush.msra.mxu0 %v3684
      %3840 = vmatpush.msra.mxu0 %v3681
      %3841 = vmatpush.msra.mxu0 %v3678
      %3842 = vmatpush.msra.mxu0 %v3675
      %3843 = vmatpush.msra.mxu0 %v3672
      %3844 = vmatpush.msra.mxu0 %v3669
      %3845 = vmatpush.msra.mxu0 %v3666
      %3846 = vmatpush.msra.mxu0 %v3663
      %3847 = vmatpush.msra.mxu0 %v3660
      %3848 = vmatmul.f32.gmra.mxu0 %v3656
      %v3849 = vpop.f32.mrf.mxu0
      %v3850 = vadd.f32 0.0, %v3849
      %3851 = vdwg.mxu0
      %3852 = vmatpush.msra.mxu0 0.0
      %3853 = vmatpush.msra.mxu0 0.0
      %3854 = vmatpush.msra.mxu0 %v3747
      %3855 = vmatpush.msra.mxu0 %v3744
      %3856 = vmatpush.msra.mxu0 %v3741
      %3857 = vmatpush.msra.mxu0 %v3738
      %3858 = vmatpush.msra.mxu0 %v3735
      %3859 = vmatpush.msra.mxu0 %v3732
      %3860 = vmatpush.msra.mxu0 %v3729
      %3861 = vmatpush.msra.mxu0 %v3726
      %3862 = vmatpush.msra.mxu0 %v3723
      %3863 = vmatpush.msra.mxu0 %v3720
      %3864 = vmatpush.msra.mxu0 %v3717
      %3865 = vmatpush.msra.mxu0 %v3714
      %3866 = vmatpush.msra.mxu0 %v3711
      %3867 = vmatpush.msra.mxu0 %v3708
      %3868 = vmatmul.f32.gmra.mxu0 %v3750
      %v3869 = vpop.f32.mrf.mxu0
      %v3870 = vadd.f32 %v3850, %v3869
      %3871 = vdwg.mxu0
      %v3872 = vmul.f32 %v3790, %v3790
      %v3873 = vmul.f32 %v3830, %v3830
      %v3874 = vmul.f32 %v3870, %v3870
      %3875 = vmatpush.msra.mxu0 %v325
      %3876 = vmatpush.msra.mxu0 %v324
      %3877 = vmatpush.msra.mxu0 %v323
      %3878 = vmatpush.msra.mxu0 %v322
      %3879 = vmatpush.msra.mxu0 %v321
      %3880 = vmatpush.msra.mxu0 %v320
      %3881 = vmatpush.msra.mxu0 %v319
      %3882 = vmatpush.msra.mxu0 %v318
      %3883 = vmatpush.msra.mxu0 %v317
      %3884 = vmatpush.msra.mxu0 %v316
      %3885 = vmatpush.msra.mxu0 %v315
      %3886 = vmatpush.msra.mxu0 %v314
      %3887 = vmatpush.msra.mxu0 %v313
      %3888 = vmatpush.msra.mxu0 %v312
      %3889 = vmatpush.msra.mxu0 %v311
      %3890 = vmatpush.msra.mxu0 %v310
      %3891 = vmatmul.f32.gmra.mxu0 %v3790
      %v3892 = vpop.f32.mrf.mxu0
      %v3893 = vadd.f32 0.0, %v3892
      %3894 = vmatmul.f32.gmra.mxu0 %v3872
      %v3895 = vpop.f32.mrf.mxu0
      %v3896 = vadd.f32 0.0, %v3895
      %3897 = vdwg.mxu0
      %3898 = vmatpush.msra.mxu0 %v341
      %3899 = vmatpush.msra.mxu0 %v340
      %3900 = vmatpush.msra.mxu0 %v339
      %3901 = vmatpush.msra.mxu0 %v338
      %3902 = vmatpush.msra.mxu0 %v337
      %3903 = vmatpush.msra.mxu0 %v336
      %3904 = vmatpush.msra.mxu0 %v335
      %3905 = vmatpush.msra.mxu0 %v334
      %3906 = vmatpush.msra.mxu0 %v333
      %3907 = vmatpush.msra.mxu0 %v332
      %3908 = vmatpush.msra.mxu0 %v331
      %3909 = vmatpush.msra.mxu0 %v330
      %3910 = vmatpush.msra.mxu0 %v329
      %3911 = vmatpush.msra.mxu0 %v328
      %3912 = vmatpush.msra.mxu0 %v327
      %3913 = vmatpush.msra.mxu0 %v326
      %3914 = vmatmul.f32.gmra.mxu0 %v3830
      %v3915 = vpop.f32.mrf.mxu0
      %v3916 = vadd.f32 %v3893, %v3915
      %3917 = vmatmul.f32.gmra.mxu0 %v3873
      %v3918 = vpop.f32.mrf.mxu0
      %v3919 = vadd.f32 %v3896, %v3918
      %3920 = vdwg.mxu0
      %3921 = vmatpush.msra.mxu0 %v357
      %3922 = vmatpush.msra.mxu0 %v356
      %3923 = vmatpush.msra.mxu0 %v355
      %3924 = vmatpush.msra.mxu0 %v354
      %3925 = vmatpush.msra.mxu0 %v353
      %3926 = vmatpush.msra.mxu0 %v352
      %3927 = vmatpush.msra.mxu0 %v351
      %3928 = vmatpush.msra.mxu0 %v350
      %3929 = vmatpush.msra.mxu0 %v349
      %3930 = vmatpush.msra.mxu0 %v348
      %3931 = vmatpush.msra.mxu0 %v347
      %3932 = vmatpush.msra.mxu0 %v346
      %3933 = vmatpush.msra.mxu0 %v345
      %3934 = vmatpush.msra.mxu0 %v344
      %3935 = vmatpush.msra.mxu0 %v343
      %3936 = vmatpush.msra.mxu0 %v342
      %3937 = vmatmul.f32.gmra.mxu0 %v3870
      %v3938 = vpop.f32.mrf.mxu0
      %v3939 = vadd.f32 %v3916, %v3938
      %3940 = vmatmul.f32.gmra.mxu0 %v3874
      %v3941 = vpop.f32.mrf.mxu0
      %v3942 = vadd.f32 %v3919, %v3941
      %3943 = vdwg.mxu0
      %v3944 = vmul.f32 %v3939, 0.0625
      %v3945 = vmul.f32 %v3942, 0.0625
      %v3946 = vmul.f32 %v3944, %v3944
      %v3947 = vsub.f32 %v3945, %v3946
      %v3948 = vmax.f32 %v3947, 0.0
      %v3949 = vadd.f32 %v3948, 1e-05
      %v3950 = vrsqrt.pop %v3949
      %v3951 = vmul.f32 %v3950, %v3949
      %v3952 = vmul.f32 %v3951, %v3950
      %v3953 = vmul.f32 0.5, %v3952
      %v3954 = vsub.f32 1.5, %v3953
      %v3955 = vmul.f32 %v3950, %v3954
      %vm3956 = vweird.f32 %v3949
      %vm3957 = vweird.f32 %v3950
      %vm3958 = vmor %vm3956, %vm3957
      %v3959 = vsel %vm3958, %v3950, %v3955
      %v3961 = vsel %vm671, %v3944, 0
      %v3964 = vsel %vm671, %v3959, 0
      %3966 = vmatpush.msra.mxu0 0.0
      %3967 = vmatpush.msra.mxu0 0.0
      %3968 = vmatpush.msra.mxu0 0.0
      %3969 = vmatpush.msra.mxu0 0.0
      %3970 = vmatpush.msra.mxu0 0.0
      %3971 = vmatpush.msra.mxu0 0.0
      %3972 = vmatpush.msra.mxu0 0.0
      %3973 = vmatpush.msra.mxu0 0.0
      %3974 = vmatpush.msra.mxu0 0.0
      %3975 = vmatpush.msra.mxu0 0.0
      %3976 = vmatpush.msra.mxu0 0.0
      %3977 = vmatpush.msra.mxu0 0.0
      %3978 = vmatpush.msra.mxu0 0.0
      %3979 = vmatpush.msra.mxu0 0.0
      %3980 = vmatpush.msra.mxu0 %v361
      %3981 = vmatpush.msra.mxu0 %v358
      %3982 = vmatmul.f32.gmra.mxu0 %v3961
      %v3983 = vpop.f32.mrf.mxu0
      %v3984 = vadd.f32 0.0, %v3983
      %3985 = vmatmul.f32.gmra.mxu0 %v3964
      %v3986 = vpop.f32.mrf.mxu0
      %v3987 = vadd.f32 0.0, %v3986
      %3988 = vdwg.mxu0
      %3989 = vmatpush.msra.mxu0 0.0
      %3990 = vmatpush.msra.mxu0 0.0
      %3991 = vmatpush.msra.mxu0 0.0
      %3992 = vmatpush.msra.mxu0 0.0
      %3993 = vmatpush.msra.mxu0 0.0
      %3994 = vmatpush.msra.mxu0 0.0
      %3995 = vmatpush.msra.mxu0 0.0
      %3996 = vmatpush.msra.mxu0 0.0
      %3997 = vmatpush.msra.mxu0 0.0
      %3998 = vmatpush.msra.mxu0 0.0
      %3999 = vmatpush.msra.mxu0 0.0
      %4000 = vmatpush.msra.mxu0 0.0
      %4001 = vmatpush.msra.mxu0 0.0
      %4002 = vmatpush.msra.mxu0 0.0
      %4003 = vmatpush.msra.mxu0 %v362
      %4004 = vmatpush.msra.mxu0 %v359
      %4005 = vmatmul.f32.gmra.mxu0 %v3961
      %v4006 = vpop.f32.mrf.mxu0
      %v4007 = vadd.f32 0.0, %v4006
      %4008 = vmatmul.f32.gmra.mxu0 %v3964
      %v4009 = vpop.f32.mrf.mxu0
      %v4010 = vadd.f32 0.0, %v4009
      %4011 = vdwg.mxu0
      %4012 = vmatpush.msra.mxu0 0.0
      %4013 = vmatpush.msra.mxu0 0.0
      %4014 = vmatpush.msra.mxu0 0.0
      %4015 = vmatpush.msra.mxu0 0.0
      %4016 = vmatpush.msra.mxu0 0.0
      %4017 = vmatpush.msra.mxu0 0.0
      %4018 = vmatpush.msra.mxu0 0.0
      %4019 = vmatpush.msra.mxu0 0.0
      %4020 = vmatpush.msra.mxu0 0.0
      %4021 = vmatpush.msra.mxu0 0.0
      %4022 = vmatpush.msra.mxu0 0.0
      %4023 = vmatpush.msra.mxu0 0.0
      %4024 = vmatpush.msra.mxu0 0.0
      %4025 = vmatpush.msra.mxu0 0.0
      %4026 = vmatpush.msra.mxu0 %v363
      %4027 = vmatpush.msra.mxu0 %v360
      %4028 = vmatmul.f32.gmra.mxu0 %v3961
      %v4029 = vpop.f32.mrf.mxu0
      %v4030 = vadd.f32 0.0, %v4029
      %4031 = vmatmul.f32.gmra.mxu0 %v3964
      %v4032 = vpop.f32.mrf.mxu0
      %v4033 = vadd.f32 0.0, %v4032
      %4034 = vdwg.mxu0
      %v4035 = vsub.f32 %v3790, %v3984
      %v4036 = vsub.f32 %v3830, %v4007
      %v4037 = vsub.f32 %v3870, %v4030
      %v4038 = vmul.f32 %v4035, %v3987
      %v4039 = vmul.f32 %v4036, %v4010
      %v4040 = vmul.f32 %v4037, %v4033
      %s4041 = scalar_lea.vmem %s2, 12
      %v4042 = vld [vmem:[%s4041] sm:$0x7]
      %v4044 = vperm.slane %v4042, 0
      %v4045 = vperm.slane %v4042, 1
      %v4046 = vperm.slane %v4042, 2
      %v4050 = vmul.f32 %v4038, %v4044
      %v4051 = vmul.f32 %v4039, %v4045
      %v4052 = vmul.f32 %v4040, %v4046
      %s4053 = scalar_lea.vmem %s3, 12
      %v4054 = vld [vmem:[%s4053] sm:$0x7]
      %v4056 = vperm.slane %v4054, 0
      %v4057 = vperm.slane %v4054, 1
      %v4058 = vperm.slane %v4054, 2
      %v4062 = vadd.f32 %v4050, %v4056
      %v4063 = vadd.f32 %v4051, %v4057
      %v4064 = vadd.f32 %v4052, %v4058
      %s4065 = scalar_lea.vmem %s4, 32
      %v4066 = vld [vmem:[%s4065] sm:$0xff]
      %vm4067 = vcmp.ge.f32.partialorder %v4062, 0.0
      %vm4068 = vcmp.ge.f32.partialorder %v4063, 0.0
      %vm4069 = vcmp.ge.f32.partialorder %v4064, 0.0
      %4071 = vset.pattern.permute.xlu0 0
      %4072 = vperm.xlu0 %4071, %v4066
      %v4073 = vpop.permute.xlu0 %4072
      %v4075 = vmul.f32 %v4073, %v4062
      %v4076 = vmul.f32 %v4073, %v4063
      %v4077 = vmul.f32 %v4073, %v4064
      %v4078 = vsel %vm4067, %v4062, %v4075
      %v4079 = vsel %vm4068, %v4063, %v4076
      %v4080 = vsel %vm4069, %v4064, %v4077
      %4081 = vst [vmem:[%s278] sm:$0xff] %v4078
      %4082 = vst [vmem:[%s278 + $0x8] sm:$0xff] %v4079
      %4083 = vst [vmem:[%s278 + $0x10] sm:$0xff] %v4080
      %p4084 = scmp.lt.s32.totalorder %s18, 1
      %s4085 = scalar_select %p4084, %s18, 1
      %s4086 = smul.addr %s4085, 3
      %s4087 = smul.addr %s4086, 8
      %s4088 = scalar_lea.vmem %s7, %s4087
      // Predicated region
      $region49: #{dense_block_forward.1} parent=47 // pred_check
        %p4089 = pneg %p188
      $region50: #{dense_block_forward.1} parent=47 // pred_check_branch
        %4091 = sbr.rel (%p4089) target = $region52
      $region51: #{dense_block_forward.1} parent=47 // pred_region
        _
      $region52: #{dense_block_forward.1} parent=47 // pred_fallthru
        _
    $region48: #{dense_block_forward.1} parent=5 // pred_fallthru
      _
    %p4092 = scmp.le.s32.totalorder 2, %s13
    // Predicated region
    $region53: #{dense_block_forward.1} parent=5 // pred_check
      %p4093 = pneg %p4092
    $region54: #{dense_block_forward.1} parent=5 // pred_check_branch
      %4095 = sbr.rel (%p4093) target = $region56
    $region55: #{dense_block_forward.1} parent=5 // pred_region
      %s4096 = ssub.s32 %s13, 2
      // Predicated region
      $region57: #{dense_block_forward.1} parent=55 // pred_check
        %p4097 = pneg %p194
      $region58: #{dense_block_forward.1} parent=55 // pred_check_branch
        %4099 = sbr.rel (%p4097) target = $region60
      $region59: #{dense_block_forward.1} parent=55 // pred_region
        %p4100 = scmp.lt.s32.totalorder %s19, 1
        %s4101 = scalar_select %p4100, %s19, 1
        %s4102 = smul.addr %s4101, 3
        %s4103 = smul.addr %s4102, 8
        %s4104 = scalar_lea.vmem %s7, %s4103
      $region60: #{dense_block_forward.1} parent=55 // pred_fallthru
        _
    $region56: #{dense_block_forward.1} parent=5 // pred_fallthru
      _
  $region6: #{dense_block_forward.1} parent=0 // loop_footer
    %s17 = sadd.s32 1, %s13
  $region7: #{dense_block_forward.1} parent=0 // loop_footer_branch
    %12 = sbr.rel target = $region3
  $region8: #{dense_block_forward.1} parent=0 // loop_exit
    _

</llo_original>
